<compile_context>
chip_gen: v6e
topology: v6e:2x2x1
jax: 0.10.0
libtpu: 0.0.40
codegen_flags: <defaults>
</compile_context>

<pallas_src>
import functools

import jax
import jax.numpy as jnp
from jax.experimental import pallas as pl
from jax.experimental.pallas import tpu as pltpu


# ---------------------------------------------------------------------------
# In-kernel conv helper: 1-D conv (k=3, p=1, no bias) as one im2col matmul.
#   pad_ref : VMEM [L+2, C] f32 scratch; rows 0 and L+1 stay zero (the padding)
#   im_ref  : VMEM [L, 3C]  f32 scratch; lanes [0:C)=x[l-1], [C:2C)=x[l],
#             [2C:3C)=x[l+1]
#   w_ref   : [3C, Cout] bf16; row t*C+ci corresponds to torch Conv1d
#             weight[co, ci, t] (t=0 -> tap on x[l-1]).
# ---------------------------------------------------------------------------
def _conv3(h, w_ref, pad_ref, im_ref):
    seq, c = h.shape
    pad_ref[pl.ds(1, seq), :] = h
    im_ref[:, pl.ds(0, c)] = pad_ref[pl.ds(0, seq), :]        # x[l-1] (0 at l=0)
    im_ref[:, pl.ds(c, c)] = h                                # x[l]
    im_ref[:, pl.ds(2 * c, c)] = pad_ref[pl.ds(2, seq), :]    # x[l+1] (0 at l=L-1)
    return jnp.dot(im_ref[...].astype(jnp.bfloat16), w_ref[...],
                   preferred_element_type=jnp.float32)


# ---------------------------------------------------------------------------
# Generic fused conv stack.  `ops` is a static tuple of
#   "conv_relu" : h = relu(conv(h, w))                         (1 weight)
#   "residual"  : h = relu(conv(relu(conv(h, w1)), w2) + h)    (2 weights)
# One pallas_call runs a whole stack (e.g. recurrent tail + next expand conv,
# or the final recurrent tail + the whole postfix) with h resident in VMEM.
# ---------------------------------------------------------------------------
def _conv_stack_kernel(*refs, ops, n_w):
    x_ref = refs[0]
    w_refs = refs[1:1 + n_w]
    o_ref = refs[1 + n_w]
    pad_ref = refs[2 + n_w]
    im_ref = refs[3 + n_w]

    pad_ref[...] = jnp.zeros(pad_ref.shape, pad_ref.dtype)    # zero-padding rows
    h = x_ref[...]
    wi = 0
    for op in ops:
        if op == "conv_relu":
            h = jnp.maximum(_conv3(h, w_refs[wi], pad_ref, im_ref), 0.0)
            wi += 1
        else:  # "residual" (out_relu=True, as in the torch Residual default)
            t = jnp.maximum(_conv3(h, w_refs[wi], pad_ref, im_ref), 0.0)
            h = jnp.maximum(_conv3(t, w_refs[wi + 1], pad_ref, im_ref) + h, 0.0)
            wi += 2
    o_ref[...] = h


def conv_stack(x, weights, ops, out_c):
    bsz, seq, cin = x.shape
    n_w = len(weights)
    kernel = functools.partial(_conv_stack_kernel, ops=tuple(ops), n_w=n_w)
    in_specs = [pl.BlockSpec((None, seq, cin), lambda b: (b, 0, 0))]
    in_specs += [pl.BlockSpec(w.shape, lambda b: (0, 0)) for w in weights]
    return pl.pallas_call(
        kernel,
        grid=(bsz,),
        out_shape=jax.ShapeDtypeStruct((bsz, seq, out_c), jnp.float32),
        in_specs=in_specs,
        out_specs=pl.BlockSpec((None, seq, out_c), lambda b: (b, 0, 0)),
        scratch_shapes=[pltpu.VMEM((seq + 2, cin), jnp.float32),
                        pltpu.VMEM((seq, 3 * cin), jnp.float32)],
        compiler_params=pltpu.CompilerParams(
            dimension_semantics=("parallel",)),
    )(x, *weights)


# ---------------------------------------------------------------------------
# Prefix: n//2 Residual(Linear(4C, 4C)) blocks fused into one kernel.
# Weights stored pre-transposed (= torch W.T) so the kernel does x @ W.
# ---------------------------------------------------------------------------
def _prefix_kernel(x_ref, w_ref, b_ref, o_ref, *, n_blocks):
    x = x_ref[...]
    for i in range(n_blocks):
        h = jnp.dot(x.astype(jnp.bfloat16), w_ref[i, 0],
                    preferred_element_type=jnp.float32) + b_ref[i, 0]
        h = jnp.maximum(h, 0.0)
        y = jnp.dot(h.astype(jnp.bfloat16), w_ref[i, 1],
                    preferred_element_type=jnp.float32) + b_ref[i, 1] + x
        x = jnp.maximum(y, 0.0)
    o_ref[...] = x


def prefix_stack(x, w, b):
    bsz, d = x.shape
    return pl.pallas_call(
        functools.partial(_prefix_kernel, n_blocks=w.shape[0]),
        out_shape=jax.ShapeDtypeStruct((bsz, d), jnp.float32),
        in_specs=[pl.BlockSpec(memory_space=pltpu.MemorySpace.VMEM)] * 3,
        out_specs=pl.BlockSpec(memory_space=pltpu.MemorySpace.VMEM),
    )(x, w, b)


# ---------------------------------------------------------------------------
# Deterministic synthetic parameters (shapes from ByteCNNDecoder.__init__).
# ---------------------------------------------------------------------------
def init_params(key, n, emsize):
    assert n % 2 == 0, "n should be a multiple of 2"
    c, d, k = emsize, 4 * emsize, n // 2
    keys = iter(jax.random.split(key, 4 * n + 8))
    s = 0.1

    def conv_w(cout):
        # im2col layout [3C, cout]: row t*C+ci == torch Conv1d weight[co, ci, t]
        return (s * jax.random.normal(next(keys), (3 * c, cout),
                                      jnp.float32)).astype(jnp.bfloat16)

    prefix_w = s * jax.random.normal(next(keys), (k, 2, d, d), jnp.float32)
    prefix_b = s * jax.random.normal(next(keys), (k, 2, 1, d), jnp.float32)
    return dict(
        prefix_w=prefix_w.astype(jnp.bfloat16),   # torch Linear weight.T, stacked
        prefix_b=prefix_b,                        # biases stay f32
        expand_w=conv_w(2 * c),                   # ExpandConv1d's Conv1d(C, 2C)
        rec_head_w=conv_w(c),                     # Conv1d(C, C) after the expand
        rec_res_w=[(conv_w(c), conv_w(c)) for _ in range(k - 1)],
        post_res_w=[(conv_w(c), conv_w(c)) for _ in range(k)],
    )


# ---------------------------------------------------------------------------
# Full forward pass (mirrors ByteCNNDecoder.forward(x, r)).
# ---------------------------------------------------------------------------
@functools.partial(jax.jit, static_argnums=(1, 3, 4))
def byte_cnn_decoder_forward(x, r, params, n, emsize):
    bsz = x.shape[0]
    c, k = emsize, n // 2

    # prefix (fused linear residual stack) on [B, 4C]
    x = prefix_stack(x, params["prefix_w"], params["prefix_b"])

    # torch: x.view(bsz, emsize, 4)  (NCW, L=4)  ->  row layout [B, 4, C]
    x = x.reshape(bsz, c, 4).transpose(0, 2, 1)

    rec_res = [w for pair in params["rec_res_w"] for w in pair]
    post_res = [w for pair in params["post_res_w"] for w in pair]
    tail_ops = ("conv_relu",) + ("residual",) * (k - 1)   # conv+ReLU, residuals
    tail_ws = [params["rec_head_w"]] + rec_res

    seq = 4
    for p in range(r - 2):
        # expand conv of pass p (fused with the tail of pass p-1 when p > 0)
        if p == 0:
            ops, ws = ("conv_relu",), [params["expand_w"]]
        else:
            ops, ws = tail_ops + ("conv_relu",), tail_ws + [params["expand_w"]]
        y = conv_stack(x, ws, ops, out_c=2 * c)            # [B, L, 2C] (relu'd)
        # ExpandConv1d channel->length interleave (pure layout, XLA glue):
        # out[b, 2l+k, ch] = y[b, l, 2ch+k]
        x = y.reshape(bsz, seq, c, 2).transpose(0, 1, 3, 2).reshape(bsz, 2 * seq, c)
        seq *= 2

    # final stack: tail of the last recurrent pass (if any) + postfix residuals
    if r > 2:
        ops, ws = tail_ops + ("residual",) * k, tail_ws + post_res
    else:
        ops, ws = ("residual",) * k, post_res
    x = conv_stack(x, ws, ops, out_c=c)                    # [B, L, C]
    return x.transpose(0, 2, 1)                            # [B, C, L] (torch NCW)


if __name__ == "__main__":
    N_LAYERS = 4   # `n` in ByteCNNDecoder (must be even)
    EMSIZE = 32    # channel size; decoder input is [B, 4*emsize]
    BATCH = 2
    R = 4          # num recurrences -> (r-2)=2 expand passes, output length 2^r = 16

    key = jax.random.PRNGKey(0)
    pkey, xkey = jax.random.split(key)
    params = init_params(pkey, N_LAYERS, EMSIZE)
    x = jax.random.normal(xkey, (BATCH, EMSIZE * 4), jnp.float32)

    out = byte_cnn_decoder_forward(x, R, params, N_LAYERS, EMSIZE)
    out = jax.block_until_ready(out)
    assert out.shape == (BATCH, EMSIZE, 2 ** R), out.shape
    assert bool(jnp.all(jnp.isfinite(out)))
    print("KERNEL_OK")
</pallas_src>

<mosaic_0001>
module attributes {stable_mosaic.version = 11 : i64} {
  func.func @_prefix_kernel(%arg0: memref<2x128xf32, #tpu.memory_space<vmem>>, %arg1: memref<2x2x128x128xbf16, #tpu.memory_space<vmem>>, %arg2: memref<2x2x1x128xf32, #tpu.memory_space<vmem>>, %arg3: memref<2x128xf32, #tpu.memory_space<vmem>>) attributes {dimension_semantics = [], scalar_prefetch = 0 : i64, scratch_operands = 0 : i64, tpu.core_type = #tpu.core_type<tc>} {
    %c0 = arith.constant 0 : index
    %c0_0 = arith.constant 0 : index
    %0 = vector.load %arg0[%c0, %c0_0] : memref<2x128xf32, #tpu.memory_space<vmem>>, vector<2x128xf32>
    %1 = arith.truncf %0 : vector<2x128xf32> to vector<2x128xbf16>
    %c0_1 = arith.constant 0 : index
    %c0_2 = arith.constant 0 : index
    %c0_3 = arith.constant 0 : index
    %c0_4 = arith.constant 0 : index
    %2 = vector.load %arg1[%c0_1, %c0_2, %c0_3, %c0_4] : memref<2x2x128x128xbf16, #tpu.memory_space<vmem>>, vector<1x1x128x128xbf16>
    %3 = vector.shape_cast %2 : vector<1x1x128x128xbf16> to vector<128x128xbf16>
    %cst = arith.constant dense<0.000000e+00> : vector<2x128xf32>
    %4 = tpu.matmul %1, %3, %cst {dimension_numbers = #tpu.dot_dimension_numbers<[1], [0], [0], [1], [0, 0, 1, 1], [], []>} : vector<2x128xbf16>, vector<128x128xbf16>, vector<2x128xf32> -> vector<2x128xf32>
    %c0_5 = arith.constant 0 : index
    %c0_6 = arith.constant 0 : index
    %c0_7 = arith.constant 0 : index
    %c0_8 = arith.constant 0 : index
    %5 = vector.load %arg2[%c0_5, %c0_6, %c0_7, %c0_8] : memref<2x2x1x128xf32, #tpu.memory_space<vmem>>, vector<1x1x1x128xf32>
    %6 = vector.shape_cast %5 : vector<1x1x1x128xf32> to vector<1x128xf32>
    %7 = vector.broadcast %6 : vector<1x128xf32> to vector<2x128xf32>
    %8 = arith.addf %4, %7 : vector<2x128xf32>
    %cst_9 = arith.constant 0.000000e+00 : f32
    %9 = vector.broadcast %cst_9 : f32 to vector<2x128xf32>
    %10 = arith.maximumf %8, %9 : vector<2x128xf32>
    %11 = arith.truncf %10 : vector<2x128xf32> to vector<2x128xbf16>
    %c0_10 = arith.constant 0 : index
    %c1 = arith.constant 1 : index
    %c0_11 = arith.constant 0 : index
    %c0_12 = arith.constant 0 : index
    %12 = vector.load %arg1[%c0_10, %c1, %c0_11, %c0_12] : memref<2x2x128x128xbf16, #tpu.memory_space<vmem>>, vector<1x1x128x128xbf16>
    %13 = vector.shape_cast %12 : vector<1x1x128x128xbf16> to vector<128x128xbf16>
    %cst_13 = arith.constant dense<0.000000e+00> : vector<2x128xf32>
    %14 = tpu.matmul %11, %13, %cst_13 {dimension_numbers = #tpu.dot_dimension_numbers<[1], [0], [0], [1], [0, 0, 1, 1], [], []>} : vector<2x128xbf16>, vector<128x128xbf16>, vector<2x128xf32> -> vector<2x128xf32>
    %c0_14 = arith.constant 0 : index
    %c1_15 = arith.constant 1 : index
    %c0_16 = arith.constant 0 : index
    %c0_17 = arith.constant 0 : index
    %15 = vector.load %arg2[%c0_14, %c1_15, %c0_16, %c0_17] : memref<2x2x1x128xf32, #tpu.memory_space<vmem>>, vector<1x1x1x128xf32>
    %16 = vector.shape_cast %15 : vector<1x1x1x128xf32> to vector<1x128xf32>
    %17 = vector.broadcast %16 : vector<1x128xf32> to vector<2x128xf32>
    %18 = arith.addf %14, %17 : vector<2x128xf32>
    %19 = arith.addf %18, %0 : vector<2x128xf32>
    %cst_18 = arith.constant 0.000000e+00 : f32
    %20 = vector.broadcast %cst_18 : f32 to vector<2x128xf32>
    %21 = arith.maximumf %19, %20 : vector<2x128xf32>
    %22 = arith.truncf %21 : vector<2x128xf32> to vector<2x128xbf16>
    %c1_19 = arith.constant 1 : index
    %c0_20 = arith.constant 0 : index
    %c0_21 = arith.constant 0 : index
    %c0_22 = arith.constant 0 : index
    %23 = vector.load %arg1[%c1_19, %c0_20, %c0_21, %c0_22] : memref<2x2x128x128xbf16, #tpu.memory_space<vmem>>, vector<1x1x128x128xbf16>
    %24 = vector.shape_cast %23 : vector<1x1x128x128xbf16> to vector<128x128xbf16>
    %cst_23 = arith.constant dense<0.000000e+00> : vector<2x128xf32>
    %25 = tpu.matmul %22, %24, %cst_23 {dimension_numbers = #tpu.dot_dimension_numbers<[1], [0], [0], [1], [0, 0, 1, 1], [], []>} : vector<2x128xbf16>, vector<128x128xbf16>, vector<2x128xf32> -> vector<2x128xf32>
    %c1_24 = arith.constant 1 : index
    %c0_25 = arith.constant 0 : index
    %c0_26 = arith.constant 0 : index
    %c0_27 = arith.constant 0 : index
    %26 = vector.load %arg2[%c1_24, %c0_25, %c0_26, %c0_27] : memref<2x2x1x128xf32, #tpu.memory_space<vmem>>, vector<1x1x1x128xf32>
    %27 = vector.shape_cast %26 : vector<1x1x1x128xf32> to vector<1x128xf32>
    %28 = vector.broadcast %27 : vector<1x128xf32> to vector<2x128xf32>
    %29 = arith.addf %25, %28 : vector<2x128xf32>
    %cst_28 = arith.constant 0.000000e+00 : f32
    %30 = vector.broadcast %cst_28 : f32 to vector<2x128xf32>
    %31 = arith.maximumf %29, %30 : vector<2x128xf32>
    %32 = arith.truncf %31 : vector<2x128xf32> to vector<2x128xbf16>
    %c1_29 = arith.constant 1 : index
    %c1_30 = arith.constant 1 : index
    %c0_31 = arith.constant 0 : index
    %c0_32 = arith.constant 0 : index
    %33 = vector.load %arg1[%c1_29, %c1_30, %c0_31, %c0_32] : memref<2x2x128x128xbf16, #tpu.memory_space<vmem>>, vector<1x1x128x128xbf16>
    %34 = vector.shape_cast %33 : vector<1x1x128x128xbf16> to vector<128x128xbf16>
    %cst_33 = arith.constant dense<0.000000e+00> : vector<2x128xf32>
    %35 = tpu.matmul %32, %34, %cst_33 {dimension_numbers = #tpu.dot_dimension_numbers<[1], [0], [0], [1], [0, 0, 1, 1], [], []>} : vector<2x128xbf16>, vector<128x128xbf16>, vector<2x128xf32> -> vector<2x128xf32>
    %c1_34 = arith.constant 1 : index
    %c1_35 = arith.constant 1 : index
    %c0_36 = arith.constant 0 : index
    %c0_37 = arith.constant 0 : index
    %36 = vector.load %arg2[%c1_34, %c1_35, %c0_36, %c0_37] : memref<2x2x1x128xf32, #tpu.memory_space<vmem>>, vector<1x1x1x128xf32>
    %37 = vector.shape_cast %36 : vector<1x1x1x128xf32> to vector<1x128xf32>
    %38 = vector.broadcast %37 : vector<1x128xf32> to vector<2x128xf32>
    %39 = arith.addf %35, %38 : vector<2x128xf32>
    %40 = arith.addf %39, %21 : vector<2x128xf32>
    %cst_38 = arith.constant 0.000000e+00 : f32
    %41 = vector.broadcast %cst_38 : f32 to vector<2x128xf32>
    %42 = arith.maximumf %40, %41 : vector<2x128xf32>
    %c0_39 = arith.constant 0 : index
    %c0_40 = arith.constant 0 : index
    %43 = vector.load %arg3[%c0_39, %c0_40] : memref<2x128xf32, #tpu.memory_space<vmem>>, vector<2x128xf32>
    tpu.vector_store %arg3[%c0_39, %c0_40], %42 {strides = array<i32>} : memref<2x128xf32, #tpu.memory_space<vmem>>, vector<2x128xf32>,
    return
  }
}

module attributes {stable_mosaic.version = 11 : i64} {
  func.func @_conv_stack_kernel(%arg0: i32, %arg1: memref<1x4x32xf32, #tpu.memory_space<vmem>>, %arg2: memref<96x64xbf16, #tpu.memory_space<vmem>>, %arg3: memref<1x4x64xf32, #tpu.memory_space<vmem>>, %arg4: memref<6x32xf32, #tpu.memory_space<vmem>>, %arg5: memref<4x96xf32, #tpu.memory_space<vmem>>) attributes {dimension_semantics = [#tpu.dimension_semantics<parallel>], iteration_bounds = array<i64: 2>, scalar_prefetch = 0 : i64, scratch_operands = 2 : i64, tpu.core_type = #tpu.core_type<tc>, window_params = [{transform_indices = @transform_0, window_bounds = array<i64: 1, 4, 32>}, {pipeline_mode = #tpu.pipeline_mode<synchronous>, transform_indices = @transform_1, window_bounds = array<i64: 96, 64>}, {transform_indices = @transform_2, window_bounds = array<i64: 1, 4, 64>}]} {
    %cst = arith.constant 0.000000e+00 : f32
    %0 = vector.broadcast %cst : f32 to vector<6x32xf32>
    %c0 = arith.constant 0 : index
    %c0_0 = arith.constant 0 : index
    %1 = vector.load %arg4[%c0, %c0_0] : memref<6x32xf32, #tpu.memory_space<vmem>>, vector<6x32xf32>
    tpu.vector_store %arg4[%c0, %c0_0], %0 {strides = array<i32>} : memref<6x32xf32, #tpu.memory_space<vmem>>, vector<6x32xf32>,
    %c0_1 = arith.constant 0 : index
    %c0_2 = arith.constant 0 : index
    %c0_3 = arith.constant 0 : index
    %2 = vector.load %arg1[%c0_1, %c0_2, %c0_3] : memref<1x4x32xf32, #tpu.memory_space<vmem>>, vector<1x4x32xf32>
    %3 = vector.shape_cast %2 : vector<1x4x32xf32> to vector<4x32xf32>
    %c1 = arith.constant 1 : index
    %c0_4 = arith.constant 0 : index
    %4 = vector.load %arg4[%c1, %c0_4] : memref<6x32xf32, #tpu.memory_space<vmem>>, vector<4x32xf32>
    tpu.vector_store %arg4[%c1, %c0_4], %3 {strides = array<i32>} : memref<6x32xf32, #tpu.memory_space<vmem>>, vector<4x32xf32>,
    %c0_5 = arith.constant 0 : index
    %c0_6 = arith.constant 0 : index
    %5 = vector.load %arg4[%c0_5, %c0_6] : memref<6x32xf32, #tpu.memory_space<vmem>>, vector<4x32xf32>
    %c0_7 = arith.constant 0 : index
    %c0_8 = arith.constant 0 : index
    %6 = vector.load %arg5[%c0_7, %c0_8] : memref<4x96xf32, #tpu.memory_space<vmem>>, vector<4x32xf32>
    tpu.vector_store %arg5[%c0_7, %c0_8], %5 {strides = array<i32>} : memref<4x96xf32, #tpu.memory_space<vmem>>, vector<4x32xf32>,
    %c0_9 = arith.constant 0 : index
    %c32 = arith.constant 32 : index
    %7 = vector.load %arg5[%c0_9, %c32] : memref<4x96xf32, #tpu.memory_space<vmem>>, vector<4x32xf32>
    tpu.vector_store %arg5[%c0_9, %c32], %3 {strides = array<i32>} : memref<4x96xf32, #tpu.memory_space<vmem>>, vector<4x32xf32>,
    %c2 = arith.constant 2 : index
    %c0_10 = arith.constant 0 : index
    %8 = vector.load %arg4[%c2, %c0_10] : memref<6x32xf32, #tpu.memory_space<vmem>>, vector<4x32xf32>
    %c0_11 = arith.constant 0 : index
    %c64 = arith.constant 64 : index
    %9 = vector.load %arg5[%c0_11, %c64] : memref<4x96xf32, #tpu.memory_space<vmem>>, vector<4x32xf32>
    tpu.vector_store %arg5[%c0_11, %c64], %8 {strides = array<i32>} : memref<4x96xf32, #tpu.memory_space<vmem>>, vector<4x32xf32>,
    %c0_12 = arith.constant 0 : index
    %c0_13 = arith.constant 0 : index
    %10 = vector.load %arg5[%c0_12, %c0_13] : memref<4x96xf32, #tpu.memory_space<vmem>>, vector<4x96xf32>
    %11 = arith.truncf %10 : vector<4x96xf32> to vector<4x96xbf16>
    %c0_14 = arith.constant 0 : index
    %c0_15 = arith.constant 0 : index
    %12 = vector.load %arg2[%c0_14, %c0_15] : memref<96x64xbf16, #tpu.memory_space<vmem>>, vector<96x64xbf16>
    %cst_16 = arith.constant dense<0.000000e+00> : vector<4x64xf32>
    %13 = tpu.matmul %11, %12, %cst_16 {dimension_numbers = #tpu.dot_dimension_numbers<[1], [0], [0], [1], [0, 0, 1, 1], [], []>} : vector<4x96xbf16>, vector<96x64xbf16>, vector<4x64xf32> -> vector<4x64xf32>
    %cst_17 = arith.constant 0.000000e+00 : f32
    %14 = vector.broadcast %cst_17 : f32 to vector<4x64xf32>
    %15 = arith.maximumf %13, %14 : vector<4x64xf32>
    %c0_18 = arith.constant 0 : index
    %c0_19 = arith.constant 0 : index
    %c0_20 = arith.constant 0 : index
    %16 = vector.load %arg3[%c0_18, %c0_19, %c0_20] : memref<1x4x64xf32, #tpu.memory_space<vmem>>, vector<1x4x64xf32>
    %17 = vector.shape_cast %16 : vector<1x4x64xf32> to vector<4x64xf32>
    %18 = vector.shape_cast %15 : vector<4x64xf32> to vector<1x4x64xf32>
    tpu.vector_store %arg3[%c0_18, %c0_19, %c0_20], %18 {strides = array<i32>} : memref<1x4x64xf32, #tpu.memory_space<vmem>>, vector<1x4x64xf32>,
    return
  }
  func.func @transform_0(%arg0: i32) -> (i32, i32, i32) {
    %c0_i32 = arith.constant 0 : i32
    %c0_i32_0 = arith.constant 0 : i32
    %c0_i32_1 = arith.constant 0 : i32
    return %arg0, %c0_i32, %c0_i32_0 : i32, i32, i32
  }
  func.func @transform_1(%arg0: i32) -> (i32, i32) {
    %c0_i32 = arith.constant 0 : i32
    %c0_i32_0 = arith.constant 0 : i32
    %c0_i32_1 = arith.constant 0 : i32
    return %c0_i32, %c0_i32_0 : i32, i32
  }
  func.func @transform_2(%arg0: i32) -> (i32, i32, i32) {
    %c0_i32 = arith.constant 0 : i32
    %c0_i32_0 = arith.constant 0 : i32
    %c0_i32_1 = arith.constant 0 : i32
    return %arg0, %c0_i32, %c0_i32_0 : i32, i32, i32
  }
}

module attributes {stable_mosaic.version = 11 : i64} {
  func.func @_conv_stack_kernel(%arg0: i32, %arg1: memref<1x8x32xf32, #tpu.memory_space<vmem>>, %arg2: memref<96x32xbf16, #tpu.memory_space<vmem>>, %arg3: memref<96x32xbf16, #tpu.memory_space<vmem>>, %arg4: memref<96x32xbf16, #tpu.memory_space<vmem>>, %arg5: memref<96x64xbf16, #tpu.memory_space<vmem>>, %arg6: memref<1x8x64xf32, #tpu.memory_space<vmem>>, %arg7: memref<10x32xf32, #tpu.memory_space<vmem>>, %arg8: memref<8x96xf32, #tpu.memory_space<vmem>>) attributes {dimension_semantics = [#tpu.dimension_semantics<parallel>], iteration_bounds = array<i64: 2>, scalar_prefetch = 0 : i64, scratch_operands = 2 : i64, tpu.core_type = #tpu.core_type<tc>, window_params = [{transform_indices = @transform_0, window_bounds = array<i64: 1, 8, 32>}, {pipeline_mode = #tpu.pipeline_mode<synchronous>, transform_indices = @transform_1, window_bounds = array<i64: 96, 32>}, {pipeline_mode = #tpu.pipeline_mode<synchronous>, transform_indices = @transform_2, window_bounds = array<i64: 96, 32>}, {pipeline_mode = #tpu.pipeline_mode<synchronous>, transform_indices = @transform_3, window_bounds = array<i64: 96, 32>}, {pipeline_mode = #tpu.pipeline_mode<synchronous>, transform_indices = @transform_4, window_bounds = array<i64: 96, 64>}, {transform_indices = @transform_5, window_bounds = array<i64: 1, 8, 64>}]} {
    %cst = arith.constant 0.000000e+00 : f32
    %0 = vector.broadcast %cst : f32 to vector<10x32xf32>
    %c0 = arith.constant 0 : index
    %c0_0 = arith.constant 0 : index
    %1 = vector.load %arg7[%c0, %c0_0] : memref<10x32xf32, #tpu.memory_space<vmem>>, vector<10x32xf32>
    tpu.vector_store %arg7[%c0, %c0_0], %0 {strides = array<i32>} : memref<10x32xf32, #tpu.memory_space<vmem>>, vector<10x32xf32>,
    %c0_1 = arith.constant 0 : index
    %c0_2 = arith.constant 0 : index
    %c0_3 = arith.constant 0 : index
    %2 = vector.load %arg1[%c0_1, %c0_2, %c0_3] : memref<1x8x32xf32, #tpu.memory_space<vmem>>, vector<1x8x32xf32>
    %3 = vector.shape_cast %2 : vector<1x8x32xf32> to vector<8x32xf32>
    %c1 = arith.constant 1 : index
    %c0_4 = arith.constant 0 : index
    %4 = vector.load %arg7[%c1, %c0_4] : memref<10x32xf32, #tpu.memory_space<vmem>>, vector<8x32xf32>
    tpu.vector_store %arg7[%c1, %c0_4], %3 {strides = array<i32>} : memref<10x32xf32, #tpu.memory_space<vmem>>, vector<8x32xf32>,
    %c0_5 = arith.constant 0 : index
    %c0_6 = arith.constant 0 : index
    %5 = vector.load %arg7[%c0_5, %c0_6] : memref<10x32xf32, #tpu.memory_space<vmem>>, vector<8x32xf32>
    %c0_7 = arith.constant 0 : index
    %c0_8 = arith.constant 0 : index
    %6 = vector.load %arg8[%c0_7, %c0_8] : memref<8x96xf32, #tpu.memory_space<vmem>>, vector<8x32xf32>
    tpu.vector_store %arg8[%c0_7, %c0_8], %5 {strides = array<i32>} : memref<8x96xf32, #tpu.memory_space<vmem>>, vector<8x32xf32>,
    %c0_9 = arith.constant 0 : index
    %c32 = arith.constant 32 : index
    %7 = vector.load %arg8[%c0_9, %c32] : memref<8x96xf32, #tpu.memory_space<vmem>>, vector<8x32xf32>
    tpu.vector_store %arg8[%c0_9, %c32], %3 {strides = array<i32>} : memref<8x96xf32, #tpu.memory_space<vmem>>, vector<8x32xf32>,
    %c2 = arith.constant 2 : index
    %c0_10 = arith.constant 0 : index
    %8 = vector.load %arg7[%c2, %c0_10] : memref<10x32xf32, #tpu.memory_space<vmem>>, vector<8x32xf32>
    %c0_11 = arith.constant 0 : index
    %c64 = arith.constant 64 : index
    %9 = vector.load %arg8[%c0_11, %c64] : memref<8x96xf32, #tpu.memory_space<vmem>>, vector<8x32xf32>
    tpu.vector_store %arg8[%c0_11, %c64], %8 {strides = array<i32>} : memref<8x96xf32, #tpu.memory_space<vmem>>, vector<8x32xf32>,
    %c0_12 = arith.constant 0 : index
    %c0_13 = arith.constant 0 : index
    %10 = vector.load %arg8[%c0_12, %c0_13] : memref<8x96xf32, #tpu.memory_space<vmem>>, vector<8x96xf32>
    %11 = arith.truncf %10 : vector<8x96xf32> to vector<8x96xbf16>
    %c0_14 = arith.constant 0 : index
    %c0_15 = arith.constant 0 : index
    %12 = vector.load %arg2[%c0_14, %c0_15] : memref<96x32xbf16, #tpu.memory_space<vmem>>, vector<96x32xbf16>
    %cst_16 = arith.constant dense<0.000000e+00> : vector<8x32xf32>
    %13 = tpu.matmul %11, %12, %cst_16 {dimension_numbers = #tpu.dot_dimension_numbers<[1], [0], [0], [1], [0, 0, 1, 1], [], []>} : vector<8x96xbf16>, vector<96x32xbf16>, vector<8x32xf32> -> vector<8x32xf32>
    %cst_17 = arith.constant 0.000000e+00 : f32
    %14 = vector.broadcast %cst_17 : f32 to vector<8x32xf32>
    %15 = arith.maximumf %13, %14 : vector<8x32xf32>
    %c1_18 = arith.constant 1 : index
    %c0_19 = arith.constant 0 : index
    %16 = vector.load %arg7[%c1_18, %c0_19] : memref<10x32xf32, #tpu.memory_space<vmem>>, vector<8x32xf32>
    tpu.vector_store %arg7[%c1_18, %c0_19], %15 {strides = array<i32>} : memref<10x32xf32, #tpu.memory_space<vmem>>, vector<8x32xf32>,
    %c0_20 = arith.constant 0 : index
    %c0_21 = arith.constant 0 : index
    %17 = vector.load %arg7[%c0_20, %c0_21] : memref<10x32xf32, #tpu.memory_space<vmem>>, vector<8x32xf32>
    %c0_22 = arith.constant 0 : index
    %c0_23 = arith.constant 0 : index
    %18 = vector.load %arg8[%c0_22, %c0_23] : memref<8x96xf32, #tpu.memory_space<vmem>>, vector<8x32xf32>
    tpu.vector_store %arg8[%c0_22, %c0_23], %17 {strides = array<i32>} : memref<8x96xf32, #tpu.memory_space<vmem>>, vector<8x32xf32>,
    %c0_24 = arith.constant 0 : index
    %c32_25 = arith.constant 32 : index
    %19 = vector.load %arg8[%c0_24, %c32_25] : memref<8x96xf32, #tpu.memory_space<vmem>>, vector<8x32xf32>
    tpu.vector_store %arg8[%c0_24, %c32_25], %15 {strides = array<i32>} : memref<8x96xf32, #tpu.memory_space<vmem>>, vector<8x32xf32>,
    %c2_26 = arith.constant 2 : index
    %c0_27 = arith.constant 0 : index
    %20 = vector.load %arg7[%c2_26, %c0_27] : memref<10x32xf32, #tpu.memory_space<vmem>>, vector<8x32xf32>
    %c0_28 = arith.constant 0 : index
    %c64_29 = arith.constant 64 : index
    %21 = vector.load %arg8[%c0_28, %c64_29] : memref<8x96xf32, #tpu.memory_space<vmem>>, vector<8x32xf32>
    tpu.vector_store %arg8[%c0_28, %c64_29], %20 {strides = array<i32>} : memref<8x96xf32, #tpu.memory_space<vmem>>, vector<8x32xf32>,
    %c0_30 = arith.constant 0 : index
    %c0_31 = arith.constant 0 : index
    %22 = vector.load %arg8[%c0_30, %c0_31] : memref<8x96xf32, #tpu.memory_space<vmem>>, vector<8x96xf32>
    %23 = arith.truncf %22 : vector<8x96xf32> to vector<8x96xbf16>
    %c0_32 = arith.constant 0 : index
    %c0_33 = arith.constant 0 : index
    %24 = vector.load %arg3[%c0_32, %c0_33] : memref<96x32xbf16, #tpu.memory_space<vmem>>, vector<96x32xbf16>
    %cst_34 = arith.constant dense<0.000000e+00> : vector<8x32xf32>
    %25 = tpu.matmul %23, %24, %cst_34 {dimension_numbers = #tpu.dot_dimension_numbers<[1], [0], [0], [1], [0, 0, 1, 1], [], []>} : vector<8x96xbf16>, vector<96x32xbf16>, vector<8x32xf32> -> vector<8x32xf32>
    %cst_35 = arith.constant 0.000000e+00 : f32
    %26 = vector.broadcast %cst_35 : f32 to vector<8x32xf32>
    %27 = arith.maximumf %25, %26 : vector<8x32xf32>
    %c1_36 = arith.constant 1 : index
    %c0_37 = arith.constant 0 : index
    %28 = vector.load %arg7[%c1_36, %c0_37] : memref<10x32xf32, #tpu.memory_space<vmem>>, vector<8x32xf32>
    tpu.vector_store %arg7[%c1_36, %c0_37], %27 {strides = array<i32>} : memref<10x32xf32, #tpu.memory_space<vmem>>, vector<8x32xf32>,
    %c0_38 = arith.constant 0 : index
    %c0_39 = arith.constant 0 : index
    %29 = vector.load %arg7[%c0_38, %c0_39] : memref<10x32xf32, #tpu.memory_space<vmem>>, vector<8x32xf32>
    %c0_40 = arith.constant 0 : index
    %c0_41 = arith.constant 0 : index
    %30 = vector.load %arg8[%c0_40, %c0_41] : memref<8x96xf32, #tpu.memory_space<vmem>>, vector<8x32xf32>
    tpu.vector_store %arg8[%c0_40, %c0_41], %29 {strides = array<i32>} : memref<8x96xf32, #tpu.memory_space<vmem>>, vector<8x32xf32>,
    %c0_42 = arith.constant 0 : index
    %c32_43 = arith.constant 32 : index
    %31 = vector.load %arg8[%c0_42, %c32_43] : memref<8x96xf32, #tpu.memory_space<vmem>>, vector<8x32xf32>
    tpu.vector_store %arg8[%c0_42, %c32_43], %27 {strides = array<i32>} : memref<8x96xf32, #tpu.memory_space<vmem>>, vector<8x32xf32>,
    %c2_44 = arith.constant 2 : index
    %c0_45 = arith.constant 0 : index
    %32 = vector.load %arg7[%c2_44, %c0_45] : memref<10x32xf32, #tpu.memory_space<vmem>>, vector<8x32xf32>
    %c0_46 = arith.constant 0 : index
    %c64_47 = arith.constant 64 : index
    %33 = vector.load %arg8[%c0_46, %c64_47] : memref<8x96xf32, #tpu.memory_space<vmem>>, vector<8x32xf32>
    tpu.vector_store %arg8[%c0_46, %c64_47], %32 {strides = array<i32>} : memref<8x96xf32, #tpu.memory_space<vmem>>, vector<8x32xf32>,
    %c0_48 = arith.constant 0 : index
    %c0_49 = arith.constant 0 : index
    %34 = vector.load %arg8[%c0_48, %c0_49] : memref<8x96xf32, #tpu.memory_space<vmem>>, vector<8x96xf32>
    %35 = arith.truncf %34 : vector<8x96xf32> to vector<8x96xbf16>
    %c0_50 = arith.constant 0 : index
    %c0_51 = arith.constant 0 : index
    %36 = vector.load %arg4[%c0_50, %c0_51] : memref<96x32xbf16, #tpu.memory_space<vmem>>, vector<96x32xbf16>
    %cst_52 = arith.constant dense<0.000000e+00> : vector<8x32xf32>
    %37 = tpu.matmul %35, %36, %cst_52 {dimension_numbers = #tpu.dot_dimension_numbers<[1], [0], [0], [1], [0, 0, 1, 1], [], []>} : vector<8x96xbf16>, vector<96x32xbf16>, vector<8x32xf32> -> vector<8x32xf32>
    %38 = arith.addf %37, %15 : vector<8x32xf32>
    %cst_53 = arith.constant 0.000000e+00 : f32
    %39 = vector.broadcast %cst_53 : f32 to vector<8x32xf32>
    %40 = arith.maximumf %38, %39 : vector<8x32xf32>
    %c1_54 = arith.constant 1 : index
    %c0_55 = arith.constant 0 : index
    %41 = vector.load %arg7[%c1_54, %c0_55] : memref<10x32xf32, #tpu.memory_space<vmem>>, vector<8x32xf32>
    tpu.vector_store %arg7[%c1_54, %c0_55], %40 {strides = array<i32>} : memref<10x32xf32, #tpu.memory_space<vmem>>, vector<8x32xf32>,
    %c0_56 = arith.constant 0 : index
    %c0_57 = arith.constant 0 : index
    %42 = vector.load %arg7[%c0_56, %c0_57] : memref<10x32xf32, #tpu.memory_space<vmem>>, vector<8x32xf32>
    %c0_58 = arith.constant 0 : index
    %c0_59 = arith.constant 0 : index
    %43 = vector.load %arg8[%c0_58, %c0_59] : memref<8x96xf32, #tpu.memory_space<vmem>>, vector<8x32xf32>
    tpu.vector_store %arg8[%c0_58, %c0_59], %42 {strides = array<i32>} : memref<8x96xf32, #tpu.memory_space<vmem>>, vector<8x32xf32>,
    %c0_60 = arith.constant 0 : index
    %c32_61 = arith.constant 32 : index
    %44 = vector.load %arg8[%c0_60, %c32_61] : memref<8x96xf32, #tpu.memory_space<vmem>>, vector<8x32xf32>
    tpu.vector_store %arg8[%c0_60, %c32_61], %40 {strides = array<i32>} : memref<8x96xf32, #tpu.memory_space<vmem>>, vector<8x32xf32>,
    %c2_62 = arith.constant 2 : index
    %c0_63 = arith.constant 0 : index
    %45 = vector.load %arg7[%c2_62, %c0_63] : memref<10x32xf32, #tpu.memory_space<vmem>>, vector<8x32xf32>
    %c0_64 = arith.constant 0 : index
    %c64_65 = arith.constant 64 : index
    %46 = vector.load %arg8[%c0_64, %c64_65] : memref<8x96xf32, #tpu.memory_space<vmem>>, vector<8x32xf32>
    tpu.vector_store %arg8[%c0_64, %c64_65], %45 {strides = array<i32>} : memref<8x96xf32, #tpu.memory_space<vmem>>, vector<8x32xf32>,
    %c0_66 = arith.constant 0 : index
    %c0_67 = arith.constant 0 : index
    %47 = vector.load %arg8[%c0_66, %c0_67] : memref<8x96xf32, #tpu.memory_space<vmem>>, vector<8x96xf32>
    %48 = arith.truncf %47 : vector<8x96xf32> to vector<8x96xbf16>
    %c0_68 = arith.constant 0 : index
    %c0_69 = arith.constant 0 : index
    %49 = vector.load %arg5[%c0_68, %c0_69] : memref<96x64xbf16, #tpu.memory_space<vmem>>, vector<96x64xbf16>
    %cst_70 = arith.constant dense<0.000000e+00> : vector<8x64xf32>
    %50 = tpu.matmul %48, %49, %cst_70 {dimension_numbers = #tpu.dot_dimension_numbers<[1], [0], [0], [1], [0, 0, 1, 1], [], []>} : vector<8x96xbf16>, vector<96x64xbf16>, vector<8x64xf32> -> vector<8x64xf32>
    %cst_71 = arith.constant 0.000000e+00 : f32
    %51 = vector.broadcast %cst_71 : f32 to vector<8x64xf32>
    %52 = arith.maximumf %50, %51 : vector<8x64xf32>
    %c0_72 = arith.constant 0 : index
    %c0_73 = arith.constant 0 : index
    %c0_74 = arith.constant 0 : index
    %53 = vector.load %arg6[%c0_72, %c0_73, %c0_74] : memref<1x8x64xf32, #tpu.memory_space<vmem>>, vector<1x8x64xf32>
    %54 = vector.shape_cast %53 : vector<1x8x64xf32> to vector<8x64xf32>
    %55 = vector.shape_cast %52 : vector<8x64xf32> to vector<1x8x64xf32>
    tpu.vector_store %arg6[%c0_72, %c0_73, %c0_74], %55 {strides = array<i32>} : memref<1x8x64xf32, #tpu.memory_space<vmem>>, vector<1x8x64xf32>,
    return
  }
  func.func @transform_0(%arg0: i32) -> (i32, i32, i32) {
    %c0_i32 = arith.constant 0 : i32
    %c0_i32_0 = arith.constant 0 : i32
    %c0_i32_1 = arith.constant 0 : i32
    return %arg0, %c0_i32, %c0_i32_0 : i32, i32, i32
  }
  func.func @transform_1(%arg0: i32) -> (i32, i32) {
    %c0_i32 = arith.constant 0 : i32
    %c0_i32_0 = arith.constant 0 : i32
    %c0_i32_1 = arith.constant 0 : i32
    return %c0_i32, %c0_i32_0 : i32, i32
  }
  func.func @transform_2(%arg0: i32) -> (i32, i32) {
    %c0_i32 = arith.constant 0 : i32
    %c0_i32_0 = arith.constant 0 : i32
    %c0_i32_1 = arith.constant 0 : i32
    return %c0_i32, %c0_i32_0 : i32, i32
  }
  func.func @transform_3(%arg0: i32) -> (i32, i32) {
    %c0_i32 = arith.constant 0 : i32
    %c0_i32_0 = arith.constant 0 : i32
    %c0_i32_1 = arith.constant 0 : i32
    return %c0_i32, %c0_i32_0 : i32, i32
  }
  func.func @transform_4(%arg0: i32) -> (i32, i32) {
    %c0_i32 = arith.constant 0 : i32
    %c0_i32_0 = arith.constant 0 : i32
    %c0_i32_1 = arith.constant 0 : i32
    return %c0_i32, %c0_i32_0 : i32, i32
  }
  func.func @transform_5(%arg0: i32) -> (i32, i32, i32) {
    %c0_i32 = arith.constant 0 : i32
    %c0_i32_0 = arith.constant 0 : i32
    %c0_i32_1 = arith.constant 0 : i32
    return %arg0, %c0_i32, %c0_i32_0 : i32, i32, i32
  }
}

module attributes {stable_mosaic.version = 11 : i64} {
  func.func @_conv_stack_kernel(%arg0: i32, %arg1: memref<1x16x32xf32, #tpu.memory_space<vmem>>, %arg2: memref<96x32xbf16, #tpu.memory_space<vmem>>, %arg3: memref<96x32xbf16, #tpu.memory_space<vmem>>, %arg4: memref<96x32xbf16, #tpu.memory_space<vmem>>, %arg5: memref<96x32xbf16, #tpu.memory_space<vmem>>, %arg6: memref<96x32xbf16, #tpu.memory_space<vmem>>, %arg7: memref<96x32xbf16, #tpu.memory_space<vmem>>, %arg8: memref<96x32xbf16, #tpu.memory_space<vmem>>, %arg9: memref<1x16x32xf32, #tpu.memory_space<vmem>>, %arg10: memref<18x32xf32, #tpu.memory_space<vmem>>, %arg11: memref<16x96xf32, #tpu.memory_space<vmem>>) attributes {dimension_semantics = [#tpu.dimension_semantics<parallel>], iteration_bounds = array<i64: 2>, scalar_prefetch = 0 : i64, scratch_operands = 2 : i64, tpu.core_type = #tpu.core_type<tc>, window_params = [{transform_indices = @transform_0, window_bounds = array<i64: 1, 16, 32>}, {pipeline_mode = #tpu.pipeline_mode<synchronous>, transform_indices = @transform_1, window_bounds = array<i64: 96, 32>}, {pipeline_mode = #tpu.pipeline_mode<synchronous>, transform_indices = @transform_2, window_bounds = array<i64: 96, 32>}, {pipeline_mode = #tpu.pipeline_mode<synchronous>, transform_indices = @transform_3, window_bounds = array<i64: 96, 32>}, {pipeline_mode = #tpu.pipeline_mode<synchronous>, transform_indices = @transform_4, window_bounds = array<i64: 96, 32>}, {pipeline_mode = #tpu.pipeline_mode<synchronous>, transform_indices = @transform_5, window_bounds = array<i64: 96, 32>}, {pipeline_mode = #tpu.pipeline_mode<synchronous>, transform_indices = @transform_6, window_bounds = array<i64: 96, 32>}, {pipeline_mode = #tpu.pipeline_mode<synchronous>, transform_indices = @transform_7, window_bounds = array<i64: 96, 32>}, {transform_indices = @transform_8, window_bounds = array<i64: 1, 16, 32>}]} {
    %cst = arith.constant 0.000000e+00 : f32
    %0 = vector.broadcast %cst : f32 to vector<18x32xf32>
    %c0 = arith.constant 0 : index
    %c0_0 = arith.constant 0 : index
    %1 = vector.load %arg10[%c0, %c0_0] : memref<18x32xf32, #tpu.memory_space<vmem>>, vector<18x32xf32>
    tpu.vector_store %arg10[%c0, %c0_0], %0 {strides = array<i32>} : memref<18x32xf32, #tpu.memory_space<vmem>>, vector<18x32xf32>,
    %c0_1 = arith.constant 0 : index
    %c0_2 = arith.constant 0 : index
    %c0_3 = arith.constant 0 : index
    %2 = vector.load %arg1[%c0_1, %c0_2, %c0_3] : memref<1x16x32xf32, #tpu.memory_space<vmem>>, vector<1x16x32xf32>
    %3 = vector.shape_cast %2 : vector<1x16x32xf32> to vector<16x32xf32>
    %c1 = arith.constant 1 : index
    %c0_4 = arith.constant 0 : index
    %4 = vector.load %arg10[%c1, %c0_4] : memref<18x32xf32, #tpu.memory_space<vmem>>, vector<16x32xf32>
    tpu.vector_store %arg10[%c1, %c0_4], %3 {strides = array<i32>} : memref<18x32xf32, #tpu.memory_space<vmem>>, vector<16x32xf32>,
    %c0_5 = arith.constant 0 : index
    %c0_6 = arith.constant 0 : index
    %5 = vector.load %arg10[%c0_5, %c0_6] : memref<18x32xf32, #tpu.memory_space<vmem>>, vector<16x32xf32>
    %c0_7 = arith.constant 0 : index
    %c0_8 = arith.constant 0 : index
    %6 = vector.load %arg11[%c0_7, %c0_8] : memref<16x96xf32, #tpu.memory_space<vmem>>, vector<16x32xf32>
    tpu.vector_store %arg11[%c0_7, %c0_8], %5 {strides = array<i32>} : memref<16x96xf32, #tpu.memory_space<vmem>>, vector<16x32xf32>,
    %c0_9 = arith.constant 0 : index
    %c32 = arith.constant 32 : index
    %7 = vector.load %arg11[%c0_9, %c32] : memref<16x96xf32, #tpu.memory_space<vmem>>, vector<16x32xf32>
    tpu.vector_store %arg11[%c0_9, %c32], %3 {strides = array<i32>} : memref<16x96xf32, #tpu.memory_space<vmem>>, vector<16x32xf32>,
    %c2 = arith.constant 2 : index
    %c0_10 = arith.constant 0 : index
    %8 = vector.load %arg10[%c2, %c0_10] : memref<18x32xf32, #tpu.memory_space<vmem>>, vector<16x32xf32>
    %c0_11 = arith.constant 0 : index
    %c64 = arith.constant 64 : index
    %9 = vector.load %arg11[%c0_11, %c64] : memref<16x96xf32, #tpu.memory_space<vmem>>, vector<16x32xf32>
    tpu.vector_store %arg11[%c0_11, %c64], %8 {strides = array<i32>} : memref<16x96xf32, #tpu.memory_space<vmem>>, vector<16x32xf32>,
    %c0_12 = arith.constant 0 : index
    %c0_13 = arith.constant 0 : index
    %10 = vector.load %arg11[%c0_12, %c0_13] : memref<16x96xf32, #tpu.memory_space<vmem>>, vector<16x96xf32>
    %11 = arith.truncf %10 : vector<16x96xf32> to vector<16x96xbf16>
    %c0_14 = arith.constant 0 : index
    %c0_15 = arith.constant 0 : index
    %12 = vector.load %arg2[%c0_14, %c0_15] : memref<96x32xbf16, #tpu.memory_space<vmem>>, vector<96x32xbf16>
    %cst_16 = arith.constant dense<0.000000e+00> : vector<16x32xf32>
    %13 = tpu.matmul %11, %12, %cst_16 {dimension_numbers = #tpu.dot_dimension_numbers<[1], [0], [0], [1], [0, 0, 1, 1], [], []>} : vector<16x96xbf16>, vector<96x32xbf16>, vector<16x32xf32> -> vector<16x32xf32>
    %cst_17 = arith.constant 0.000000e+00 : f32
    %14 = vector.broadcast %cst_17 : f32 to vector<16x32xf32>
    %15 = arith.maximumf %13, %14 : vector<16x32xf32>
    %c1_18 = arith.constant 1 : index
    %c0_19 = arith.constant 0 : index
    %16 = vector.load %arg10[%c1_18, %c0_19] : memref<18x32xf32, #tpu.memory_space<vmem>>, vector<16x32xf32>
    tpu.vector_store %arg10[%c1_18, %c0_19], %15 {strides = array<i32>} : memref<18x32xf32, #tpu.memory_space<vmem>>, vector<16x32xf32>,
    %c0_20 = arith.constant 0 : index
    %c0_21 = arith.constant 0 : index
    %17 = vector.load %arg10[%c0_20, %c0_21] : memref<18x32xf32, #tpu.memory_space<vmem>>, vector<16x32xf32>
    %c0_22 = arith.constant 0 : index
    %c0_23 = arith.constant 0 : index
    %18 = vector.load %arg11[%c0_22, %c0_23] : memref<16x96xf32, #tpu.memory_space<vmem>>, vector<16x32xf32>
    tpu.vector_store %arg11[%c0_22, %c0_23], %17 {strides = array<i32>} : memref<16x96xf32, #tpu.memory_space<vmem>>, vector<16x32xf32>,
    %c0_24 = arith.constant 0 : index
    %c32_25 = arith.constant 32 : index
    %19 = vector.load %arg11[%c0_24, %c32_25] : memref<16x96xf32, #tpu.memory_space<vmem>>, vector<16x32xf32>
    tpu.vector_store %arg11[%c0_24, %c32_25], %15 {strides = array<i32>} : memref<16x96xf32, #tpu.memory_space<vmem>>, vector<16x32xf32>,
    %c2_26 = arith.constant 2 : index
    %c0_27 = arith.constant 0 : index
    %20 = vector.load %arg10[%c2_26, %c0_27] : memref<18x32xf32, #tpu.memory_space<vmem>>, vector<16x32xf32>
    %c0_28 = arith.constant 0 : index
    %c64_29 = arith.constant 64 : index
    %21 = vector.load %arg11[%c0_28, %c64_29] : memref<16x96xf32, #tpu.memory_space<vmem>>, vector<16x32xf32>
    tpu.vector_store %arg11[%c0_28, %c64_29], %20 {strides = array<i32>} : memref<16x96xf32, #tpu.memory_space<vmem>>, vector<16x32xf32>,
    %c0_30 = arith.constant 0 : index
    %c0_31 = arith.constant 0 : index
    %22 = vector.load %arg11[%c0_30, %c0_31] : memref<16x96xf32, #tpu.memory_space<vmem>>, vector<16x96xf32>
    %23 = arith.truncf %22 : vector<16x96xf32> to vector<16x96xbf16>
    %c0_32 = arith.constant 0 : index
    %c0_33 = arith.constant 0 : index
    %24 = vector.load %arg3[%c0_32, %c0_33] : memref<96x32xbf16, #tpu.memory_space<vmem>>, vector<96x32xbf16>
    %cst_34 = arith.constant dense<0.000000e+00> : vector<16x32xf32>
    %25 = tpu.matmul %23, %24, %cst_34 {dimension_numbers = #tpu.dot_dimension_numbers<[1], [0], [0], [1], [0, 0, 1, 1], [], []>} : vector<16x96xbf16>, vector<96x32xbf16>, vector<16x32xf32> -> vector<16x32xf32>
    %cst_35 = arith.constant 0.000000e+00 : f32
    %26 = vector.broadcast %cst_35 : f32 to vector<16x32xf32>
    %27 = arith.maximumf %25, %26 : vector<16x32xf32>
    %c1_36 = arith.constant 1 : index
    %c0_37 = arith.constant 0 : index
    %28 = vector.load %arg10[%c1_36, %c0_37] : memref<18x32xf32, #tpu.memory_space<vmem>>, vector<16x32xf32>
    tpu.vector_store %arg10[%c1_36, %c0_37], %27 {strides = array<i32>} : memref<18x32xf32, #tpu.memory_space<vmem>>, vector<16x32xf32>,
    %c0_38 = arith.constant 0 : index
    %c0_39 = arith.constant 0 : index
    %29 = vector.load %arg10[%c0_38, %c0_39] : memref<18x32xf32, #tpu.memory_space<vmem>>, vector<16x32xf32>
    %c0_40 = arith.constant 0 : index
    %c0_41 = arith.constant 0 : index
    %30 = vector.load %arg11[%c0_40, %c0_41] : memref<16x96xf32, #tpu.memory_space<vmem>>, vector<16x32xf32>
    tpu.vector_store %arg11[%c0_40, %c0_41], %29 {strides = array<i32>} : memref<16x96xf32, #tpu.memory_space<vmem>>, vector<16x32xf32>,
    %c0_42 = arith.constant 0 : index
    %c32_43 = arith.constant 32 : index
    %31 = vector.load %arg11[%c0_42, %c32_43] : memref<16x96xf32, #tpu.memory_space<vmem>>, vector<16x32xf32>
    tpu.vector_store %arg11[%c0_42, %c32_43], %27 {strides = array<i32>} : memref<16x96xf32, #tpu.memory_space<vmem>>, vector<16x32xf32>,
    %c2_44 = arith.constant 2 : index
    %c0_45 = arith.constant 0 : index
    %32 = vector.load %arg10[%c2_44, %c0_45] : memref<18x32xf32, #tpu.memory_space<vmem>>, vector<16x32xf32>
    %c0_46 = arith.constant 0 : index
    %c64_47 = arith.constant 64 : index
    %33 = vector.load %arg11[%c0_46, %c64_47] : memref<16x96xf32, #tpu.memory_space<vmem>>, vector<16x32xf32>
    tpu.vector_store %arg11[%c0_46, %c64_47], %32 {strides = array<i32>} : memref<16x96xf32, #tpu.memory_space<vmem>>, vector<16x32xf32>,
    %c0_48 = arith.constant 0 : index
    %c0_49 = arith.constant 0 : index
    %34 = vector.load %arg11[%c0_48, %c0_49] : memref<16x96xf32, #tpu.memory_space<vmem>>, vector<16x96xf32>
    %35 = arith.truncf %34 : vector<16x96xf32> to vector<16x96xbf16>
    %c0_50 = arith.constant 0 : index
    %c0_51 = arith.constant 0 : index
    %36 = vector.load %arg4[%c0_50, %c0_51] : memref<96x32xbf16, #tpu.memory_space<vmem>>, vector<96x32xbf16>
    %cst_52 = arith.constant dense<0.000000e+00> : vector<16x32xf32>
    %37 = tpu.matmul %35, %36, %cst_52 {dimension_numbers = #tpu.dot_dimension_numbers<[1], [0], [0], [1], [0, 0, 1, 1], [], []>} : vector<16x96xbf16>, vector<96x32xbf16>, vector<16x32xf32> -> vector<16x32xf32>
    %38 = arith.addf %37, %15 : vector<16x32xf32>
    %cst_53 = arith.constant 0.000000e+00 : f32
    %39 = vector.broadcast %cst_53 : f32 to vector<16x32xf32>
    %40 = arith.maximumf %38, %39 : vector<16x32xf32>
    %c1_54 = arith.constant 1 : index
    %c0_55 = arith.constant 0 : index
    %41 = vector.load %arg10[%c1_54, %c0_55] : memref<18x32xf32, #tpu.memory_space<vmem>>, vector<16x32xf32>
    tpu.vector_store %arg10[%c1_54, %c0_55], %40 {strides = array<i32>} : memref<18x32xf32, #tpu.memory_space<vmem>>, vector<16x32xf32>,
    %c0_56 = arith.constant 0 : index
    %c0_57 = arith.constant 0 : index
    %42 = vector.load %arg10[%c0_56, %c0_57] : memref<18x32xf32, #tpu.memory_space<vmem>>, vector<16x32xf32>
    %c0_58 = arith.constant 0 : index
    %c0_59 = arith.constant 0 : index
    %43 = vector.load %arg11[%c0_58, %c0_59] : memref<16x96xf32, #tpu.memory_space<vmem>>, vector<16x32xf32>
    tpu.vector_store %arg11[%c0_58, %c0_59], %42 {strides = array<i32>} : memref<16x96xf32, #tpu.memory_space<vmem>>, vector<16x32xf32>,
    %c0_60 = arith.constant 0 : index
    %c32_61 = arith.constant 32 : index
    %44 = vector.load %arg11[%c0_60, %c32_61] : memref<16x96xf32, #tpu.memory_space<vmem>>, vector<16x32xf32>
    tpu.vector_store %arg11[%c0_60, %c32_61], %40 {strides = array<i32>} : memref<16x96xf32, #tpu.memory_space<vmem>>, vector<16x32xf32>,
    %c2_62 = arith.constant 2 : index
    %c0_63 = arith.constant 0 : index
    %45 = vector.load %arg10[%c2_62, %c0_63] : memref<18x32xf32, #tpu.memory_space<vmem>>, vector<16x32xf32>
    %c0_64 = arith.constant 0 : index
    %c64_65 = arith.constant 64 : index
    %46 = vector.load %arg11[%c0_64, %c64_65] : memref<16x96xf32, #tpu.memory_space<vmem>>, vector<16x32xf32>
    tpu.vector_store %arg11[%c0_64, %c64_65], %45 {strides = array<i32>} : memref<16x96xf32, #tpu.memory_space<vmem>>, vector<16x32xf32>,
    %c0_66 = arith.constant 0 : index
    %c0_67 = arith.constant 0 : index
    %47 = vector.load %arg11[%c0_66, %c0_67] : memref<16x96xf32, #tpu.memory_space<vmem>>, vector<16x96xf32>
    %48 = arith.truncf %47 : vector<16x96xf32> to vector<16x96xbf16>
    %c0_68 = arith.constant 0 : index
    %c0_69 = arith.constant 0 : index
    %49 = vector.load %arg5[%c0_68, %c0_69] : memref<96x32xbf16, #tpu.memory_space<vmem>>, vector<96x32xbf16>
    %cst_70 = arith.constant dense<0.000000e+00> : vector<16x32xf32>
    %50 = tpu.matmul %48, %49, %cst_70 {dimension_numbers = #tpu.dot_dimension_numbers<[1], [0], [0], [1], [0, 0, 1, 1], [], []>} : vector<16x96xbf16>, vector<96x32xbf16>, vector<16x32xf32> -> vector<16x32xf32>
    %cst_71 = arith.constant 0.000000e+00 : f32
    %51 = vector.broadcast %cst_71 : f32 to vector<16x32xf32>
    %52 = arith.maximumf %50, %51 : vector<16x32xf32>
    %c1_72 = arith.constant 1 : index
    %c0_73 = arith.constant 0 : index
    %53 = vector.load %arg10[%c1_72, %c0_73] : memref<18x32xf32, #tpu.memory_space<vmem>>, vector<16x32xf32>
    tpu.vector_store %arg10[%c1_72, %c0_73], %52 {strides = array<i32>} : memref<18x32xf32, #tpu.memory_space<vmem>>, vector<16x32xf32>,
    %c0_74 = arith.constant 0 : index
    %c0_75 = arith.constant 0 : index
    %54 = vector.load %arg10[%c0_74, %c0_75] : memref<18x32xf32, #tpu.memory_space<vmem>>, vector<16x32xf32>
    %c0_76 = arith.constant 0 : index
    %c0_77 = arith.constant 0 : index
    %55 = vector.load %arg11[%c0_76, %c0_77] : memref<16x96xf32, #tpu.memory_space<vmem>>, vector<16x32xf32>
    tpu.vector_store %arg11[%c0_76, %c0_77], %54 {strides = array<i32>} : memref<16x96xf32, #tpu.memory_space<vmem>>, vector<16x32xf32>,
    %c0_78 = arith.constant 0 : index
    %c32_79 = arith.constant 32 : index
    %56 = vector.load %arg11[%c0_78, %c32_79] : memref<16x96xf32, #tpu.memory_space<vmem>>, vector<16x32xf32>
    tpu.vector_store %arg11[%c0_78, %c32_79], %52 {strides = array<i32>} : memref<16x96xf32, #tpu.memory_space<vmem>>, vector<16x32xf32>,
    %c2_80 = arith.constant 2 : index
    %c0_81 = arith.constant 0 : index
    %57 = vector.load %arg10[%c2_80, %c0_81] : memref<18x32xf32, #tpu.memory_space<vmem>>, vector<16x32xf32>
    %c0_82 = arith.constant 0 : index
    %c64_83 = arith.constant 64 : index
    %58 = vector.load %arg11[%c0_82, %c64_83] : memref<16x96xf32, #tpu.memory_space<vmem>>, vector<16x32xf32>
    tpu.vector_store %arg11[%c0_82, %c64_83], %57 {strides = array<i32>} : memref<16x96xf32, #tpu.memory_space<vmem>>, vector<16x32xf32>,
    %c0_84 = arith.constant 0 : index
    %c0_85 = arith.constant 0 : index
    %59 = vector.load %arg11[%c0_84, %c0_85] : memref<16x96xf32, #tpu.memory_space<vmem>>, vector<16x96xf32>
    %60 = arith.truncf %59 : vector<16x96xf32> to vector<16x96xbf16>
    %c0_86 = arith.constant 0 : index
    %c0_87 = arith.constant 0 : index
    %61 = vector.load %arg6[%c0_86, %c0_87] : memref<96x32xbf16, #tpu.memory_space<vmem>>, vector<96x32xbf16>
    %cst_88 = arith.constant dense<0.000000e+00> : vector<16x32xf32>
    %62 = tpu.matmul %60, %61, %cst_88 {dimension_numbers = #tpu.dot_dimension_numbers<[1], [0], [0], [1], [0, 0, 1, 1], [], []>} : vector<16x96xbf16>, vector<96x32xbf16>, vector<16x32xf32> -> vector<16x32xf32>
    %63 = arith.addf %62, %40 : vector<16x32xf32>
    %cst_89 = arith.constant 0.000000e+00 : f32
    %64 = vector.broadcast %cst_89 : f32 to vector<16x32xf32>
    %65 = arith.maximumf %63, %64 : vector<16x32xf32>
    %c1_90 = arith.constant 1 : index
    %c0_91 = arith.constant 0 : index
    %66 = vector.load %arg10[%c1_90, %c0_91] : memref<18x32xf32, #tpu.memory_space<vmem>>, vector<16x32xf32>
    tpu.vector_store %arg10[%c1_90, %c0_91], %65 {strides = array<i32>} : memref<18x32xf32, #tpu.memory_space<vmem>>, vector<16x32xf32>,
    %c0_92 = arith.constant 0 : index
    %c0_93 = arith.constant 0 : index
    %67 = vector.load %arg10[%c0_92, %c0_93] : memref<18x32xf32, #tpu.memory_space<vmem>>, vector<16x32xf32>
    %c0_94 = arith.constant 0 : index
    %c0_95 = arith.constant 0 : index
    %68 = vector.load %arg11[%c0_94, %c0_95] : memref<16x96xf32, #tpu.memory_space<vmem>>, vector<16x32xf32>
    tpu.vector_store %arg11[%c0_94, %c0_95], %67 {strides = array<i32>} : memref<16x96xf32, #tpu.memory_space<vmem>>, vector<16x32xf32>,
    %c0_96 = arith.constant 0 : index
    %c32_97 = arith.constant 32 : index
    %69 = vector.load %arg11[%c0_96, %c32_97] : memref<16x96xf32, #tpu.memory_space<vmem>>, vector<16x32xf32>
    tpu.vector_store %arg11[%c0_96, %c32_97], %65 {strides = array<i32>} : memref<16x96xf32, #tpu.memory_space<vmem>>, vector<16x32xf32>,
    %c2_98 = arith.constant 2 : index
    %c0_99 = arith.constant 0 : index
    %70 = vector.load %arg10[%c2_98, %c0_99] : memref<18x32xf32, #tpu.memory_space<vmem>>, vector<16x32xf32>
    %c0_100 = arith.constant 0 : index
    %c64_101 = arith.constant 64 : index
    %71 = vector.load %arg11[%c0_100, %c64_101] : memref<16x96xf32, #tpu.memory_space<vmem>>, vector<16x32xf32>
    tpu.vector_store %arg11[%c0_100, %c64_101], %70 {strides = array<i32>} : memref<16x96xf32, #tpu.memory_space<vmem>>, vector<16x32xf32>,
    %c0_102 = arith.constant 0 : index
    %c0_103 = arith.constant 0 : index
    %72 = vector.load %arg11[%c0_102, %c0_103] : memref<16x96xf32, #tpu.memory_space<vmem>>, vector<16x96xf32>
    %73 = arith.truncf %72 : vector<16x96xf32> to vector<16x96xbf16>
    %c0_104 = arith.constant 0 : index
    %c0_105 = arith.constant 0 : index
    %74 = vector.load %arg7[%c0_104, %c0_105] : memref<96x32xbf16, #tpu.memory_space<vmem>>, vector<96x32xbf16>
    %cst_106 = arith.constant dense<0.000000e+00> : vector<16x32xf32>
    %75 = tpu.matmul %73, %74, %cst_106 {dimension_numbers = #tpu.dot_dimension_numbers<[1], [0], [0], [1], [0, 0, 1, 1], [], []>} : vector<16x96xbf16>, vector<96x32xbf16>, vector<16x32xf32> -> vector<16x32xf32>
    %cst_107 = arith.constant 0.000000e+00 : f32
    %76 = vector.broadcast %cst_107 : f32 to vector<16x32xf32>
    %77 = arith.maximumf %75, %76 : vector<16x32xf32>
    %c1_108 = arith.constant 1 : index
    %c0_109 = arith.constant 0 : index
    %78 = vector.load %arg10[%c1_108, %c0_109] : memref<18x32xf32, #tpu.memory_space<vmem>>, vector<16x32xf32>
    tpu.vector_store %arg10[%c1_108, %c0_109], %77 {strides = array<i32>} : memref<18x32xf32, #tpu.memory_space<vmem>>, vector<16x32xf32>,
    %c0_110 = arith.constant 0 : index
    %c0_111 = arith.constant 0 : index
    %79 = vector.load %arg10[%c0_110, %c0_111] : memref<18x32xf32, #tpu.memory_space<vmem>>, vector<16x32xf32>
    %c0_112 = arith.constant 0 : index
    %c0_113 = arith.constant 0 : index
    %80 = vector.load %arg11[%c0_112, %c0_113] : memref<16x96xf32, #tpu.memory_space<vmem>>, vector<16x32xf32>
    tpu.vector_store %arg11[%c0_112, %c0_113], %79 {strides = array<i32>} : memref<16x96xf32, #tpu.memory_space<vmem>>, vector<16x32xf32>,
    %c0_114 = arith.constant 0 : index
    %c32_115 = arith.constant 32 : index
    %81 = vector.load %arg11[%c0_114, %c32_115] : memref<16x96xf32, #tpu.memory_space<vmem>>, vector<16x32xf32>
    tpu.vector_store %arg11[%c0_114, %c32_115], %77 {strides = array<i32>} : memref<16x96xf32, #tpu.memory_space<vmem>>, vector<16x32xf32>,
    %c2_116 = arith.constant 2 : index
    %c0_117 = arith.constant 0 : index
    %82 = vector.load %arg10[%c2_116, %c0_117] : memref<18x32xf32, #tpu.memory_space<vmem>>, vector<16x32xf32>
    %c0_118 = arith.constant 0 : index
    %c64_119 = arith.constant 64 : index
    %83 = vector.load %arg11[%c0_118, %c64_119] : memref<16x96xf32, #tpu.memory_space<vmem>>, vector<16x32xf32>
    tpu.vector_store %arg11[%c0_118, %c64_119], %82 {strides = array<i32>} : memref<16x96xf32, #tpu.memory_space<vmem>>, vector<16x32xf32>,
    %c0_120 = arith.constant 0 : index
    %c0_121 = arith.constant 0 : index
    %84 = vector.load %arg11[%c0_120, %c0_121] : memref<16x96xf32, #tpu.memory_space<vmem>>, vector<16x96xf32>
    %85 = arith.truncf %84 : vector<16x96xf32> to vector<16x96xbf16>
    %c0_122 = arith.constant 0 : index
    %c0_123 = arith.constant 0 : index
    %86 = vector.load %arg8[%c0_122, %c0_123] : memref<96x32xbf16, #tpu.memory_space<vmem>>, vector<96x32xbf16>
    %cst_124 = arith.constant dense<0.000000e+00> : vector<16x32xf32>
    %87 = tpu.matmul %85, %86, %cst_124 {dimension_numbers = #tpu.dot_dimension_numbers<[1], [0], [0], [1], [0, 0, 1, 1], [], []>} : vector<16x96xbf16>, vector<96x32xbf16>, vector<16x32xf32> -> vector<16x32xf32>
    %88 = arith.addf %87, %65 : vector<16x32xf32>
    %cst_125 = arith.constant 0.000000e+00 : f32
    %89 = vector.broadcast %cst_125 : f32 to vector<16x32xf32>
    %90 = arith.maximumf %88, %89 : vector<16x32xf32>
    %c0_126 = arith.constant 0 : index
    %c0_127 = arith.constant 0 : index
    %c0_128 = arith.constant 0 : index
    %91 = vector.load %arg9[%c0_126, %c0_127, %c0_128] : memref<1x16x32xf32, #tpu.memory_space<vmem>>, vector<1x16x32xf32>
    %92 = vector.shape_cast %91 : vector<1x16x32xf32> to vector<16x32xf32>
    %93 = vector.shape_cast %90 : vector<16x32xf32> to vector<1x16x32xf32>
    tpu.vector_store %arg9[%c0_126, %c0_127, %c0_128], %93 {strides = array<i32>} : memref<1x16x32xf32, #tpu.memory_space<vmem>>, vector<1x16x32xf32>,
    return
  }
  func.func @transform_0(%arg0: i32) -> (i32, i32, i32) {
    %c0_i32 = arith.constant 0 : i32
    %c0_i32_0 = arith.constant 0 : i32
    %c0_i32_1 = arith.constant 0 : i32
    return %arg0, %c0_i32, %c0_i32_0 : i32, i32, i32
  }
  func.func @transform_1(%arg0: i32) -> (i32, i32) {
    %c0_i32 = arith.constant 0 : i32
    %c0_i32_0 = arith.constant 0 : i32
    %c0_i32_1 = arith.constant 0 : i32
    return %c0_i32, %c0_i32_0 : i32, i32
  }
  func.func @transform_2(%arg0: i32) -> (i32, i32) {
    %c0_i32 = arith.constant 0 : i32
    %c0_i32_0 = arith.constant 0 : i32
    %c0_i32_1 = arith.constant 0 : i32
    return %c0_i32, %c0_i32_0 : i32, i32
  }
  func.func @transform_3(%arg0: i32) -> (i32, i32) {
    %c0_i32 = arith.constant 0 : i32
    %c0_i32_0 = arith.constant 0 : i32
    %c0_i32_1 = arith.constant 0 : i32
    return %c0_i32, %c0_i32_0 : i32, i32
  }
  func.func @transform_4(%arg0: i32) -> (i32, i32) {
    %c0_i32 = arith.constant 0 : i32
    %c0_i32_0 = arith.constant 0 : i32
    %c0_i32_1 = arith.constant 0 : i32
    return %c0_i32, %c0_i32_0 : i32, i32
  }
  func.func @transform_5(%arg0: i32) -> (i32, i32) {
    %c0_i32 = arith.constant 0 : i32
    %c0_i32_0 = arith.constant 0 : i32
    %c0_i32_1 = arith.constant 0 : i32
    return %c0_i32, %c0_i32_0 : i32, i32
  }
  func.func @transform_6(%arg0: i32) -> (i32, i32) {
    %c0_i32 = arith.constant 0 : i32
    %c0_i32_0 = arith.constant 0 : i32
    %c0_i32_1 = arith.constant 0 : i32
    return %c0_i32, %c0_i32_0 : i32, i32
  }
  func.func @transform_7(%arg0: i32) -> (i32, i32) {
    %c0_i32 = arith.constant 0 : i32
    %c0_i32_0 = arith.constant 0 : i32
    %c0_i32_1 = arith.constant 0 : i32
    return %c0_i32, %c0_i32_0 : i32, i32
  }
  func.func @transform_8(%arg0: i32) -> (i32, i32, i32) {
    %c0_i32 = arith.constant 0 : i32
    %c0_i32_0 = arith.constant 0 : i32
    %c0_i32_1 = arith.constant 0 : i32
    return %arg0, %c0_i32, %c0_i32_0 : i32, i32, i32
  }
}

</mosaic_0001>

<llo_original>
// kernel: byte_cnn_decoder_forward.4
$region0: #{byte_cnn_decoder_forward.4}
  #allocation0 [shape = 'u32[]', space=smem, size = 0x4, offset = 0x4, fixed_abs, tag = 'smem constant byte address 0x4 - core index']
  #allocation1 [shape = 'u32[144,128]{1,0:T(1,128)}', space=vmem, size = 0x12000, scoped, tag = 'internal scratch']
  %s0 = inlined_call_operand.vmem [shape: f32[2,128], index: 0, kind: input, shape index: {}]
  %s1 = inlined_call_operand.hbm [shape: bf16[2,2,128,128], index: 1, kind: input, shape index: {}]
  %s2 = inlined_call_operand.vmem [shape: f32[2,2,1,128], index: 2, kind: input, shape index: {}]
  %s3 = inlined_call_operand.vmem [shape: f32[2,128], index: 3, kind: output, shape index: {}]
  %s4 = sld [smem:[#allocation0]]
  $region26: #{byte_cnn_decoder_forward.4} parent=0
    _
  %s6 = ssub.s32 1, %s4
  %s7 = scalar_select 0, %s6, %s4
  $region1: #{byte_cnn_decoder_forward.4} parent=0
    #allocation2 [shape = 'u8[131072]{0}', space=vmem, size = 0x20000, scoped, tag = 'input window, operand 1, single buffered']
    #allocation3 [shape = 's32[1]{0}', space=sflag, size = 0x4, scoped, tag = 'scoped memory for byte_cnn_decoder_forward.4']
    %8 = vsyncpa [#allocation3], 0
    // Predicated region
    $region2: #{byte_cnn_decoder_forward.4} parent=1 // pred_check
      _
    $region3: #{byte_cnn_decoder_forward.4} parent=1 // pred_check_branch
      %10 = sbr.rel (0) target = $region5
    $region4: #{byte_cnn_decoder_forward.4} parent=1 // pred_region
      _
    $region5: #{byte_cnn_decoder_forward.4} parent=1 // pred_fallthru
      _
    // Predicated region
    $region6: #{byte_cnn_decoder_forward.4} parent=1 // pred_check
      _
    $region7: #{byte_cnn_decoder_forward.4} parent=1 // pred_check_branch
      %12 = sbr.rel (0) target = $region9
    $region8: #{byte_cnn_decoder_forward.4} parent=1 // pred_region
      %s14 = ssub.s32 4096, 4096
      %15 = vsyncadd [#allocation3], %s14
      %s16 = sshll.u32 [#allocation2], 4
      %s17 = int_to_ptr.vmem [resolvable:$true] %s16
      %22 = dma.hbm_to_vmem [thread:$0]  %s1, 4096, %s17, [#allocation3], 64, 64, 4
    $region9: #{byte_cnn_decoder_forward.4} parent=1 // pred_fallthru
      _
    // Predicated region
    $region10: #{byte_cnn_decoder_forward.4} parent=1 // pred_check
      _
    $region11: #{byte_cnn_decoder_forward.4} parent=1 // pred_check_branch
      %24 = sbr.rel (0) target = $region13
    $region12: #{byte_cnn_decoder_forward.4} parent=1 // pred_region
      _
    $region13: #{byte_cnn_decoder_forward.4} parent=1 // pred_fallthru
      _
    // Predicated region
    $region14: #{byte_cnn_decoder_forward.4} parent=1 // pred_check
      _
    $region15: #{byte_cnn_decoder_forward.4} parent=1 // pred_check_branch
      %26 = sbr.rel (0) target = $region17
    $region16: #{byte_cnn_decoder_forward.4} parent=1 // pred_region
      %27 = dma.done [#allocation3], 4096
    $region17: #{byte_cnn_decoder_forward.4} parent=1 // pred_fallthru
      _
    %v29 = vld [vmem:[%s0] sm:$0x3]
    %v30 = vpack.c.bf16 %v29, %v29
    %v31 = vld [vmem:[#allocation2] sm:$0xf]
    %v32 = vld [vmem:[#allocation2 + $0x4] sm:$0xf]
    %v33 = vld [vmem:[#allocation2 + $0x8] sm:$0xf]
    %v34 = vld [vmem:[#allocation2 + $0xc] sm:$0xf]
    %v35 = vld [vmem:[#allocation2 + $0x10] sm:$0xf]
    %v36 = vld [vmem:[#allocation2 + $0x14] sm:$0xf]
    %v37 = vld [vmem:[#allocation2 + $0x18] sm:$0xf]
    %v38 = vld [vmem:[#allocation2 + $0x1c] sm:$0xf]
    %v39 = vld [vmem:[#allocation2 + $0x20] sm:$0xf]
    %v40 = vld [vmem:[#allocation2 + $0x24] sm:$0xf]
    %v41 = vld [vmem:[#allocation2 + $0x28] sm:$0xf]
    %v42 = vld [vmem:[#allocation2 + $0x2c] sm:$0xf]
    %v43 = vld [vmem:[#allocation2 + $0x30] sm:$0xf]
    %v44 = vld [vmem:[#allocation2 + $0x34] sm:$0xf]
    %v45 = vld [vmem:[#allocation2 + $0x38] sm:$0xf]
    %v46 = vld [vmem:[#allocation2 + $0x3c] sm:$0xf]
    %v47 = vld [vmem:[%s2] sm:$0x1]
    %v49 = vlaneseq
    %v50 = vshrl.u32 %v49, 7
    %v51 = vsub.s32 0, %v50
    %v52 = vrot.slane %v47, %v51
    %v70 = vunpack.c.l.b16 %v31
    %v71 = vunpack.c.l.b16 %v32
    %v72 = vunpack.c.l.b16 %v33
    %v73 = vunpack.c.l.b16 %v34
    %v74 = vunpack.c.l.b16 %v35
    %v75 = vunpack.c.l.b16 %v36
    %v76 = vunpack.c.l.b16 %v37
    %v77 = vunpack.c.l.b16 %v38
    %v78 = vunpack.c.l.b16 %v39
    %v79 = vunpack.c.l.b16 %v40
    %v80 = vunpack.c.l.b16 %v41
    %v81 = vunpack.c.l.b16 %v42
    %v82 = vunpack.c.l.b16 %v43
    %v83 = vunpack.c.l.b16 %v44
    %v84 = vunpack.c.l.b16 %v45
    %v85 = vunpack.c.l.b16 %v46
    %v86 = vpack.c.b16 %v71, %v70
    %v87 = vpack.c.b16 %v73, %v72
    %v88 = vpack.c.b16 %v75, %v74
    %v89 = vpack.c.b16 %v77, %v76
    %v90 = vpack.c.b16 %v79, %v78
    %v91 = vpack.c.b16 %v81, %v80
    %v92 = vpack.c.b16 %v83, %v82
    %v93 = vpack.c.b16 %v85, %v84
    %102 = vmatprep.subr.bf16.mxu0 0
    %103 = vmatpush1.bf16.msra.mxu0 %v93
    %104 = vmatprep.subr.bf16.mxu0 0
    %105 = vmatpush1.bf16.msra.mxu0 %v92
    %106 = vmatprep.subr.bf16.mxu0 0
    %107 = vmatpush1.bf16.msra.mxu0 %v91
    %108 = vmatprep.subr.bf16.mxu0 0
    %109 = vmatpush1.bf16.msra.mxu0 %v90
    %110 = vmatprep.subr.bf16.mxu0 0
    %111 = vmatpush1.bf16.msra.mxu0 %v89
    %112 = vmatprep.subr.bf16.mxu0 0
    %113 = vmatpush1.bf16.msra.mxu0 %v88
    %114 = vmatprep.subr.bf16.mxu0 0
    %115 = vmatpush1.bf16.msra.mxu0 %v87
    %116 = vmatprep.subr.bf16.mxu0 0
    %117 = vmatpush1.bf16.msra.mxu0 %v86
    %118 = vmatprep.subr.bf16.mxu0 0
    %119 = vmatpush2.bf16.msra.mxu0 0
    %120 = vmatprep.subr.bf16.mxu0 0
    %121 = vmatpush2.bf16.msra.mxu0 0
    %122 = vmatprep.subr.bf16.mxu0 0
    %123 = vmatpush2.bf16.msra.mxu0 0
    %124 = vmatprep.subr.bf16.mxu0 0
    %125 = vmatpush2.bf16.msra.mxu0 0
    %126 = vmatprep.subr.bf16.mxu0 0
    %127 = vmatpush2.bf16.msra.mxu0 0
    %128 = vmatprep.subr.bf16.mxu0 0
    %129 = vmatpush2.bf16.msra.mxu0 0
    %130 = vmatprep.subr.bf16.mxu0 0
    %131 = vmatpush2.bf16.msra.mxu0 0
    %132 = vmatprep.subr.bf16.mxu0 0
    %133 = vmatpush2.bf16.msra.mxu0 0
    %134 = vmatprep.mubr.bf16.mxu0 0
    %135 = vmatmul.mubr.bf16.gmra.mxu0 %v30
    %v136 = vpop.f32.mrf.mxu0
    %v137 = vadd.f32 %v52, %v136
    %v138 = vpop.f32.mrf.mxu0
    %v139 = vpop.f32.mrf.mxu0
    %v140 = vpop.f32.mrf.mxu0
    %141 = vdwg.mxu0
    %v142 = vmax.f32 %v137, 0.0
    %v143 = vpack.c.bf16 %v142, %v142
    %s144 = scalar_lea.vmem [#allocation2], 64
    %v145 = vld [vmem:[%s144] sm:$0xf]
    %v146 = vld [vmem:[%s144 + $0x4] sm:$0xf]
    %v147 = vld [vmem:[%s144 + $0x8] sm:$0xf]
    %v148 = vld [vmem:[%s144 + $0xc] sm:$0xf]
    %v149 = vld [vmem:[%s144 + $0x10] sm:$0xf]
    %v150 = vld [vmem:[%s144 + $0x14] sm:$0xf]
    %v151 = vld [vmem:[%s144 + $0x18] sm:$0xf]
    %v152 = vld [vmem:[%s144 + $0x1c] sm:$0xf]
    %v153 = vld [vmem:[%s144 + $0x20] sm:$0xf]
    %v154 = vld [vmem:[%s144 + $0x24] sm:$0xf]
    %v155 = vld [vmem:[%s144 + $0x28] sm:$0xf]
    %v156 = vld [vmem:[%s144 + $0x2c] sm:$0xf]
    %v157 = vld [vmem:[%s144 + $0x30] sm:$0xf]
    %v158 = vld [vmem:[%s144 + $0x34] sm:$0xf]
    %v159 = vld [vmem:[%s144 + $0x38] sm:$0xf]
    %v160 = vld [vmem:[%s144 + $0x3c] sm:$0xf]
    %s161 = scalar_lea.vmem %s2, 1
    %v162 = vld [vmem:[%s161] sm:$0x1]
    %v164 = vlaneseq
    %v165 = vshrl.u32 %v164, 7
    %v166 = vsub.s32 0, %v165
    %v167 = vrot.slane %v162, %v166
    %v185 = vunpack.c.l.b16 %v145
    %v186 = vunpack.c.l.b16 %v146
    %v187 = vunpack.c.l.b16 %v147
    %v188 = vunpack.c.l.b16 %v148
    %v189 = vunpack.c.l.b16 %v149
    %v190 = vunpack.c.l.b16 %v150
    %v191 = vunpack.c.l.b16 %v151
    %v192 = vunpack.c.l.b16 %v152
    %v193 = vunpack.c.l.b16 %v153
    %v194 = vunpack.c.l.b16 %v154
    %v195 = vunpack.c.l.b16 %v155
    %v196 = vunpack.c.l.b16 %v156
    %v197 = vunpack.c.l.b16 %v157
    %v198 = vunpack.c.l.b16 %v158
    %v199 = vunpack.c.l.b16 %v159
    %v200 = vunpack.c.l.b16 %v160
    %v201 = vpack.c.b16 %v186, %v185
    %v202 = vpack.c.b16 %v188, %v187
    %v203 = vpack.c.b16 %v190, %v189
    %v204 = vpack.c.b16 %v192, %v191
    %v205 = vpack.c.b16 %v194, %v193
    %v206 = vpack.c.b16 %v196, %v195
    %v207 = vpack.c.b16 %v198, %v197
    %v208 = vpack.c.b16 %v200, %v199
    %217 = vmatprep.subr.bf16.mxu0 0
    %218 = vmatpush1.bf16.msra.mxu0 %v208
    %219 = vmatprep.subr.bf16.mxu0 0
    %220 = vmatpush1.bf16.msra.mxu0 %v207
    %221 = vmatprep.subr.bf16.mxu0 0
    %222 = vmatpush1.bf16.msra.mxu0 %v206
    %223 = vmatprep.subr.bf16.mxu0 0
    %224 = vmatpush1.bf16.msra.mxu0 %v205
    %225 = vmatprep.subr.bf16.mxu0 0
    %226 = vmatpush1.bf16.msra.mxu0 %v204
    %227 = vmatprep.subr.bf16.mxu0 0
    %228 = vmatpush1.bf16.msra.mxu0 %v203
    %229 = vmatprep.subr.bf16.mxu0 0
    %230 = vmatpush1.bf16.msra.mxu0 %v202
    %231 = vmatprep.subr.bf16.mxu0 0
    %232 = vmatpush1.bf16.msra.mxu0 %v201
    %233 = vmatprep.subr.bf16.mxu0 0
    %234 = vmatpush2.bf16.msra.mxu0 0
    %235 = vmatprep.subr.bf16.mxu0 0
    %236 = vmatpush2.bf16.msra.mxu0 0
    %237 = vmatprep.subr.bf16.mxu0 0
    %238 = vmatpush2.bf16.msra.mxu0 0
    %239 = vmatprep.subr.bf16.mxu0 0
    %240 = vmatpush2.bf16.msra.mxu0 0
    %241 = vmatprep.subr.bf16.mxu0 0
    %242 = vmatpush2.bf16.msra.mxu0 0
    %243 = vmatprep.subr.bf16.mxu0 0
    %244 = vmatpush2.bf16.msra.mxu0 0
    %245 = vmatprep.subr.bf16.mxu0 0
    %246 = vmatpush2.bf16.msra.mxu0 0
    %247 = vmatprep.subr.bf16.mxu0 0
    %248 = vmatpush2.bf16.msra.mxu0 0
    %249 = vmatprep.mubr.bf16.mxu0 0
    %250 = vmatmul.mubr.bf16.gmra.mxu0 %v143
    %v251 = vpop.f32.mrf.mxu0
    %v252 = vadd.f32 %v167, %v251
    %v253 = vpop.f32.mrf.mxu0
    %v254 = vpop.f32.mrf.mxu0
    %v255 = vpop.f32.mrf.mxu0
    %256 = vdwg.mxu0
    %v257 = vadd.f32 %v252, %v29
    %v258 = vmax.f32 %v257, 0.0
    %v259 = vpack.c.bf16 %v258, %v258
    %s260 = scalar_lea.vmem [#allocation2], 128
    %v261 = vld [vmem:[%s260] sm:$0xf]
    %v262 = vld [vmem:[%s260 + $0x4] sm:$0xf]
    %v263 = vld [vmem:[%s260 + $0x8] sm:$0xf]
    %v264 = vld [vmem:[%s260 + $0xc] sm:$0xf]
    %v265 = vld [vmem:[%s260 + $0x10] sm:$0xf]
    %v266 = vld [vmem:[%s260 + $0x14] sm:$0xf]
    %v267 = vld [vmem:[%s260 + $0x18] sm:$0xf]
    %v268 = vld [vmem:[%s260 + $0x1c] sm:$0xf]
    %v269 = vld [vmem:[%s260 + $0x20] sm:$0xf]
    %v270 = vld [vmem:[%s260 + $0x24] sm:$0xf]
    %v271 = vld [vmem:[%s260 + $0x28] sm:$0xf]
    %v272 = vld [vmem:[%s260 + $0x2c] sm:$0xf]
    %v273 = vld [vmem:[%s260 + $0x30] sm:$0xf]
    %v274 = vld [vmem:[%s260 + $0x34] sm:$0xf]
    %v275 = vld [vmem:[%s260 + $0x38] sm:$0xf]
    %v276 = vld [vmem:[%s260 + $0x3c] sm:$0xf]
    %s277 = scalar_lea.vmem %s2, 2
    %v278 = vld [vmem:[%s277] sm:$0x1]
    %v280 = vlaneseq
    %v281 = vshrl.u32 %v280, 7
    %v282 = vsub.s32 0, %v281
    %v283 = vrot.slane %v278, %v282
    %v301 = vunpack.c.l.b16 %v261
    %v302 = vunpack.c.l.b16 %v262
    %v303 = vunpack.c.l.b16 %v263
    %v304 = vunpack.c.l.b16 %v264
    %v305 = vunpack.c.l.b16 %v265
    %v306 = vunpack.c.l.b16 %v266
    %v307 = vunpack.c.l.b16 %v267
    %v308 = vunpack.c.l.b16 %v268
    %v309 = vunpack.c.l.b16 %v269
    %v310 = vunpack.c.l.b16 %v270
    %v311 = vunpack.c.l.b16 %v271
    %v312 = vunpack.c.l.b16 %v272
    %v313 = vunpack.c.l.b16 %v273
    %v314 = vunpack.c.l.b16 %v274
    %v315 = vunpack.c.l.b16 %v275
    %v316 = vunpack.c.l.b16 %v276
    %v317 = vpack.c.b16 %v302, %v301
    %v318 = vpack.c.b16 %v304, %v303
    %v319 = vpack.c.b16 %v306, %v305
    %v320 = vpack.c.b16 %v308, %v307
    %v321 = vpack.c.b16 %v310, %v309
    %v322 = vpack.c.b16 %v312, %v311
    %v323 = vpack.c.b16 %v314, %v313
    %v324 = vpack.c.b16 %v316, %v315
    %333 = vmatprep.subr.bf16.mxu0 0
    %334 = vmatpush1.bf16.msra.mxu0 %v324
    %335 = vmatprep.subr.bf16.mxu0 0
    %336 = vmatpush1.bf16.msra.mxu0 %v323
    %337 = vmatprep.subr.bf16.mxu0 0
    %338 = vmatpush1.bf16.msra.mxu0 %v322
    %339 = vmatprep.subr.bf16.mxu0 0
    %340 = vmatpush1.bf16.msra.mxu0 %v321
    %341 = vmatprep.subr.bf16.mxu0 0
    %342 = vmatpush1.bf16.msra.mxu0 %v320
    %343 = vmatprep.subr.bf16.mxu0 0
    %344 = vmatpush1.bf16.msra.mxu0 %v319
    %345 = vmatprep.subr.bf16.mxu0 0
    %346 = vmatpush1.bf16.msra.mxu0 %v318
    %347 = vmatprep.subr.bf16.mxu0 0
    %348 = vmatpush1.bf16.msra.mxu0 %v317
    %349 = vmatprep.subr.bf16.mxu0 0
    %350 = vmatpush2.bf16.msra.mxu0 0
    %351 = vmatprep.subr.bf16.mxu0 0
    %352 = vmatpush2.bf16.msra.mxu0 0
    %353 = vmatprep.subr.bf16.mxu0 0
    %354 = vmatpush2.bf16.msra.mxu0 0
    %355 = vmatprep.subr.bf16.mxu0 0
    %356 = vmatpush2.bf16.msra.mxu0 0
    %357 = vmatprep.subr.bf16.mxu0 0
    %358 = vmatpush2.bf16.msra.mxu0 0
    %359 = vmatprep.subr.bf16.mxu0 0
    %360 = vmatpush2.bf16.msra.mxu0 0
    %361 = vmatprep.subr.bf16.mxu0 0
    %362 = vmatpush2.bf16.msra.mxu0 0
    %363 = vmatprep.subr.bf16.mxu0 0
    %364 = vmatpush2.bf16.msra.mxu0 0
    %365 = vmatprep.mubr.bf16.mxu0 0
    %366 = vmatmul.mubr.bf16.gmra.mxu0 %v259
    %v367 = vpop.f32.mrf.mxu0
    %v368 = vadd.f32 %v283, %v367
    %v369 = vpop.f32.mrf.mxu0
    %v370 = vpop.f32.mrf.mxu0
    %v371 = vpop.f32.mrf.mxu0
    %372 = vdwg.mxu0
    %v373 = vmax.f32 %v368, 0.0
    %v374 = vpack.c.bf16 %v373, %v373
    %s375 = scalar_lea.vmem [#allocation2], 192
    %v376 = vld [vmem:[%s375] sm:$0xf]
    %v377 = vld [vmem:[%s375 + $0x4] sm:$0xf]
    %v378 = vld [vmem:[%s375 + $0x8] sm:$0xf]
    %v379 = vld [vmem:[%s375 + $0xc] sm:$0xf]
    %v380 = vld [vmem:[%s375 + $0x10] sm:$0xf]
    %v381 = vld [vmem:[%s375 + $0x14] sm:$0xf]
    %v382 = vld [vmem:[%s375 + $0x18] sm:$0xf]
    %v383 = vld [vmem:[%s375 + $0x1c] sm:$0xf]
    %v384 = vld [vmem:[%s375 + $0x20] sm:$0xf]
    %v385 = vld [vmem:[%s375 + $0x24] sm:$0xf]
    %v386 = vld [vmem:[%s375 + $0x28] sm:$0xf]
    %v387 = vld [vmem:[%s375 + $0x2c] sm:$0xf]
    %v388 = vld [vmem:[%s375 + $0x30] sm:$0xf]
    %v389 = vld [vmem:[%s375 + $0x34] sm:$0xf]
    %v390 = vld [vmem:[%s375 + $0x38] sm:$0xf]
    %v391 = vld [vmem:[%s375 + $0x3c] sm:$0xf]
    %s392 = scalar_lea.vmem %s2, 3
    %v393 = vld [vmem:[%s392] sm:$0x1]
    %v395 = vlaneseq
    %v396 = vshrl.u32 %v395, 7
    %v397 = vsub.s32 0, %v396
    %v398 = vrot.slane %v393, %v397
    %v416 = vunpack.c.l.b16 %v376
    %v417 = vunpack.c.l.b16 %v377
    %v418 = vunpack.c.l.b16 %v378
    %v419 = vunpack.c.l.b16 %v379
    %v420 = vunpack.c.l.b16 %v380
    %v421 = vunpack.c.l.b16 %v381
    %v422 = vunpack.c.l.b16 %v382
    %v423 = vunpack.c.l.b16 %v383
    %v424 = vunpack.c.l.b16 %v384
    %v425 = vunpack.c.l.b16 %v385
    %v426 = vunpack.c.l.b16 %v386
    %v427 = vunpack.c.l.b16 %v387
    %v428 = vunpack.c.l.b16 %v388
    %v429 = vunpack.c.l.b16 %v389
    %v430 = vunpack.c.l.b16 %v390
    %v431 = vunpack.c.l.b16 %v391
    %v432 = vpack.c.b16 %v417, %v416
    %v433 = vpack.c.b16 %v419, %v418
    %v434 = vpack.c.b16 %v421, %v420
    %v435 = vpack.c.b16 %v423, %v422
    %v436 = vpack.c.b16 %v425, %v424
    %v437 = vpack.c.b16 %v427, %v426
    %v438 = vpack.c.b16 %v429, %v428
    %v439 = vpack.c.b16 %v431, %v430
    %448 = vmatprep.subr.bf16.mxu0 0
    %449 = vmatpush1.bf16.msra.mxu0 %v439
    %450 = vmatprep.subr.bf16.mxu0 0
    %451 = vmatpush1.bf16.msra.mxu0 %v438
    %452 = vmatprep.subr.bf16.mxu0 0
    %453 = vmatpush1.bf16.msra.mxu0 %v437
    %454 = vmatprep.subr.bf16.mxu0 0
    %455 = vmatpush1.bf16.msra.mxu0 %v436
    %456 = vmatprep.subr.bf16.mxu0 0
    %457 = vmatpush1.bf16.msra.mxu0 %v435
    %458 = vmatprep.subr.bf16.mxu0 0
    %459 = vmatpush1.bf16.msra.mxu0 %v434
    %460 = vmatprep.subr.bf16.mxu0 0
    %461 = vmatpush1.bf16.msra.mxu0 %v433
    %462 = vmatprep.subr.bf16.mxu0 0
    %463 = vmatpush1.bf16.msra.mxu0 %v432
    %464 = vmatprep.subr.bf16.mxu0 0
    %465 = vmatpush2.bf16.msra.mxu0 0
    %466 = vmatprep.subr.bf16.mxu0 0
    %467 = vmatpush2.bf16.msra.mxu0 0
    %468 = vmatprep.subr.bf16.mxu0 0
    %469 = vmatpush2.bf16.msra.mxu0 0
    %470 = vmatprep.subr.bf16.mxu0 0
    %471 = vmatpush2.bf16.msra.mxu0 0
    %472 = vmatprep.subr.bf16.mxu0 0
    %473 = vmatpush2.bf16.msra.mxu0 0
    %474 = vmatprep.subr.bf16.mxu0 0
    %475 = vmatpush2.bf16.msra.mxu0 0
    %476 = vmatprep.subr.bf16.mxu0 0
    %477 = vmatpush2.bf16.msra.mxu0 0
    %478 = vmatprep.subr.bf16.mxu0 0
    %479 = vmatpush2.bf16.msra.mxu0 0
    %480 = vmatprep.mubr.bf16.mxu0 0
    %481 = vmatmul.mubr.bf16.gmra.mxu0 %v374
    %v482 = vpop.f32.mrf.mxu0
    %v483 = vadd.f32 %v398, %v482
    %v484 = vpop.f32.mrf.mxu0
    %v485 = vpop.f32.mrf.mxu0
    %v486 = vpop.f32.mrf.mxu0
    %487 = vdwg.mxu0
    %v488 = vadd.f32 %v483, %v258
    %v489 = vmax.f32 %v488, 0.0
    %490 = vst [vmem:[%s3] sm:$0x3] %v489
    // Predicated region
    $region18: #{byte_cnn_decoder_forward.4} parent=1 // pred_check
      _
    $region19: #{byte_cnn_decoder_forward.4} parent=1 // pred_check_branch
      %492 = sbr.rel (0) target = $region21
    $region20: #{byte_cnn_decoder_forward.4} parent=1 // pred_region
      _
    $region21: #{byte_cnn_decoder_forward.4} parent=1 // pred_fallthru
      _
    // Predicated region
    $region22: #{byte_cnn_decoder_forward.4} parent=1 // pred_check
      _
    $region23: #{byte_cnn_decoder_forward.4} parent=1 // pred_check_branch
      %494 = sbr.rel (0) target = $region25
    $region24: #{byte_cnn_decoder_forward.4} parent=1 // pred_region
      _
    $region25: #{byte_cnn_decoder_forward.4} parent=1 // pred_fallthru
      _
    %495 = vsyncpa [#allocation3], 1

// kernel: byte_cnn_decoder_forward.5
$region0: #{byte_cnn_decoder_forward.5}
  #allocation0 [shape = 'u32[]', space=smem, size = 0x4, offset = 0x4, fixed_abs, tag = 'smem constant byte address 0x4 - core index']
  #allocation1 [shape = 'u32[144,128]{1,0:T(1,128)}', space=vmem, size = 0x12000, scoped, tag = 'internal scratch']
  #allocation2 [shape = 'f32[6,32]{1,0:T(8,128)}', space=vmem, size = 0x1000, scoped, tag = 'scratch operand']
  #allocation3 [shape = 'f32[4,96]{1,0:T(4,128)}', space=vmem, size = 0x800, scoped, tag = 'scratch operand']
  %s0 = inlined_call_operand.vmem [shape: f32[2,4,32], index: 0, kind: input, shape index: {}]
  %s1 = inlined_call_operand.vmem [shape: bf16[96,64], index: 1, kind: input, shape index: {}]
  %s2 = inlined_call_operand.vmem [shape: f32[2,4,64], index: 2, kind: output, shape index: {}]
  %s3 = sld [smem:[#allocation0]]
  $region41: #{byte_cnn_decoder_forward.5} parent=0
    _
  %s5 = ssub.s32 1, %s3
  %s6 = scalar_select 0, %s5, %s3
  loop: start=0, step=1, limit=4
  $region2: #{byte_cnn_decoder_forward.5} parent=0 // loop_pre_header
    _
  $region3: #{byte_cnn_decoder_forward.5} parent=0 // loop_header
    %s8 = sphi 0, %s12
    %p9 = scmp.ge.s32.totalorder %s8, 4
    %s18 = sphi 0, %s20
    %s21 = sphi 0, %s18
    %s22 = sphi 0, %s21
    %s38 = sphi 0, %s22
    %s42 = sphi 0, %s42
    %s44 = sphi 0, %s42
    %s45 = sphi 0, %s44
    %s59 = sphi 0, %s45
    %s65 = sphi 0, %s67
    %s68 = sphi 0, %s65
    %s69 = sphi 0, %s68
    %s85 = sphi 0, %s69
  $region4: #{byte_cnn_decoder_forward.5} parent=0 // loop_header_branch
    %11 = sbr.rel (%p9) target = $region8
  $region5: #{byte_cnn_decoder_forward.5} parent=0 // loop_body
    %s13 = ssub.s32 %s8, 1
    %s14 = ssub.s32 %s8, 2
    %s15 = sadd.s32 %s8, 1
    %s16 = ssub.s32 %s8, %s15
    %p17 = scmp.eq.s32.totalorder %s16, 0
    %s19 = sadd.s32 %s18, 1
    %s20 = scalar_select %p17, %s18, %s19
    %p23 = pneg %p17
    %p24 = scmp.eq.s32.totalorder %s8, 1
    %p25 = por %p23, %p24
    %p26 = scmp.ne.s32.totalorder %s18, %s21
    %p27 = scmp.eq.s32.totalorder %s8, 0
    %p28 = por %p26, %p27
    %p29 = scmp.ne.s32.totalorder %s18, %s21
    %p30 = scmp.eq.s32.totalorder %s13, 1
    %p31 = por %p29, %p30
    %p32 = scmp.ne.s32.totalorder %s21, %s22
    %p33 = scmp.eq.s32.totalorder %s13, 0
    %p34 = por %p32, %p33
    %p35 = scmp.ne.s32.totalorder %s21, %s22
    %p36 = scmp.eq.s32.totalorder %s14, 1
    %p37 = por %p35, %p36
    %p39 = scmp.ne.s32.totalorder %s22, %s38
    %p40 = scmp.eq.s32.totalorder %s14, 0
    %p41 = por %p39, %p40
    %s43 = sadd.s32 %s42, 1
    %p46 = scmp.eq.s32.totalorder %s8, 1
    %p47 = scmp.ne.s32.totalorder %s42, %s44
    %p48 = scmp.eq.s32.totalorder %s8, 0
    %p49 = por %p47, %p48
    %p50 = scmp.ne.s32.totalorder %s42, %s44
    %p51 = scmp.eq.s32.totalorder %s13, 1
    %p52 = por %p50, %p51
    %p53 = scmp.ne.s32.totalorder %s44, %s45
    %p54 = scmp.eq.s32.totalorder %s13, 0
    %p55 = por %p53, %p54
    %p56 = scmp.ne.s32.totalorder %s44, %s45
    %p57 = scmp.eq.s32.totalorder %s14, 1
    %p58 = por %p56, %p57
    %p60 = scmp.ne.s32.totalorder %s45, %s59
    %p61 = scmp.eq.s32.totalorder %s14, 0
    %p62 = por %p60, %p61
    %s63 = ssub.s32 %s8, %s15
    %p64 = scmp.eq.s32.totalorder %s63, 0
    %s66 = sadd.s32 %s65, 1
    %s67 = scalar_select %p64, %s65, %s66
    %p70 = pneg %p64
    %p71 = scmp.eq.s32.totalorder %s8, 1
    %p72 = por %p70, %p71
    %p73 = scmp.ne.s32.totalorder %s65, %s68
    %p74 = scmp.eq.s32.totalorder %s8, 0
    %p75 = por %p73, %p74
    %p76 = scmp.ne.s32.totalorder %s65, %s68
    %p77 = scmp.eq.s32.totalorder %s13, 1
    %p78 = por %p76, %p77
    %p79 = scmp.ne.s32.totalorder %s68, %s69
    %p80 = scmp.eq.s32.totalorder %s13, 0
    %p81 = por %p79, %p80
    %p82 = scmp.ne.s32.totalorder %s68, %s69
    %p83 = scmp.eq.s32.totalorder %s14, 1
    %p84 = por %p82, %p83
    %p86 = scmp.ne.s32.totalorder %s69, %s85
    %p87 = scmp.eq.s32.totalorder %s14, 0
    %p88 = por %p86, %p87
    %p89 = scmp.le.s32.totalorder 1, %s8
    %p90 = scmp.lt.s32.totalorder %s8, 3
    %p91 = pnand %p89, %p90
    %p92 = pneg %p91
    // Predicated region
    $region9: #{byte_cnn_decoder_forward.5} parent=5 // pred_check
      _
    $region10: #{byte_cnn_decoder_forward.5} parent=5 // pred_check_branch
      %94 = sbr.rel (%p91) target = $region12
    $region11: #{byte_cnn_decoder_forward.5} parent=5 // pred_region
      %s95 = ssub.s32 %s8, 1
      // Predicated region
      $region13: #{byte_cnn_decoder_forward.5} parent=11 // pred_check
        %p96 = pneg %p55
      $region14: #{byte_cnn_decoder_forward.5} parent=11 // pred_check_branch
        %98 = sbr.rel (%p96) target = $region16
      $region15: #{byte_cnn_decoder_forward.5} parent=11 // pred_region
        _
      $region16: #{byte_cnn_decoder_forward.5} parent=11 // pred_fallthru
        _
    $region12: #{byte_cnn_decoder_forward.5} parent=5 // pred_fallthru
      _
    %p99 = scmp.lt.s32.totalorder %s8, 2
    // Predicated region
    $region17: #{byte_cnn_decoder_forward.5} parent=5 // pred_check
      %p100 = pneg %p99
    $region18: #{byte_cnn_decoder_forward.5} parent=5 // pred_check_branch
      %102 = sbr.rel (%p100) target = $region20
    $region19: #{byte_cnn_decoder_forward.5} parent=5 // pred_region
      // Predicated region
      $region21: #{byte_cnn_decoder_forward.5} parent=19 // pred_check
        %p103 = pneg %p28
      $region22: #{byte_cnn_decoder_forward.5} parent=19 // pred_check_branch
        %105 = sbr.rel (%p103) target = $region24
      $region23: #{byte_cnn_decoder_forward.5} parent=19 // pred_region
        %p106 = scmp.lt.s32.totalorder %s8, 1
        %s107 = scalar_select %p106, %s8, 1
        %s108 = smul.addr %s107, 4
        %s109 = scalar_lea.vmem %s0, %s108
      $region24: #{byte_cnn_decoder_forward.5} parent=19 // pred_fallthru
        _
    $region20: #{byte_cnn_decoder_forward.5} parent=5 // pred_fallthru
      _
    %p110 = scmp.le.s32.totalorder 1, %s8
    %p111 = scmp.lt.s32.totalorder %s8, 3
    %p112 = pnand %p110, %p111
    %p113 = pneg %p112
    // Predicated region
    $region25: #{byte_cnn_decoder_forward.5} parent=5 // pred_check
      _
    $region26: #{byte_cnn_decoder_forward.5} parent=5 // pred_check_branch
      %115 = sbr.rel (%p112) target = $region28
    $region27: #{byte_cnn_decoder_forward.5} parent=5 // pred_region
      %s116 = ssub.s32 %s8, 1
      %p117 = scmp.lt.s32.totalorder %s13, 1
      %s118 = scalar_select %p117, %s13, 1
      %s119 = smul.addr %s118, 4
      %s120 = scalar_lea.vmem %s0, %s119
      %p121 = pneg %p34
      %p122 = pneg %p31
      %p123 = pneg %p55
      %p124 = pneg %p52
      %p125 = pneg %p81
      %p126 = pneg %p78
      %p127 = scmp.lt.s32.totalorder %s13, 1
      %s128 = scalar_select %p127, %s13, 1
      %s129 = smul.addr %s128, 4
      %s130 = scalar_lea.vmem %s2, %s129
      %p131 = scmp.lt.s32.totalorder %s13, 1
      %s132 = scalar_select %p131, %s13, 1
      %s133 = smul.addr %s132, 4
      %s134 = scalar_lea.vmem %s0, %s133
      %p135 = scmp.lt.s32.totalorder %s13, 1
      %s136 = scalar_select %p135, %s13, 1
      %s137 = smul.addr %s136, 4
      %s138 = scalar_lea.vmem %s2, %s137
      %vm140 = vcmask 259072
      %141 = vst.msk [vmem:[#allocation2] sm:$0x3f] %vm140, 0.0
      %v142 = vld [vmem:[%s134] sm:$0xf]
      %vm143 = vcmask 257024
      %144 = vst.msk [vmem:[#allocation2 + $0x1] sm:$0xf] %vm143, %v142
      %v145 = vld [vmem:[#allocation2] sm:$0xf]
      %146 = vst.msk [vmem:[#allocation3] sm:$0xf] %vm143, %v145
      %148 = vrot.lane.b32.xlu0 %v142, 32
      %v149 = vpop.permute.xlu0 %148
      %vm151 = vcmask 519424
      %152 = vst.msk [vmem:[#allocation3] sm:$0xf] %vm151, %v149
      %v153 = vld [vmem:[#allocation2 + $0x2] sm:$0xf]
      %155 = vrot.lane.b32.xlu0 %v153, 64
      %v156 = vpop.permute.xlu0 %155
      %vm158 = vcmask 781824
      %159 = vst.msk [vmem:[#allocation3] sm:$0xf] %vm158, %v156
      %v160 = vld [vmem:[#allocation3] sm:$0xf]
      %v161 = vpack.c.bf16 %v160, %v160
      %v162 = vld [vmem:[%s1] sm:$0xf]
      %v163 = vld [vmem:[%s1 + $0x4] sm:$0xf]
      %v164 = vld [vmem:[%s1 + $0x8] sm:$0xf]
      %v165 = vld [vmem:[%s1 + $0xc] sm:$0xf]
      %v166 = vld [vmem:[%s1 + $0x10] sm:$0xf]
      %v167 = vld [vmem:[%s1 + $0x14] sm:$0xf]
      %v168 = vld [vmem:[%s1 + $0x18] sm:$0xf]
      %v169 = vld [vmem:[%s1 + $0x1c] sm:$0xf]
      %v170 = vld [vmem:[%s1 + $0x20] sm:$0xf]
      %v171 = vld [vmem:[%s1 + $0x24] sm:$0xf]
      %v172 = vld [vmem:[%s1 + $0x28] sm:$0xf]
      %v173 = vld [vmem:[%s1 + $0x2c] sm:$0xf]
      %v186 = vunpack.c.l.b16 %v162
      %v187 = vunpack.c.l.b16 %v163
      %v188 = vunpack.c.l.b16 %v164
      %v189 = vunpack.c.l.b16 %v165
      %v190 = vunpack.c.l.b16 %v166
      %v191 = vunpack.c.l.b16 %v167
      %v192 = vunpack.c.l.b16 %v168
      %v193 = vunpack.c.l.b16 %v169
      %v194 = vunpack.c.l.b16 %v170
      %v195 = vunpack.c.l.b16 %v171
      %v196 = vunpack.c.l.b16 %v172
      %v197 = vunpack.c.l.b16 %v173
      %v198 = vpack.c.b16 %v187, %v186
      %v199 = vpack.c.b16 %v189, %v188
      %v200 = vpack.c.b16 %v191, %v190
      %v201 = vpack.c.b16 %v193, %v192
      %v202 = vpack.c.b16 %v195, %v194
      %v203 = vpack.c.b16 %v197, %v196
      %vm210 = vcmask 785408
      %v212 = vsel %vm210, %v161, 0
      %214 = vmatprep.subr.bf16.mxu0 0
      %215 = vmatpush1.bf16.msra.mxu0 0
      %216 = vmatprep.subr.bf16.mxu0 0
      %217 = vmatpush1.bf16.msra.mxu0 0
      %218 = vmatprep.subr.bf16.mxu0 0
      %219 = vmatpush1.bf16.msra.mxu0 %v203
      %220 = vmatprep.subr.bf16.mxu0 0
      %221 = vmatpush1.bf16.msra.mxu0 %v202
      %222 = vmatprep.subr.bf16.mxu0 0
      %223 = vmatpush1.bf16.msra.mxu0 %v201
      %224 = vmatprep.subr.bf16.mxu0 0
      %225 = vmatpush1.bf16.msra.mxu0 %v200
      %226 = vmatprep.subr.bf16.mxu0 0
      %227 = vmatpush1.bf16.msra.mxu0 %v199
      %228 = vmatprep.subr.bf16.mxu0 0
      %229 = vmatpush1.bf16.msra.mxu0 %v198
      %230 = vmatprep.subr.bf16.mxu0 0
      %231 = vmatpush2.bf16.msra.mxu0 0
      %232 = vmatprep.subr.bf16.mxu0 0
      %233 = vmatpush2.bf16.msra.mxu0 0
      %234 = vmatprep.subr.bf16.mxu0 0
      %235 = vmatpush2.bf16.msra.mxu0 0
      %236 = vmatprep.subr.bf16.mxu0 0
      %237 = vmatpush2.bf16.msra.mxu0 0
      %238 = vmatprep.subr.bf16.mxu0 0
      %239 = vmatpush2.bf16.msra.mxu0 0
      %240 = vmatprep.subr.bf16.mxu0 0
      %241 = vmatpush2.bf16.msra.mxu0 0
      %242 = vmatprep.subr.bf16.mxu0 0
      %243 = vmatpush2.bf16.msra.mxu0 0
      %244 = vmatprep.subr.bf16.mxu0 0
      %245 = vmatpush2.bf16.msra.mxu0 0
      %246 = vmatprep.mubr.bf16.mxu0 0
      %247 = vmatmul.mubr.bf16.gmra.mxu0 %v212
      %v248 = vpop.f32.mrf.mxu0
      %v249 = vadd.f32 0.0, %v248
      %v250 = vpop.f32.mrf.mxu0
      %v251 = vpop.f32.mrf.mxu0
      %v252 = vpop.f32.mrf.mxu0
      %253 = vdwg.mxu0
      %v254 = vmax.f32 %v249, 0.0
      %vm255 = vcmask 519168
      %256 = vst.msk [vmem:[%s138] sm:$0xf] %vm255, %v254
      %p257 = scmp.lt.s32.totalorder %s13, 1
      %s258 = scalar_select %p257, %s13, 1
      %s259 = smul.addr %s258, 4
      %s260 = scalar_lea.vmem %s2, %s259
      // Predicated region
      $region29: #{byte_cnn_decoder_forward.5} parent=27 // pred_check
        %p261 = pneg %p78
      $region30: #{byte_cnn_decoder_forward.5} parent=27 // pred_check_branch
        %263 = sbr.rel (%p261) target = $region32
      $region31: #{byte_cnn_decoder_forward.5} parent=27 // pred_region
        _
      $region32: #{byte_cnn_decoder_forward.5} parent=27 // pred_fallthru
        _
    $region28: #{byte_cnn_decoder_forward.5} parent=5 // pred_fallthru
      _
    %p264 = scmp.le.s32.totalorder 2, %s8
    // Predicated region
    $region33: #{byte_cnn_decoder_forward.5} parent=5 // pred_check
      %p265 = pneg %p264
    $region34: #{byte_cnn_decoder_forward.5} parent=5 // pred_check_branch
      %267 = sbr.rel (%p265) target = $region36
    $region35: #{byte_cnn_decoder_forward.5} parent=5 // pred_region
      %s268 = ssub.s32 %s8, 2
      // Predicated region
      $region37: #{byte_cnn_decoder_forward.5} parent=35 // pred_check
        %p269 = pneg %p84
      $region38: #{byte_cnn_decoder_forward.5} parent=35 // pred_check_branch
        %271 = sbr.rel (%p269) target = $region40
      $region39: #{byte_cnn_decoder_forward.5} parent=35 // pred_region
        %p272 = scmp.lt.s32.totalorder %s14, 1
        %s273 = scalar_select %p272, %s14, 1
        %s274 = smul.addr %s273, 4
        %s275 = scalar_lea.vmem %s2, %s274
      $region40: #{byte_cnn_decoder_forward.5} parent=35 // pred_fallthru
        _
    $region36: #{byte_cnn_decoder_forward.5} parent=5 // pred_fallthru
      _
  $region6: #{byte_cnn_decoder_forward.5} parent=0 // loop_footer
    %s12 = sadd.s32 1, %s8
  $region7: #{byte_cnn_decoder_forward.5} parent=0 // loop_footer_branch
    %7 = sbr.rel target = $region3
  $region8: #{byte_cnn_decoder_forward.5} parent=0 // loop_exit
    _

// kernel: byte_cnn_decoder_forward.6
$region0: #{byte_cnn_decoder_forward.6}
  #allocation0 [shape = 'u32[]', space=smem, size = 0x4, offset = 0x4, fixed_abs, tag = 'smem constant byte address 0x4 - core index']
  #allocation1 [shape = 'u32[144,128]{1,0:T(1,128)}', space=vmem, size = 0x12000, scoped, tag = 'internal scratch']
  #allocation2 [shape = 'f32[10,32]{1,0:T(8,128)}', space=vmem, size = 0x2000, scoped, tag = 'scratch operand']
  #allocation3 [shape = 'f32[8,96]{1,0:T(8,128)}', space=vmem, size = 0x1000, scoped, tag = 'scratch operand']
  %s0 = inlined_call_operand.vmem [shape: f32[2,8,32], index: 0, kind: input, shape index: {}]
  %s1 = inlined_call_operand.vmem [shape: bf16[96,32], index: 1, kind: input, shape index: {}]
  %s2 = inlined_call_operand.vmem [shape: bf16[96,32], index: 2, kind: input, shape index: {}]
  %s3 = inlined_call_operand.vmem [shape: bf16[96,32], index: 3, kind: input, shape index: {}]
  %s4 = inlined_call_operand.vmem [shape: bf16[96,64], index: 4, kind: input, shape index: {}]
  %s5 = inlined_call_operand.vmem [shape: f32[2,8,64], index: 5, kind: output, shape index: {}]
  %s6 = sld [smem:[#allocation0]]
  $region53: #{byte_cnn_decoder_forward.6} parent=0
    _
  %s8 = ssub.s32 1, %s6
  %s9 = scalar_select 0, %s8, %s6
  loop: start=0, step=1, limit=4
  $region2: #{byte_cnn_decoder_forward.6} parent=0 // loop_pre_header
    _
  $region3: #{byte_cnn_decoder_forward.6} parent=0 // loop_header
    %s11 = sphi 0, %s15
    %p12 = scmp.ge.s32.totalorder %s11, 4
    %s21 = sphi 0, %s23
    %s24 = sphi 0, %s21
    %s25 = sphi 0, %s24
    %s41 = sphi 0, %s25
    %s45 = sphi 0, %s45
    %s47 = sphi 0, %s45
    %s48 = sphi 0, %s47
    %s62 = sphi 0, %s48
    %s66 = sphi 0, %s66
    %s68 = sphi 0, %s66
    %s69 = sphi 0, %s68
    %s83 = sphi 0, %s69
    %s87 = sphi 0, %s87
    %s89 = sphi 0, %s87
    %s90 = sphi 0, %s89
    %s104 = sphi 0, %s90
    %s108 = sphi 0, %s108
    %s110 = sphi 0, %s108
    %s111 = sphi 0, %s110
    %s125 = sphi 0, %s111
    %s131 = sphi 0, %s133
    %s134 = sphi 0, %s131
    %s135 = sphi 0, %s134
    %s151 = sphi 0, %s135
  $region4: #{byte_cnn_decoder_forward.6} parent=0 // loop_header_branch
    %14 = sbr.rel (%p12) target = $region8
  $region5: #{byte_cnn_decoder_forward.6} parent=0 // loop_body
    %s16 = ssub.s32 %s11, 1
    %s17 = ssub.s32 %s11, 2
    %s18 = sadd.s32 %s11, 1
    %s19 = ssub.s32 %s11, %s18
    %p20 = scmp.eq.s32.totalorder %s19, 0
    %s22 = sadd.s32 %s21, 1
    %s23 = scalar_select %p20, %s21, %s22
    %p26 = pneg %p20
    %p27 = scmp.eq.s32.totalorder %s11, 1
    %p28 = por %p26, %p27
    %p29 = scmp.ne.s32.totalorder %s21, %s24
    %p30 = scmp.eq.s32.totalorder %s11, 0
    %p31 = por %p29, %p30
    %p32 = scmp.ne.s32.totalorder %s21, %s24
    %p33 = scmp.eq.s32.totalorder %s16, 1
    %p34 = por %p32, %p33
    %p35 = scmp.ne.s32.totalorder %s24, %s25
    %p36 = scmp.eq.s32.totalorder %s16, 0
    %p37 = por %p35, %p36
    %p38 = scmp.ne.s32.totalorder %s24, %s25
    %p39 = scmp.eq.s32.totalorder %s17, 1
    %p40 = por %p38, %p39
    %p42 = scmp.ne.s32.totalorder %s25, %s41
    %p43 = scmp.eq.s32.totalorder %s17, 0
    %p44 = por %p42, %p43
    %s46 = sadd.s32 %s45, 1
    %p49 = scmp.eq.s32.totalorder %s11, 1
    %p50 = scmp.ne.s32.totalorder %s45, %s47
    %p51 = scmp.eq.s32.totalorder %s11, 0
    %p52 = por %p50, %p51
    %p53 = scmp.ne.s32.totalorder %s45, %s47
    %p54 = scmp.eq.s32.totalorder %s16, 1
    %p55 = por %p53, %p54
    %p56 = scmp.ne.s32.totalorder %s47, %s48
    %p57 = scmp.eq.s32.totalorder %s16, 0
    %p58 = por %p56, %p57
    %p59 = scmp.ne.s32.totalorder %s47, %s48
    %p60 = scmp.eq.s32.totalorder %s17, 1
    %p61 = por %p59, %p60
    %p63 = scmp.ne.s32.totalorder %s48, %s62
    %p64 = scmp.eq.s32.totalorder %s17, 0
    %p65 = por %p63, %p64
    %s67 = sadd.s32 %s66, 1
    %p70 = scmp.eq.s32.totalorder %s11, 1
    %p71 = scmp.ne.s32.totalorder %s66, %s68
    %p72 = scmp.eq.s32.totalorder %s11, 0
    %p73 = por %p71, %p72
    %p74 = scmp.ne.s32.totalorder %s66, %s68
    %p75 = scmp.eq.s32.totalorder %s16, 1
    %p76 = por %p74, %p75
    %p77 = scmp.ne.s32.totalorder %s68, %s69
    %p78 = scmp.eq.s32.totalorder %s16, 0
    %p79 = por %p77, %p78
    %p80 = scmp.ne.s32.totalorder %s68, %s69
    %p81 = scmp.eq.s32.totalorder %s17, 1
    %p82 = por %p80, %p81
    %p84 = scmp.ne.s32.totalorder %s69, %s83
    %p85 = scmp.eq.s32.totalorder %s17, 0
    %p86 = por %p84, %p85
    %s88 = sadd.s32 %s87, 1
    %p91 = scmp.eq.s32.totalorder %s11, 1
    %p92 = scmp.ne.s32.totalorder %s87, %s89
    %p93 = scmp.eq.s32.totalorder %s11, 0
    %p94 = por %p92, %p93
    %p95 = scmp.ne.s32.totalorder %s87, %s89
    %p96 = scmp.eq.s32.totalorder %s16, 1
    %p97 = por %p95, %p96
    %p98 = scmp.ne.s32.totalorder %s89, %s90
    %p99 = scmp.eq.s32.totalorder %s16, 0
    %p100 = por %p98, %p99
    %p101 = scmp.ne.s32.totalorder %s89, %s90
    %p102 = scmp.eq.s32.totalorder %s17, 1
    %p103 = por %p101, %p102
    %p105 = scmp.ne.s32.totalorder %s90, %s104
    %p106 = scmp.eq.s32.totalorder %s17, 0
    %p107 = por %p105, %p106
    %s109 = sadd.s32 %s108, 1
    %p112 = scmp.eq.s32.totalorder %s11, 1
    %p113 = scmp.ne.s32.totalorder %s108, %s110
    %p114 = scmp.eq.s32.totalorder %s11, 0
    %p115 = por %p113, %p114
    %p116 = scmp.ne.s32.totalorder %s108, %s110
    %p117 = scmp.eq.s32.totalorder %s16, 1
    %p118 = por %p116, %p117
    %p119 = scmp.ne.s32.totalorder %s110, %s111
    %p120 = scmp.eq.s32.totalorder %s16, 0
    %p121 = por %p119, %p120
    %p122 = scmp.ne.s32.totalorder %s110, %s111
    %p123 = scmp.eq.s32.totalorder %s17, 1
    %p124 = por %p122, %p123
    %p126 = scmp.ne.s32.totalorder %s111, %s125
    %p127 = scmp.eq.s32.totalorder %s17, 0
    %p128 = por %p126, %p127
    %s129 = ssub.s32 %s11, %s18
    %p130 = scmp.eq.s32.totalorder %s129, 0
    %s132 = sadd.s32 %s131, 1
    %s133 = scalar_select %p130, %s131, %s132
    %p136 = pneg %p130
    %p137 = scmp.eq.s32.totalorder %s11, 1
    %p138 = por %p136, %p137
    %p139 = scmp.ne.s32.totalorder %s131, %s134
    %p140 = scmp.eq.s32.totalorder %s11, 0
    %p141 = por %p139, %p140
    %p142 = scmp.ne.s32.totalorder %s131, %s134
    %p143 = scmp.eq.s32.totalorder %s16, 1
    %p144 = por %p142, %p143
    %p145 = scmp.ne.s32.totalorder %s134, %s135
    %p146 = scmp.eq.s32.totalorder %s16, 0
    %p147 = por %p145, %p146
    %p148 = scmp.ne.s32.totalorder %s134, %s135
    %p149 = scmp.eq.s32.totalorder %s17, 1
    %p150 = por %p148, %p149
    %p152 = scmp.ne.s32.totalorder %s135, %s151
    %p153 = scmp.eq.s32.totalorder %s17, 0
    %p154 = por %p152, %p153
    %p155 = scmp.le.s32.totalorder 1, %s11
    %p156 = scmp.lt.s32.totalorder %s11, 3
    %p157 = pnand %p155, %p156
    %p158 = pneg %p157
    // Predicated region
    $region9: #{byte_cnn_decoder_forward.6} parent=5 // pred_check
      _
    $region10: #{byte_cnn_decoder_forward.6} parent=5 // pred_check_branch
      %160 = sbr.rel (%p157) target = $region12
    $region11: #{byte_cnn_decoder_forward.6} parent=5 // pred_region
      %s161 = ssub.s32 %s11, 1
      // Predicated region
      $region13: #{byte_cnn_decoder_forward.6} parent=11 // pred_check
        %p162 = pneg %p58
      $region14: #{byte_cnn_decoder_forward.6} parent=11 // pred_check_branch
        %164 = sbr.rel (%p162) target = $region16
      $region15: #{byte_cnn_decoder_forward.6} parent=11 // pred_region
        _
      $region16: #{byte_cnn_decoder_forward.6} parent=11 // pred_fallthru
        _
      // Predicated region
      $region17: #{byte_cnn_decoder_forward.6} parent=11 // pred_check
        %p165 = pneg %p79
      $region18: #{byte_cnn_decoder_forward.6} parent=11 // pred_check_branch
        %167 = sbr.rel (%p165) target = $region20
      $region19: #{byte_cnn_decoder_forward.6} parent=11 // pred_region
        _
      $region20: #{byte_cnn_decoder_forward.6} parent=11 // pred_fallthru
        _
      // Predicated region
      $region21: #{byte_cnn_decoder_forward.6} parent=11 // pred_check
        %p168 = pneg %p100
      $region22: #{byte_cnn_decoder_forward.6} parent=11 // pred_check_branch
        %170 = sbr.rel (%p168) target = $region24
      $region23: #{byte_cnn_decoder_forward.6} parent=11 // pred_region
        _
      $region24: #{byte_cnn_decoder_forward.6} parent=11 // pred_fallthru
        _
      // Predicated region
      $region25: #{byte_cnn_decoder_forward.6} parent=11 // pred_check
        %p171 = pneg %p121
      $region26: #{byte_cnn_decoder_forward.6} parent=11 // pred_check_branch
        %173 = sbr.rel (%p171) target = $region28
      $region27: #{byte_cnn_decoder_forward.6} parent=11 // pred_region
        _
      $region28: #{byte_cnn_decoder_forward.6} parent=11 // pred_fallthru
        _
    $region12: #{byte_cnn_decoder_forward.6} parent=5 // pred_fallthru
      _
    %p174 = scmp.lt.s32.totalorder %s11, 2
    // Predicated region
    $region29: #{byte_cnn_decoder_forward.6} parent=5 // pred_check
      %p175 = pneg %p174
    $region30: #{byte_cnn_decoder_forward.6} parent=5 // pred_check_branch
      %177 = sbr.rel (%p175) target = $region32
    $region31: #{byte_cnn_decoder_forward.6} parent=5 // pred_region
      // Predicated region
      $region33: #{byte_cnn_decoder_forward.6} parent=31 // pred_check
        %p178 = pneg %p31
      $region34: #{byte_cnn_decoder_forward.6} parent=31 // pred_check_branch
        %180 = sbr.rel (%p178) target = $region36
      $region35: #{byte_cnn_decoder_forward.6} parent=31 // pred_region
        %p181 = scmp.lt.s32.totalorder %s11, 1
        %s182 = scalar_select %p181, %s11, 1
        %s183 = smul.addr %s182, 8
        %s184 = scalar_lea.vmem %s0, %s183
      $region36: #{byte_cnn_decoder_forward.6} parent=31 // pred_fallthru
        _
    $region32: #{byte_cnn_decoder_forward.6} parent=5 // pred_fallthru
      _
    %p185 = scmp.le.s32.totalorder 1, %s11
    %p186 = scmp.lt.s32.totalorder %s11, 3
    %p187 = pnand %p185, %p186
    %p188 = pneg %p187
    // Predicated region
    $region37: #{byte_cnn_decoder_forward.6} parent=5 // pred_check
      _
    $region38: #{byte_cnn_decoder_forward.6} parent=5 // pred_check_branch
      %190 = sbr.rel (%p187) target = $region40
    $region39: #{byte_cnn_decoder_forward.6} parent=5 // pred_region
      %s191 = ssub.s32 %s11, 1
      %p192 = scmp.lt.s32.totalorder %s16, 1
      %s193 = scalar_select %p192, %s16, 1
      %s194 = smul.addr %s193, 8
      %s195 = scalar_lea.vmem %s0, %s194
      %p196 = pneg %p37
      %p197 = pneg %p34
      %p198 = pneg %p58
      %p199 = pneg %p55
      %p200 = pneg %p79
      %p201 = pneg %p76
      %p202 = pneg %p100
      %p203 = pneg %p97
      %p204 = pneg %p121
      %p205 = pneg %p118
      %p206 = pneg %p147
      %p207 = pneg %p144
      %p208 = scmp.lt.s32.totalorder %s16, 1
      %s209 = scalar_select %p208, %s16, 1
      %s210 = smul.addr %s209, 8
      %s211 = scalar_lea.vmem %s5, %s210
      %p212 = scmp.lt.s32.totalorder %s16, 1
      %s213 = scalar_select %p212, %s16, 1
      %s214 = smul.addr %s213, 8
      %s215 = scalar_lea.vmem %s0, %s214
      %p216 = scmp.lt.s32.totalorder %s16, 1
      %s217 = scalar_select %p216, %s16, 1
      %s218 = smul.addr %s217, 8
      %s219 = scalar_lea.vmem %s5, %s218
      %vm221 = vcmask 261120
      %222 = vst.msk [vmem:[#allocation2] sm:$0xff] %vm221, 0.0
      %vm223 = vcmask 254976
      %224 = vst.msk [vmem:[#allocation2 + $0x8] sm:$0x3] %vm223, 0.0
      %v225 = vld [vmem:[%s215] sm:$0xff]
      %226 = vst.msk [vmem:[#allocation2 + $0x1] sm:$0xff] %vm221, %v225
      %v227 = vld [vmem:[#allocation2] sm:$0xff]
      %228 = vst.msk [vmem:[#allocation3] sm:$0xff] %vm221, %v227
      %230 = vrot.lane.b32.xlu0 %v225, 32
      %v231 = vpop.permute.xlu0 %230
      %vm233 = vcmask 523520
      %234 = vst.msk [vmem:[#allocation3] sm:$0xff] %vm233, %v231
      %v235 = vld [vmem:[#allocation2 + $0x2] sm:$0xff]
      %237 = vrot.lane.b32.xlu0 %v235, 64
      %v238 = vpop.permute.xlu0 %237
      %vm240 = vcmask 785920
      %241 = vst.msk [vmem:[#allocation3] sm:$0xff] %vm240, %v238
      %v242 = vld [vmem:[#allocation3] sm:$0xff]
      %v243 = vpack.c.bf16 %v242, %v242
      %v244 = vld [vmem:[%s1] sm:$0xf]
      %v245 = vld [vmem:[%s1 + $0x4] sm:$0xf]
      %v246 = vld [vmem:[%s1 + $0x8] sm:$0xf]
      %v247 = vld [vmem:[%s1 + $0xc] sm:$0xf]
      %v248 = vld [vmem:[%s1 + $0x10] sm:$0xf]
      %v249 = vld [vmem:[%s1 + $0x14] sm:$0xf]
      %v250 = vld [vmem:[%s1 + $0x18] sm:$0xf]
      %v251 = vld [vmem:[%s1 + $0x1c] sm:$0xf]
      %v252 = vld [vmem:[%s1 + $0x20] sm:$0xf]
      %v253 = vld [vmem:[%s1 + $0x24] sm:$0xf]
      %v254 = vld [vmem:[%s1 + $0x28] sm:$0xf]
      %v255 = vld [vmem:[%s1 + $0x2c] sm:$0xf]
      %v268 = vunpack.c.l.b16 %v244
      %v269 = vunpack.c.l.b16 %v245
      %v270 = vunpack.c.l.b16 %v246
      %v271 = vunpack.c.l.b16 %v247
      %v272 = vunpack.c.l.b16 %v248
      %v273 = vunpack.c.l.b16 %v249
      %v274 = vunpack.c.l.b16 %v250
      %v275 = vunpack.c.l.b16 %v251
      %v276 = vunpack.c.l.b16 %v252
      %v277 = vunpack.c.l.b16 %v253
      %v278 = vunpack.c.l.b16 %v254
      %v279 = vunpack.c.l.b16 %v255
      %v280 = vpack.c.b16 %v269, %v268
      %v281 = vpack.c.b16 %v271, %v270
      %v282 = vpack.c.b16 %v273, %v272
      %v283 = vpack.c.b16 %v275, %v274
      %v284 = vpack.c.b16 %v277, %v276
      %v285 = vpack.c.b16 %v279, %v278
      %vm292 = vcmask 785408
      %v294 = vsel %vm292, %v243, 0
      %296 = vmatprep.subr.bf16.mxu0 0
      %297 = vmatpush1.bf16.msra.mxu0 0
      %298 = vmatprep.subr.bf16.mxu0 0
      %299 = vmatpush1.bf16.msra.mxu0 0
      %300 = vmatprep.subr.bf16.mxu0 0
      %301 = vmatpush1.bf16.msra.mxu0 %v285
      %302 = vmatprep.subr.bf16.mxu0 0
      %303 = vmatpush1.bf16.msra.mxu0 %v284
      %304 = vmatprep.subr.bf16.mxu0 0
      %305 = vmatpush1.bf16.msra.mxu0 %v283
      %306 = vmatprep.subr.bf16.mxu0 0
      %307 = vmatpush1.bf16.msra.mxu0 %v282
      %308 = vmatprep.subr.bf16.mxu0 0
      %309 = vmatpush1.bf16.msra.mxu0 %v281
      %310 = vmatprep.subr.bf16.mxu0 0
      %311 = vmatpush1.bf16.msra.mxu0 %v280
      %312 = vmatprep.subr.bf16.mxu0 0
      %313 = vmatpush2.bf16.msra.mxu0 0
      %314 = vmatprep.subr.bf16.mxu0 0
      %315 = vmatpush2.bf16.msra.mxu0 0
      %316 = vmatprep.subr.bf16.mxu0 0
      %317 = vmatpush2.bf16.msra.mxu0 0
      %318 = vmatprep.subr.bf16.mxu0 0
      %319 = vmatpush2.bf16.msra.mxu0 0
      %320 = vmatprep.subr.bf16.mxu0 0
      %321 = vmatpush2.bf16.msra.mxu0 0
      %322 = vmatprep.subr.bf16.mxu0 0
      %323 = vmatpush2.bf16.msra.mxu0 0
      %324 = vmatprep.subr.bf16.mxu0 0
      %325 = vmatpush2.bf16.msra.mxu0 0
      %326 = vmatprep.subr.bf16.mxu0 0
      %327 = vmatpush2.bf16.msra.mxu0 0
      %328 = vmatprep.mubr.bf16.mxu0 0
      %329 = vmatmul.mubr.bf16.gmra.mxu0 %v294
      %v330 = vpop.f32.mrf.mxu0
      %v331 = vadd.f32 0.0, %v330
      %v332 = vpop.f32.mrf.mxu0
      %v333 = vpop.f32.mrf.mxu0
      %v334 = vpop.f32.mrf.mxu0
      %335 = vdwg.mxu0
      %v336 = vmax.f32 %v331, 0.0
      %337 = vst.msk [vmem:[#allocation2 + $0x1] sm:$0xff] %vm221, %v336
      %v338 = vld [vmem:[#allocation2] sm:$0xff]
      %339 = vst.msk [vmem:[#allocation3] sm:$0xff] %vm221, %v338
      %341 = vrot.lane.b32.xlu0 %v336, 32
      %v342 = vpop.permute.xlu0 %341
      %344 = vst.msk [vmem:[#allocation3] sm:$0xff] %vm233, %v342
      %v345 = vld [vmem:[#allocation2 + $0x2] sm:$0xff]
      %347 = vrot.lane.b32.xlu0 %v345, 64
      %v348 = vpop.permute.xlu0 %347
      %350 = vst.msk [vmem:[#allocation3] sm:$0xff] %vm240, %v348
      %v351 = vld [vmem:[#allocation3] sm:$0xff]
      %v352 = vpack.c.bf16 %v351, %v351
      %v353 = vld [vmem:[%s2] sm:$0xf]
      %v354 = vld [vmem:[%s2 + $0x4] sm:$0xf]
      %v355 = vld [vmem:[%s2 + $0x8] sm:$0xf]
      %v356 = vld [vmem:[%s2 + $0xc] sm:$0xf]
      %v357 = vld [vmem:[%s2 + $0x10] sm:$0xf]
      %v358 = vld [vmem:[%s2 + $0x14] sm:$0xf]
      %v359 = vld [vmem:[%s2 + $0x18] sm:$0xf]
      %v360 = vld [vmem:[%s2 + $0x1c] sm:$0xf]
      %v361 = vld [vmem:[%s2 + $0x20] sm:$0xf]
      %v362 = vld [vmem:[%s2 + $0x24] sm:$0xf]
      %v363 = vld [vmem:[%s2 + $0x28] sm:$0xf]
      %v364 = vld [vmem:[%s2 + $0x2c] sm:$0xf]
      %v377 = vunpack.c.l.b16 %v353
      %v378 = vunpack.c.l.b16 %v354
      %v379 = vunpack.c.l.b16 %v355
      %v380 = vunpack.c.l.b16 %v356
      %v381 = vunpack.c.l.b16 %v357
      %v382 = vunpack.c.l.b16 %v358
      %v383 = vunpack.c.l.b16 %v359
      %v384 = vunpack.c.l.b16 %v360
      %v385 = vunpack.c.l.b16 %v361
      %v386 = vunpack.c.l.b16 %v362
      %v387 = vunpack.c.l.b16 %v363
      %v388 = vunpack.c.l.b16 %v364
      %v389 = vpack.c.b16 %v378, %v377
      %v390 = vpack.c.b16 %v380, %v379
      %v391 = vpack.c.b16 %v382, %v381
      %v392 = vpack.c.b16 %v384, %v383
      %v393 = vpack.c.b16 %v386, %v385
      %v394 = vpack.c.b16 %v388, %v387
      %v402 = vsel %vm292, %v352, 0
      %404 = vmatprep.subr.bf16.mxu0 0
      %405 = vmatpush1.bf16.msra.mxu0 0
      %406 = vmatprep.subr.bf16.mxu0 0
      %407 = vmatpush1.bf16.msra.mxu0 0
      %408 = vmatprep.subr.bf16.mxu0 0
      %409 = vmatpush1.bf16.msra.mxu0 %v394
      %410 = vmatprep.subr.bf16.mxu0 0
      %411 = vmatpush1.bf16.msra.mxu0 %v393
      %412 = vmatprep.subr.bf16.mxu0 0
      %413 = vmatpush1.bf16.msra.mxu0 %v392
      %414 = vmatprep.subr.bf16.mxu0 0
      %415 = vmatpush1.bf16.msra.mxu0 %v391
      %416 = vmatprep.subr.bf16.mxu0 0
      %417 = vmatpush1.bf16.msra.mxu0 %v390
      %418 = vmatprep.subr.bf16.mxu0 0
      %419 = vmatpush1.bf16.msra.mxu0 %v389
      %420 = vmatprep.subr.bf16.mxu0 0
      %421 = vmatpush2.bf16.msra.mxu0 0
      %422 = vmatprep.subr.bf16.mxu0 0
      %423 = vmatpush2.bf16.msra.mxu0 0
      %424 = vmatprep.subr.bf16.mxu0 0
      %425 = vmatpush2.bf16.msra.mxu0 0
      %426 = vmatprep.subr.bf16.mxu0 0
      %427 = vmatpush2.bf16.msra.mxu0 0
      %428 = vmatprep.subr.bf16.mxu0 0
      %429 = vmatpush2.bf16.msra.mxu0 0
      %430 = vmatprep.subr.bf16.mxu0 0
      %431 = vmatpush2.bf16.msra.mxu0 0
      %432 = vmatprep.subr.bf16.mxu0 0
      %433 = vmatpush2.bf16.msra.mxu0 0
      %434 = vmatprep.subr.bf16.mxu0 0
      %435 = vmatpush2.bf16.msra.mxu0 0
      %436 = vmatprep.mubr.bf16.mxu0 0
      %437 = vmatmul.mubr.bf16.gmra.mxu0 %v402
      %v438 = vpop.f32.mrf.mxu0
      %v439 = vadd.f32 0.0, %v438
      %v440 = vpop.f32.mrf.mxu0
      %v441 = vpop.f32.mrf.mxu0
      %v442 = vpop.f32.mrf.mxu0
      %443 = vdwg.mxu0
      %v444 = vmax.f32 %v439, 0.0
      %445 = vst.msk [vmem:[#allocation2 + $0x1] sm:$0xff] %vm221, %v444
      %v446 = vld [vmem:[#allocation2] sm:$0xff]
      %447 = vst.msk [vmem:[#allocation3] sm:$0xff] %vm221, %v446
      %449 = vrot.lane.b32.xlu0 %v444, 32
      %v450 = vpop.permute.xlu0 %449
      %452 = vst.msk [vmem:[#allocation3] sm:$0xff] %vm233, %v450
      %v453 = vld [vmem:[#allocation2 + $0x2] sm:$0xff]
      %455 = vrot.lane.b32.xlu0 %v453, 64
      %v456 = vpop.permute.xlu0 %455
      %458 = vst.msk [vmem:[#allocation3] sm:$0xff] %vm240, %v456
      %v459 = vld [vmem:[#allocation3] sm:$0xff]
      %v460 = vpack.c.bf16 %v459, %v459
      %v461 = vld [vmem:[%s3] sm:$0xf]
      %v462 = vld [vmem:[%s3 + $0x4] sm:$0xf]
      %v463 = vld [vmem:[%s3 + $0x8] sm:$0xf]
      %v464 = vld [vmem:[%s3 + $0xc] sm:$0xf]
      %v465 = vld [vmem:[%s3 + $0x10] sm:$0xf]
      %v466 = vld [vmem:[%s3 + $0x14] sm:$0xf]
      %v467 = vld [vmem:[%s3 + $0x18] sm:$0xf]
      %v468 = vld [vmem:[%s3 + $0x1c] sm:$0xf]
      %v469 = vld [vmem:[%s3 + $0x20] sm:$0xf]
      %v470 = vld [vmem:[%s3 + $0x24] sm:$0xf]
      %v471 = vld [vmem:[%s3 + $0x28] sm:$0xf]
      %v472 = vld [vmem:[%s3 + $0x2c] sm:$0xf]
      %v485 = vunpack.c.l.b16 %v461
      %v486 = vunpack.c.l.b16 %v462
      %v487 = vunpack.c.l.b16 %v463
      %v488 = vunpack.c.l.b16 %v464
      %v489 = vunpack.c.l.b16 %v465
      %v490 = vunpack.c.l.b16 %v466
      %v491 = vunpack.c.l.b16 %v467
      %v492 = vunpack.c.l.b16 %v468
      %v493 = vunpack.c.l.b16 %v469
      %v494 = vunpack.c.l.b16 %v470
      %v495 = vunpack.c.l.b16 %v471
      %v496 = vunpack.c.l.b16 %v472
      %v497 = vpack.c.b16 %v486, %v485
      %v498 = vpack.c.b16 %v488, %v487
      %v499 = vpack.c.b16 %v490, %v489
      %v500 = vpack.c.b16 %v492, %v491
      %v501 = vpack.c.b16 %v494, %v493
      %v502 = vpack.c.b16 %v496, %v495
      %v510 = vsel %vm292, %v460, 0
      %512 = vmatprep.subr.bf16.mxu0 0
      %513 = vmatpush1.bf16.msra.mxu0 0
      %514 = vmatprep.subr.bf16.mxu0 0
      %515 = vmatpush1.bf16.msra.mxu0 0
      %516 = vmatprep.subr.bf16.mxu0 0
      %517 = vmatpush1.bf16.msra.mxu0 %v502
      %518 = vmatprep.subr.bf16.mxu0 0
      %519 = vmatpush1.bf16.msra.mxu0 %v501
      %520 = vmatprep.subr.bf16.mxu0 0
      %521 = vmatpush1.bf16.msra.mxu0 %v500
      %522 = vmatprep.subr.bf16.mxu0 0
      %523 = vmatpush1.bf16.msra.mxu0 %v499
      %524 = vmatprep.subr.bf16.mxu0 0
      %525 = vmatpush1.bf16.msra.mxu0 %v498
      %526 = vmatprep.subr.bf16.mxu0 0
      %527 = vmatpush1.bf16.msra.mxu0 %v497
      %528 = vmatprep.subr.bf16.mxu0 0
      %529 = vmatpush2.bf16.msra.mxu0 0
      %530 = vmatprep.subr.bf16.mxu0 0
      %531 = vmatpush2.bf16.msra.mxu0 0
      %532 = vmatprep.subr.bf16.mxu0 0
      %533 = vmatpush2.bf16.msra.mxu0 0
      %534 = vmatprep.subr.bf16.mxu0 0
      %535 = vmatpush2.bf16.msra.mxu0 0
      %536 = vmatprep.subr.bf16.mxu0 0
      %537 = vmatpush2.bf16.msra.mxu0 0
      %538 = vmatprep.subr.bf16.mxu0 0
      %539 = vmatpush2.bf16.msra.mxu0 0
      %540 = vmatprep.subr.bf16.mxu0 0
      %541 = vmatpush2.bf16.msra.mxu0 0
      %542 = vmatprep.subr.bf16.mxu0 0
      %543 = vmatpush2.bf16.msra.mxu0 0
      %544 = vmatprep.mubr.bf16.mxu0 0
      %545 = vmatmul.mubr.bf16.gmra.mxu0 %v510
      %v546 = vpop.f32.mrf.mxu0
      %v547 = vadd.f32 %v336, %v546
      %v548 = vpop.f32.mrf.mxu0
      %v549 = vpop.f32.mrf.mxu0
      %v550 = vpop.f32.mrf.mxu0
      %551 = vdwg.mxu0
      %v552 = vmax.f32 %v547, 0.0
      %553 = vst.msk [vmem:[#allocation2 + $0x1] sm:$0xff] %vm221, %v552
      %v554 = vld [vmem:[#allocation2] sm:$0xff]
      %555 = vst.msk [vmem:[#allocation3] sm:$0xff] %vm221, %v554
      %557 = vrot.lane.b32.xlu0 %v552, 32
      %v558 = vpop.permute.xlu0 %557
      %560 = vst.msk [vmem:[#allocation3] sm:$0xff] %vm233, %v558
      %v561 = vld [vmem:[#allocation2 + $0x2] sm:$0xff]
      %563 = vrot.lane.b32.xlu0 %v561, 64
      %v564 = vpop.permute.xlu0 %563
      %566 = vst.msk [vmem:[#allocation3] sm:$0xff] %vm240, %v564
      %v567 = vld [vmem:[#allocation3] sm:$0xff]
      %v568 = vpack.c.bf16 %v567, %v567
      %v569 = vld [vmem:[%s4] sm:$0xf]
      %v570 = vld [vmem:[%s4 + $0x4] sm:$0xf]
      %v571 = vld [vmem:[%s4 + $0x8] sm:$0xf]
      %v572 = vld [vmem:[%s4 + $0xc] sm:$0xf]
      %v573 = vld [vmem:[%s4 + $0x10] sm:$0xf]
      %v574 = vld [vmem:[%s4 + $0x14] sm:$0xf]
      %v575 = vld [vmem:[%s4 + $0x18] sm:$0xf]
      %v576 = vld [vmem:[%s4 + $0x1c] sm:$0xf]
      %v577 = vld [vmem:[%s4 + $0x20] sm:$0xf]
      %v578 = vld [vmem:[%s4 + $0x24] sm:$0xf]
      %v579 = vld [vmem:[%s4 + $0x28] sm:$0xf]
      %v580 = vld [vmem:[%s4 + $0x2c] sm:$0xf]
      %v593 = vunpack.c.l.b16 %v569
      %v594 = vunpack.c.l.b16 %v570
      %v595 = vunpack.c.l.b16 %v571
      %v596 = vunpack.c.l.b16 %v572
      %v597 = vunpack.c.l.b16 %v573
      %v598 = vunpack.c.l.b16 %v574
      %v599 = vunpack.c.l.b16 %v575
      %v600 = vunpack.c.l.b16 %v576
      %v601 = vunpack.c.l.b16 %v577
      %v602 = vunpack.c.l.b16 %v578
      %v603 = vunpack.c.l.b16 %v579
      %v604 = vunpack.c.l.b16 %v580
      %v605 = vpack.c.b16 %v594, %v593
      %v606 = vpack.c.b16 %v596, %v595
      %v607 = vpack.c.b16 %v598, %v597
      %v608 = vpack.c.b16 %v600, %v599
      %v609 = vpack.c.b16 %v602, %v601
      %v610 = vpack.c.b16 %v604, %v603
      %v618 = vsel %vm292, %v568, 0
      %620 = vmatprep.subr.bf16.mxu0 0
      %621 = vmatpush1.bf16.msra.mxu0 0
      %622 = vmatprep.subr.bf16.mxu0 0
      %623 = vmatpush1.bf16.msra.mxu0 0
      %624 = vmatprep.subr.bf16.mxu0 0
      %625 = vmatpush1.bf16.msra.mxu0 %v610
      %626 = vmatprep.subr.bf16.mxu0 0
      %627 = vmatpush1.bf16.msra.mxu0 %v609
      %628 = vmatprep.subr.bf16.mxu0 0
      %629 = vmatpush1.bf16.msra.mxu0 %v608
      %630 = vmatprep.subr.bf16.mxu0 0
      %631 = vmatpush1.bf16.msra.mxu0 %v607
      %632 = vmatprep.subr.bf16.mxu0 0
      %633 = vmatpush1.bf16.msra.mxu0 %v606
      %634 = vmatprep.subr.bf16.mxu0 0
      %635 = vmatpush1.bf16.msra.mxu0 %v605
      %636 = vmatprep.subr.bf16.mxu0 0
      %637 = vmatpush2.bf16.msra.mxu0 0
      %638 = vmatprep.subr.bf16.mxu0 0
      %639 = vmatpush2.bf16.msra.mxu0 0
      %640 = vmatprep.subr.bf16.mxu0 0
      %641 = vmatpush2.bf16.msra.mxu0 0
      %642 = vmatprep.subr.bf16.mxu0 0
      %643 = vmatpush2.bf16.msra.mxu0 0
      %644 = vmatprep.subr.bf16.mxu0 0
      %645 = vmatpush2.bf16.msra.mxu0 0
      %646 = vmatprep.subr.bf16.mxu0 0
      %647 = vmatpush2.bf16.msra.mxu0 0
      %648 = vmatprep.subr.bf16.mxu0 0
      %649 = vmatpush2.bf16.msra.mxu0 0
      %650 = vmatprep.subr.bf16.mxu0 0
      %651 = vmatpush2.bf16.msra.mxu0 0
      %652 = vmatprep.mubr.bf16.mxu0 0
      %653 = vmatmul.mubr.bf16.gmra.mxu0 %v618
      %v654 = vpop.f32.mrf.mxu0
      %v655 = vadd.f32 0.0, %v654
      %v656 = vpop.f32.mrf.mxu0
      %v657 = vpop.f32.mrf.mxu0
      %v658 = vpop.f32.mrf.mxu0
      %659 = vdwg.mxu0
      %v660 = vmax.f32 %v655, 0.0
      %vm661 = vcmask 523264
      %662 = vst.msk [vmem:[%s219] sm:$0xff] %vm661, %v660
      %p663 = scmp.lt.s32.totalorder %s16, 1
      %s664 = scalar_select %p663, %s16, 1
      %s665 = smul.addr %s664, 8
      %s666 = scalar_lea.vmem %s5, %s665
      // Predicated region
      $region41: #{byte_cnn_decoder_forward.6} parent=39 // pred_check
        %p667 = pneg %p144
      $region42: #{byte_cnn_decoder_forward.6} parent=39 // pred_check_branch
        %669 = sbr.rel (%p667) target = $region44
      $region43: #{byte_cnn_decoder_forward.6} parent=39 // pred_region
        _
      $region44: #{byte_cnn_decoder_forward.6} parent=39 // pred_fallthru
        _
    $region40: #{byte_cnn_decoder_forward.6} parent=5 // pred_fallthru
      _
    %p670 = scmp.le.s32.totalorder 2, %s11
    // Predicated region
    $region45: #{byte_cnn_decoder_forward.6} parent=5 // pred_check
      %p671 = pneg %p670
    $region46: #{byte_cnn_decoder_forward.6} parent=5 // pred_check_branch
      %673 = sbr.rel (%p671) target = $region48
    $region47: #{byte_cnn_decoder_forward.6} parent=5 // pred_region
      %s674 = ssub.s32 %s11, 2
      // Predicated region
      $region49: #{byte_cnn_decoder_forward.6} parent=47 // pred_check
        %p675 = pneg %p150
      $region50: #{byte_cnn_decoder_forward.6} parent=47 // pred_check_branch
        %677 = sbr.rel (%p675) target = $region52
      $region51: #{byte_cnn_decoder_forward.6} parent=47 // pred_region
        %p678 = scmp.lt.s32.totalorder %s17, 1
        %s679 = scalar_select %p678, %s17, 1
        %s680 = smul.addr %s679, 8
        %s681 = scalar_lea.vmem %s5, %s680
      $region52: #{byte_cnn_decoder_forward.6} parent=47 // pred_fallthru
        _
    $region48: #{byte_cnn_decoder_forward.6} parent=5 // pred_fallthru
      _
  $region6: #{byte_cnn_decoder_forward.6} parent=0 // loop_footer
    %s15 = sadd.s32 1, %s11
  $region7: #{byte_cnn_decoder_forward.6} parent=0 // loop_footer_branch
    %10 = sbr.rel target = $region3
  $region8: #{byte_cnn_decoder_forward.6} parent=0 // loop_exit
    _

// kernel: byte_cnn_decoder_forward.7
$region0: #{byte_cnn_decoder_forward.7}
  #allocation0 [shape = 'u32[]', space=smem, size = 0x4, offset = 0x4, fixed_abs, tag = 'smem constant byte address 0x4 - core index']
  #allocation1 [shape = 'u32[144,128]{1,0:T(1,128)}', space=vmem, size = 0x12000, scoped, tag = 'internal scratch']
  #allocation2 [shape = 'f32[18,32]{1,0:T(8,128)}', space=vmem, size = 0x3000, scoped, tag = 'scratch operand']
  #allocation3 [shape = 'f32[16,96]{1,0:T(8,128)}', space=vmem, size = 0x2000, scoped, tag = 'scratch operand']
  %s0 = inlined_call_operand.vmem [shape: f32[2,16,32], index: 0, kind: input, shape index: {}]
  %s1 = inlined_call_operand.vmem [shape: bf16[96,32], index: 1, kind: input, shape index: {}]
  %s2 = inlined_call_operand.vmem [shape: bf16[96,32], index: 2, kind: input, shape index: {}]
  %s3 = inlined_call_operand.vmem [shape: bf16[96,32], index: 3, kind: input, shape index: {}]
  %s4 = inlined_call_operand.vmem [shape: bf16[96,32], index: 4, kind: input, shape index: {}]
  %s5 = inlined_call_operand.vmem [shape: bf16[96,32], index: 5, kind: input, shape index: {}]
  %s6 = inlined_call_operand.vmem [shape: bf16[96,32], index: 6, kind: input, shape index: {}]
  %s7 = inlined_call_operand.vmem [shape: bf16[96,32], index: 7, kind: input, shape index: {}]
  %s8 = inlined_call_operand.hbm [shape: f32[2,16,32], index: 8, kind: output, shape index: {}]
  %s9 = sld [smem:[#allocation0]]
  $region65: #{byte_cnn_decoder_forward.7} parent=0
    _
  %s11 = ssub.s32 1, %s9
  %s12 = scalar_select 0, %s11, %s9
  $region1: #{byte_cnn_decoder_forward.7} parent=0
    #allocation4 [shape = 'u8[16384]{0}', space=vmem, size = 0x4000, scoped, tag = 'output window, operand 0']
    #allocation5 [shape = 's32[2]{0}', space=sflag, size = 0x8, scoped, tag = 'scoped memory for byte_cnn_decoder_forward.7']
    %13 = vsyncpa [#allocation5], 0
    %s14 = scalar_lea.sflag [#allocation5], 1
    %15 = vsyncpa %s14, 0
    loop: start=0, step=1, limit=4
    $region2: #{byte_cnn_decoder_forward.7} parent=1 // loop_pre_header
      _
    $region3: #{byte_cnn_decoder_forward.7} parent=1 // loop_header
      %s17 = sphi 0, %s21
      %p18 = scmp.ge.s32.totalorder %s17, 4
      %s27 = sphi 0, %s29
      %s30 = sphi 0, %s27
      %s31 = sphi 0, %s30
      %s47 = sphi 0, %s31
      %s51 = sphi 0, %s51
      %s53 = sphi 0, %s51
      %s54 = sphi 0, %s53
      %s68 = sphi 0, %s54
      %s72 = sphi 0, %s72
      %s74 = sphi 0, %s72
      %s75 = sphi 0, %s74
      %s89 = sphi 0, %s75
      %s93 = sphi 0, %s93
      %s95 = sphi 0, %s93
      %s96 = sphi 0, %s95
      %s110 = sphi 0, %s96
      %s114 = sphi 0, %s114
      %s116 = sphi 0, %s114
      %s117 = sphi 0, %s116
      %s131 = sphi 0, %s117
      %s135 = sphi 0, %s135
      %s137 = sphi 0, %s135
      %s138 = sphi 0, %s137
      %s152 = sphi 0, %s138
      %s156 = sphi 0, %s156
      %s158 = sphi 0, %s156
      %s159 = sphi 0, %s158
      %s173 = sphi 0, %s159
      %s177 = sphi 0, %s177
      %s179 = sphi 0, %s177
      %s180 = sphi 0, %s179
      %s194 = sphi 0, %s180
      %s200 = sphi 0, %s202
      %s203 = sphi 0, %s200
      %s204 = sphi 0, %s203
      %s220 = sphi 0, %s204
    $region4: #{byte_cnn_decoder_forward.7} parent=1 // loop_header_branch
      %20 = sbr.rel (%p18) target = $region8
    $region5: #{byte_cnn_decoder_forward.7} parent=1 // loop_body
      %s22 = ssub.s32 %s17, 1
      %s23 = ssub.s32 %s17, 2
      %s24 = sadd.s32 %s17, 1
      %s25 = ssub.s32 %s17, %s24
      %p26 = scmp.eq.s32.totalorder %s25, 0
      %s28 = sadd.s32 %s27, 1
      %s29 = scalar_select %p26, %s27, %s28
      %p32 = pneg %p26
      %p33 = scmp.eq.s32.totalorder %s17, 1
      %p34 = por %p32, %p33
      %p35 = scmp.ne.s32.totalorder %s27, %s30
      %p36 = scmp.eq.s32.totalorder %s17, 0
      %p37 = por %p35, %p36
      %p38 = scmp.ne.s32.totalorder %s27, %s30
      %p39 = scmp.eq.s32.totalorder %s22, 1
      %p40 = por %p38, %p39
      %p41 = scmp.ne.s32.totalorder %s30, %s31
      %p42 = scmp.eq.s32.totalorder %s22, 0
      %p43 = por %p41, %p42
      %p44 = scmp.ne.s32.totalorder %s30, %s31
      %p45 = scmp.eq.s32.totalorder %s23, 1
      %p46 = por %p44, %p45
      %p48 = scmp.ne.s32.totalorder %s31, %s47
      %p49 = scmp.eq.s32.totalorder %s23, 0
      %p50 = por %p48, %p49
      %s52 = sadd.s32 %s51, 1
      %p55 = scmp.eq.s32.totalorder %s17, 1
      %p56 = scmp.ne.s32.totalorder %s51, %s53
      %p57 = scmp.eq.s32.totalorder %s17, 0
      %p58 = por %p56, %p57
      %p59 = scmp.ne.s32.totalorder %s51, %s53
      %p60 = scmp.eq.s32.totalorder %s22, 1
      %p61 = por %p59, %p60
      %p62 = scmp.ne.s32.totalorder %s53, %s54
      %p63 = scmp.eq.s32.totalorder %s22, 0
      %p64 = por %p62, %p63
      %p65 = scmp.ne.s32.totalorder %s53, %s54
      %p66 = scmp.eq.s32.totalorder %s23, 1
      %p67 = por %p65, %p66
      %p69 = scmp.ne.s32.totalorder %s54, %s68
      %p70 = scmp.eq.s32.totalorder %s23, 0
      %p71 = por %p69, %p70
      %s73 = sadd.s32 %s72, 1
      %p76 = scmp.eq.s32.totalorder %s17, 1
      %p77 = scmp.ne.s32.totalorder %s72, %s74
      %p78 = scmp.eq.s32.totalorder %s17, 0
      %p79 = por %p77, %p78
      %p80 = scmp.ne.s32.totalorder %s72, %s74
      %p81 = scmp.eq.s32.totalorder %s22, 1
      %p82 = por %p80, %p81
      %p83 = scmp.ne.s32.totalorder %s74, %s75
      %p84 = scmp.eq.s32.totalorder %s22, 0
      %p85 = por %p83, %p84
      %p86 = scmp.ne.s32.totalorder %s74, %s75
      %p87 = scmp.eq.s32.totalorder %s23, 1
      %p88 = por %p86, %p87
      %p90 = scmp.ne.s32.totalorder %s75, %s89
      %p91 = scmp.eq.s32.totalorder %s23, 0
      %p92 = por %p90, %p91
      %s94 = sadd.s32 %s93, 1
      %p97 = scmp.eq.s32.totalorder %s17, 1
      %p98 = scmp.ne.s32.totalorder %s93, %s95
      %p99 = scmp.eq.s32.totalorder %s17, 0
      %p100 = por %p98, %p99
      %p101 = scmp.ne.s32.totalorder %s93, %s95
      %p102 = scmp.eq.s32.totalorder %s22, 1
      %p103 = por %p101, %p102
      %p104 = scmp.ne.s32.totalorder %s95, %s96
      %p105 = scmp.eq.s32.totalorder %s22, 0
      %p106 = por %p104, %p105
      %p107 = scmp.ne.s32.totalorder %s95, %s96
      %p108 = scmp.eq.s32.totalorder %s23, 1
      %p109 = por %p107, %p108
      %p111 = scmp.ne.s32.totalorder %s96, %s110
      %p112 = scmp.eq.s32.totalorder %s23, 0
      %p113 = por %p111, %p112
      %s115 = sadd.s32 %s114, 1
      %p118 = scmp.eq.s32.totalorder %s17, 1
      %p119 = scmp.ne.s32.totalorder %s114, %s116
      %p120 = scmp.eq.s32.totalorder %s17, 0
      %p121 = por %p119, %p120
      %p122 = scmp.ne.s32.totalorder %s114, %s116
      %p123 = scmp.eq.s32.totalorder %s22, 1
      %p124 = por %p122, %p123
      %p125 = scmp.ne.s32.totalorder %s116, %s117
      %p126 = scmp.eq.s32.totalorder %s22, 0
      %p127 = por %p125, %p126
      %p128 = scmp.ne.s32.totalorder %s116, %s117
      %p129 = scmp.eq.s32.totalorder %s23, 1
      %p130 = por %p128, %p129
      %p132 = scmp.ne.s32.totalorder %s117, %s131
      %p133 = scmp.eq.s32.totalorder %s23, 0
      %p134 = por %p132, %p133
      %s136 = sadd.s32 %s135, 1
      %p139 = scmp.eq.s32.totalorder %s17, 1
      %p140 = scmp.ne.s32.totalorder %s135, %s137
      %p141 = scmp.eq.s32.totalorder %s17, 0
      %p142 = por %p140, %p141
      %p143 = scmp.ne.s32.totalorder %s135, %s137
      %p144 = scmp.eq.s32.totalorder %s22, 1
      %p145 = por %p143, %p144
      %p146 = scmp.ne.s32.totalorder %s137, %s138
      %p147 = scmp.eq.s32.totalorder %s22, 0
      %p148 = por %p146, %p147
      %p149 = scmp.ne.s32.totalorder %s137, %s138
      %p150 = scmp.eq.s32.totalorder %s23, 1
      %p151 = por %p149, %p150
      %p153 = scmp.ne.s32.totalorder %s138, %s152
      %p154 = scmp.eq.s32.totalorder %s23, 0
      %p155 = por %p153, %p154
      %s157 = sadd.s32 %s156, 1
      %p160 = scmp.eq.s32.totalorder %s17, 1
      %p161 = scmp.ne.s32.totalorder %s156, %s158
      %p162 = scmp.eq.s32.totalorder %s17, 0
      %p163 = por %p161, %p162
      %p164 = scmp.ne.s32.totalorder %s156, %s158
      %p165 = scmp.eq.s32.totalorder %s22, 1
      %p166 = por %p164, %p165
      %p167 = scmp.ne.s32.totalorder %s158, %s159
      %p168 = scmp.eq.s32.totalorder %s22, 0
      %p169 = por %p167, %p168
      %p170 = scmp.ne.s32.totalorder %s158, %s159
      %p171 = scmp.eq.s32.totalorder %s23, 1
      %p172 = por %p170, %p171
      %p174 = scmp.ne.s32.totalorder %s159, %s173
      %p175 = scmp.eq.s32.totalorder %s23, 0
      %p176 = por %p174, %p175
      %s178 = sadd.s32 %s177, 1
      %p181 = scmp.eq.s32.totalorder %s17, 1
      %p182 = scmp.ne.s32.totalorder %s177, %s179
      %p183 = scmp.eq.s32.totalorder %s17, 0
      %p184 = por %p182, %p183
      %p185 = scmp.ne.s32.totalorder %s177, %s179
      %p186 = scmp.eq.s32.totalorder %s22, 1
      %p187 = por %p185, %p186
      %p188 = scmp.ne.s32.totalorder %s179, %s180
      %p189 = scmp.eq.s32.totalorder %s22, 0
      %p190 = por %p188, %p189
      %p191 = scmp.ne.s32.totalorder %s179, %s180
      %p192 = scmp.eq.s32.totalorder %s23, 1
      %p193 = por %p191, %p192
      %p195 = scmp.ne.s32.totalorder %s180, %s194
      %p196 = scmp.eq.s32.totalorder %s23, 0
      %p197 = por %p195, %p196
      %s198 = ssub.s32 %s17, %s24
      %p199 = scmp.eq.s32.totalorder %s198, 0
      %s201 = sadd.s32 %s200, 1
      %s202 = scalar_select %p199, %s200, %s201
      %p205 = pneg %p199
      %p206 = scmp.eq.s32.totalorder %s17, 1
      %p207 = por %p205, %p206
      %p208 = scmp.ne.s32.totalorder %s200, %s203
      %p209 = scmp.eq.s32.totalorder %s17, 0
      %p210 = por %p208, %p209
      %p211 = scmp.ne.s32.totalorder %s200, %s203
      %p212 = scmp.eq.s32.totalorder %s22, 1
      %p213 = por %p211, %p212
      %p214 = scmp.ne.s32.totalorder %s203, %s204
      %p215 = scmp.eq.s32.totalorder %s22, 0
      %p216 = por %p214, %p215
      %p217 = scmp.ne.s32.totalorder %s203, %s204
      %p218 = scmp.eq.s32.totalorder %s23, 1
      %p219 = por %p217, %p218
      %p221 = scmp.ne.s32.totalorder %s204, %s220
      %p222 = scmp.eq.s32.totalorder %s23, 0
      %p223 = por %p221, %p222
      %p224 = scmp.le.s32.totalorder 1, %s17
      %p225 = scmp.lt.s32.totalorder %s17, 3
      %p226 = pnand %p224, %p225
      %p227 = pneg %p226
      // Predicated region
      $region9: #{byte_cnn_decoder_forward.7} parent=5 // pred_check
        _
      $region10: #{byte_cnn_decoder_forward.7} parent=5 // pred_check_branch
        %229 = sbr.rel (%p226) target = $region12
      $region11: #{byte_cnn_decoder_forward.7} parent=5 // pred_region
        %s230 = ssub.s32 %s17, 1
        // Predicated region
        $region13: #{byte_cnn_decoder_forward.7} parent=11 // pred_check
          %p231 = pneg %p64
        $region14: #{byte_cnn_decoder_forward.7} parent=11 // pred_check_branch
          %233 = sbr.rel (%p231) target = $region16
        $region15: #{byte_cnn_decoder_forward.7} parent=11 // pred_region
          _
        $region16: #{byte_cnn_decoder_forward.7} parent=11 // pred_fallthru
          _
        // Predicated region
        $region17: #{byte_cnn_decoder_forward.7} parent=11 // pred_check
          %p234 = pneg %p85
        $region18: #{byte_cnn_decoder_forward.7} parent=11 // pred_check_branch
          %236 = sbr.rel (%p234) target = $region20
        $region19: #{byte_cnn_decoder_forward.7} parent=11 // pred_region
          _
        $region20: #{byte_cnn_decoder_forward.7} parent=11 // pred_fallthru
          _
        // Predicated region
        $region21: #{byte_cnn_decoder_forward.7} parent=11 // pred_check
          %p237 = pneg %p106
        $region22: #{byte_cnn_decoder_forward.7} parent=11 // pred_check_branch
          %239 = sbr.rel (%p237) target = $region24
        $region23: #{byte_cnn_decoder_forward.7} parent=11 // pred_region
          _
        $region24: #{byte_cnn_decoder_forward.7} parent=11 // pred_fallthru
          _
        // Predicated region
        $region25: #{byte_cnn_decoder_forward.7} parent=11 // pred_check
          %p240 = pneg %p127
        $region26: #{byte_cnn_decoder_forward.7} parent=11 // pred_check_branch
          %242 = sbr.rel (%p240) target = $region28
        $region27: #{byte_cnn_decoder_forward.7} parent=11 // pred_region
          _
        $region28: #{byte_cnn_decoder_forward.7} parent=11 // pred_fallthru
          _
        // Predicated region
        $region29: #{byte_cnn_decoder_forward.7} parent=11 // pred_check
          %p243 = pneg %p148
        $region30: #{byte_cnn_decoder_forward.7} parent=11 // pred_check_branch
          %245 = sbr.rel (%p243) target = $region32
        $region31: #{byte_cnn_decoder_forward.7} parent=11 // pred_region
          _
        $region32: #{byte_cnn_decoder_forward.7} parent=11 // pred_fallthru
          _
        // Predicated region
        $region33: #{byte_cnn_decoder_forward.7} parent=11 // pred_check
          %p246 = pneg %p169
        $region34: #{byte_cnn_decoder_forward.7} parent=11 // pred_check_branch
          %248 = sbr.rel (%p246) target = $region36
        $region35: #{byte_cnn_decoder_forward.7} parent=11 // pred_region
          _
        $region36: #{byte_cnn_decoder_forward.7} parent=11 // pred_fallthru
          _
        // Predicated region
        $region37: #{byte_cnn_decoder_forward.7} parent=11 // pred_check
          %p249 = pneg %p190
        $region38: #{byte_cnn_decoder_forward.7} parent=11 // pred_check_branch
          %251 = sbr.rel (%p249) target = $region40
        $region39: #{byte_cnn_decoder_forward.7} parent=11 // pred_region
          _
        $region40: #{byte_cnn_decoder_forward.7} parent=11 // pred_fallthru
          _
      $region12: #{byte_cnn_decoder_forward.7} parent=5 // pred_fallthru
        _
      %p252 = scmp.lt.s32.totalorder %s17, 2
      // Predicated region
      $region41: #{byte_cnn_decoder_forward.7} parent=5 // pred_check
        %p253 = pneg %p252
      $region42: #{byte_cnn_decoder_forward.7} parent=5 // pred_check_branch
        %255 = sbr.rel (%p253) target = $region44
      $region43: #{byte_cnn_decoder_forward.7} parent=5 // pred_region
        // Predicated region
        $region45: #{byte_cnn_decoder_forward.7} parent=43 // pred_check
          %p256 = pneg %p37
        $region46: #{byte_cnn_decoder_forward.7} parent=43 // pred_check_branch
          %258 = sbr.rel (%p256) target = $region48
        $region47: #{byte_cnn_decoder_forward.7} parent=43 // pred_region
          %p259 = scmp.lt.s32.totalorder %s17, 1
          %s260 = scalar_select %p259, %s17, 1
          %s261 = smul.addr %s260, 2
          %s262 = smul.addr %s261, 8
          %s263 = scalar_lea.vmem %s0, %s262
        $region48: #{byte_cnn_decoder_forward.7} parent=43 // pred_fallthru
          _
      $region44: #{byte_cnn_decoder_forward.7} parent=5 // pred_fallthru
        _
      %p264 = scmp.le.s32.totalorder 1, %s17
      %p265 = scmp.lt.s32.totalorder %s17, 3
      %p266 = pnand %p264, %p265
      %p267 = pneg %p266
      // Predicated region
      $region49: #{byte_cnn_decoder_forward.7} parent=5 // pred_check
        _
      $region50: #{byte_cnn_decoder_forward.7} parent=5 // pred_check_branch
        %269 = sbr.rel (%p266) target = $region52
      $region51: #{byte_cnn_decoder_forward.7} parent=5 // pred_region
        %s270 = ssub.s32 %s17, 1
        %p271 = scmp.lt.s32.totalorder %s22, 1
        %s272 = scalar_select %p271, %s22, 1
        %s273 = smul.addr %s272, 2
        %s274 = smul.addr %s273, 8
        %s275 = scalar_lea.vmem %s0, %s274
        %p276 = pneg %p43
        %p277 = pneg %p40
        %p278 = pneg %p64
        %p279 = pneg %p61
        %p280 = pneg %p85
        %p281 = pneg %p82
        %p282 = pneg %p106
        %p283 = pneg %p103
        %p284 = pneg %p127
        %p285 = pneg %p124
        %p286 = pneg %p148
        %p287 = pneg %p145
        %p288 = pneg %p169
        %p289 = pneg %p166
        %p290 = pneg %p190
        %p291 = pneg %p187
        %p292 = pneg %p216
        %p293 = pneg %p213
        %s294 = sand.u32 %s203, 1
        %s295 = scalar_lea.sflag [#allocation5], %s294
        %s296 = sand.u32 %s203, 1
        %s297 = smul.addr %s296, 16
        %s298 = scalar_lea.vmem [#allocation4], %s297
        %p299 = scmp.lt.s32.totalorder %s22, 1
        %s300 = scalar_select %p299, %s22, 1
        %s301 = smul.addr %s300, 2
        %s302 = smul.addr %s301, 8
        %s303 = scalar_lea.vmem %s0, %s302
        %vm305 = vcmask 261120
        %306 = vst.msk [vmem:[#allocation2] sm:$0xff] %vm305, 0.0
        %307 = vst.msk [vmem:[#allocation2 + $0x8] sm:$0xff] %vm305, 0.0
        %vm308 = vcmask 254976
        %309 = vst.msk [vmem:[#allocation2 + $0x10] sm:$0x3] %vm308, 0.0
        %v310 = vld [vmem:[%s303] sm:$0xff]
        %v311 = vld [vmem:[%s303 + $0x8] sm:$0xff]
        %312 = vst.msk [vmem:[#allocation2 + $0x1] sm:$0xff] %vm305, %v310
        %313 = vst.msk [vmem:[#allocation2 + $0x9] sm:$0xff] %vm305, %v311
        %v314 = vld [vmem:[#allocation2] sm:$0xff]
        %v315 = vld [vmem:[#allocation2 + $0x8] sm:$0xff]
        %316 = vst.msk [vmem:[#allocation3] sm:$0xff] %vm305, %v314
        %317 = vst.msk [vmem:[#allocation3 + $0x8] sm:$0xff] %vm305, %v315
        %320 = vrot.lane.b32.xlu0 %v310, 32
        %v321 = vpop.permute.xlu0 %320
        %322 = vrot.lane.b32.xlu0 %v311, 32
        %v323 = vpop.permute.xlu0 %322
        %vm326 = vcmask 523520
        %327 = vst.msk [vmem:[#allocation3] sm:$0xff] %vm326, %v321
        %328 = vst.msk [vmem:[#allocation3 + $0x8] sm:$0xff] %vm326, %v323
        %v329 = vld [vmem:[#allocation2 + $0x2] sm:$0xff]
        %v330 = vld [vmem:[#allocation2 + $0xa] sm:$0xff]
        %333 = vrot.lane.b32.xlu0 %v329, 64
        %v334 = vpop.permute.xlu0 %333
        %335 = vrot.lane.b32.xlu0 %v330, 64
        %v336 = vpop.permute.xlu0 %335
        %vm339 = vcmask 785920
        %340 = vst.msk [vmem:[#allocation3] sm:$0xff] %vm339, %v334
        %341 = vst.msk [vmem:[#allocation3 + $0x8] sm:$0xff] %vm339, %v336
        %v342 = vld [vmem:[#allocation3] sm:$0xff]
        %v343 = vld [vmem:[#allocation3 + $0x8] sm:$0xff]
        %v344 = vpack.c.bf16 %v343, %v342
        %v345 = vld [vmem:[%s1] sm:$0xf]
        %v346 = vld [vmem:[%s1 + $0x4] sm:$0xf]
        %v347 = vld [vmem:[%s1 + $0x8] sm:$0xf]
        %v348 = vld [vmem:[%s1 + $0xc] sm:$0xf]
        %v349 = vld [vmem:[%s1 + $0x10] sm:$0xf]
        %v350 = vld [vmem:[%s1 + $0x14] sm:$0xf]
        %v351 = vld [vmem:[%s1 + $0x18] sm:$0xf]
        %v352 = vld [vmem:[%s1 + $0x1c] sm:$0xf]
        %v353 = vld [vmem:[%s1 + $0x20] sm:$0xf]
        %v354 = vld [vmem:[%s1 + $0x24] sm:$0xf]
        %v355 = vld [vmem:[%s1 + $0x28] sm:$0xf]
        %v356 = vld [vmem:[%s1 + $0x2c] sm:$0xf]
        %v369 = vunpack.c.l.b16 %v345
        %v370 = vunpack.c.l.b16 %v346
        %v371 = vunpack.c.l.b16 %v347
        %v372 = vunpack.c.l.b16 %v348
        %v373 = vunpack.c.l.b16 %v349
        %v374 = vunpack.c.l.b16 %v350
        %v375 = vunpack.c.l.b16 %v351
        %v376 = vunpack.c.l.b16 %v352
        %v377 = vunpack.c.l.b16 %v353
        %v378 = vunpack.c.l.b16 %v354
        %v379 = vunpack.c.l.b16 %v355
        %v380 = vunpack.c.l.b16 %v356
        %v381 = vpack.c.b16 %v370, %v369
        %v382 = vpack.c.b16 %v372, %v371
        %v383 = vpack.c.b16 %v374, %v373
        %v384 = vpack.c.b16 %v376, %v375
        %v385 = vpack.c.b16 %v378, %v377
        %v386 = vpack.c.b16 %v380, %v379
        %vm393 = vcmask 785408
        %v395 = vsel %vm393, %v344, 0
        %397 = vmatprep.subr.bf16.mxu0 0
        %398 = vmatpush1.bf16.msra.mxu0 0
        %399 = vmatprep.subr.bf16.mxu0 0
        %400 = vmatpush1.bf16.msra.mxu0 0
        %401 = vmatprep.subr.bf16.mxu0 0
        %402 = vmatpush1.bf16.msra.mxu0 %v386
        %403 = vmatprep.subr.bf16.mxu0 0
        %404 = vmatpush1.bf16.msra.mxu0 %v385
        %405 = vmatprep.subr.bf16.mxu0 0
        %406 = vmatpush1.bf16.msra.mxu0 %v384
        %407 = vmatprep.subr.bf16.mxu0 0
        %408 = vmatpush1.bf16.msra.mxu0 %v383
        %409 = vmatprep.subr.bf16.mxu0 0
        %410 = vmatpush1.bf16.msra.mxu0 %v382
        %411 = vmatprep.subr.bf16.mxu0 0
        %412 = vmatpush1.bf16.msra.mxu0 %v381
        %413 = vmatprep.subr.bf16.mxu0 0
        %414 = vmatpush2.bf16.msra.mxu0 0
        %415 = vmatprep.subr.bf16.mxu0 0
        %416 = vmatpush2.bf16.msra.mxu0 0
        %417 = vmatprep.subr.bf16.mxu0 0
        %418 = vmatpush2.bf16.msra.mxu0 0
        %419 = vmatprep.subr.bf16.mxu0 0
        %420 = vmatpush2.bf16.msra.mxu0 0
        %421 = vmatprep.subr.bf16.mxu0 0
        %422 = vmatpush2.bf16.msra.mxu0 0
        %423 = vmatprep.subr.bf16.mxu0 0
        %424 = vmatpush2.bf16.msra.mxu0 0
        %425 = vmatprep.subr.bf16.mxu0 0
        %426 = vmatpush2.bf16.msra.mxu0 0
        %427 = vmatprep.subr.bf16.mxu0 0
        %428 = vmatpush2.bf16.msra.mxu0 0
        %429 = vmatprep.mubr.bf16.mxu0 0
        %430 = vmatmul.mubr.bf16.gmra.mxu0 %v395
        %v431 = vpop.f32.mrf.mxu0
        %v432 = vadd.f32 0.0, %v431
        %v433 = vpop.f32.mrf.mxu0
        %v434 = vpop.f32.mrf.mxu0
        %v435 = vadd.f32 0.0, %v434
        %v436 = vpop.f32.mrf.mxu0
        %437 = vdwg.mxu0
        %v438 = vmax.f32 %v432, 0.0
        %v439 = vmax.f32 %v435, 0.0
        %440 = vst.msk [vmem:[#allocation2 + $0x1] sm:$0xff] %vm305, %v438
        %441 = vst.msk [vmem:[#allocation2 + $0x9] sm:$0xff] %vm305, %v439
        %v442 = vld [vmem:[#allocation2] sm:$0xff]
        %v443 = vld [vmem:[#allocation2 + $0x8] sm:$0xff]
        %444 = vst.msk [vmem:[#allocation3] sm:$0xff] %vm305, %v442
        %445 = vst.msk [vmem:[#allocation3 + $0x8] sm:$0xff] %vm305, %v443
        %448 = vrot.lane.b32.xlu0 %v438, 32
        %v449 = vpop.permute.xlu0 %448
        %450 = vrot.lane.b32.xlu0 %v439, 32
        %v451 = vpop.permute.xlu0 %450
        %454 = vst.msk [vmem:[#allocation3] sm:$0xff] %vm326, %v449
        %455 = vst.msk [vmem:[#allocation3 + $0x8] sm:$0xff] %vm326, %v451
        %v456 = vld [vmem:[#allocation2 + $0x2] sm:$0xff]
        %v457 = vld [vmem:[#allocation2 + $0xa] sm:$0xff]
        %460 = vrot.lane.b32.xlu0 %v456, 64
        %v461 = vpop.permute.xlu0 %460
        %462 = vrot.lane.b32.xlu0 %v457, 64
        %v463 = vpop.permute.xlu0 %462
        %466 = vst.msk [vmem:[#allocation3] sm:$0xff] %vm339, %v461
        %467 = vst.msk [vmem:[#allocation3 + $0x8] sm:$0xff] %vm339, %v463
        %v468 = vld [vmem:[#allocation3] sm:$0xff]
        %v469 = vld [vmem:[#allocation3 + $0x8] sm:$0xff]
        %v470 = vpack.c.bf16 %v469, %v468
        %v471 = vld [vmem:[%s2] sm:$0xf]
        %v472 = vld [vmem:[%s2 + $0x4] sm:$0xf]
        %v473 = vld [vmem:[%s2 + $0x8] sm:$0xf]
        %v474 = vld [vmem:[%s2 + $0xc] sm:$0xf]
        %v475 = vld [vmem:[%s2 + $0x10] sm:$0xf]
        %v476 = vld [vmem:[%s2 + $0x14] sm:$0xf]
        %v477 = vld [vmem:[%s2 + $0x18] sm:$0xf]
        %v478 = vld [vmem:[%s2 + $0x1c] sm:$0xf]
        %v479 = vld [vmem:[%s2 + $0x20] sm:$0xf]
        %v480 = vld [vmem:[%s2 + $0x24] sm:$0xf]
        %v481 = vld [vmem:[%s2 + $0x28] sm:$0xf]
        %v482 = vld [vmem:[%s2 + $0x2c] sm:$0xf]
        %v495 = vunpack.c.l.b16 %v471
        %v496 = vunpack.c.l.b16 %v472
        %v497 = vunpack.c.l.b16 %v473
        %v498 = vunpack.c.l.b16 %v474
        %v499 = vunpack.c.l.b16 %v475
        %v500 = vunpack.c.l.b16 %v476
        %v501 = vunpack.c.l.b16 %v477
        %v502 = vunpack.c.l.b16 %v478
        %v503 = vunpack.c.l.b16 %v479
        %v504 = vunpack.c.l.b16 %v480
        %v505 = vunpack.c.l.b16 %v481
        %v506 = vunpack.c.l.b16 %v482
        %v507 = vpack.c.b16 %v496, %v495
        %v508 = vpack.c.b16 %v498, %v497
        %v509 = vpack.c.b16 %v500, %v499
        %v510 = vpack.c.b16 %v502, %v501
        %v511 = vpack.c.b16 %v504, %v503
        %v512 = vpack.c.b16 %v506, %v505
        %v520 = vsel %vm393, %v470, 0
        %522 = vmatprep.subr.bf16.mxu0 0
        %523 = vmatpush1.bf16.msra.mxu0 0
        %524 = vmatprep.subr.bf16.mxu0 0
        %525 = vmatpush1.bf16.msra.mxu0 0
        %526 = vmatprep.subr.bf16.mxu0 0
        %527 = vmatpush1.bf16.msra.mxu0 %v512
        %528 = vmatprep.subr.bf16.mxu0 0
        %529 = vmatpush1.bf16.msra.mxu0 %v511
        %530 = vmatprep.subr.bf16.mxu0 0
        %531 = vmatpush1.bf16.msra.mxu0 %v510
        %532 = vmatprep.subr.bf16.mxu0 0
        %533 = vmatpush1.bf16.msra.mxu0 %v509
        %534 = vmatprep.subr.bf16.mxu0 0
        %535 = vmatpush1.bf16.msra.mxu0 %v508
        %536 = vmatprep.subr.bf16.mxu0 0
        %537 = vmatpush1.bf16.msra.mxu0 %v507
        %538 = vmatprep.subr.bf16.mxu0 0
        %539 = vmatpush2.bf16.msra.mxu0 0
        %540 = vmatprep.subr.bf16.mxu0 0
        %541 = vmatpush2.bf16.msra.mxu0 0
        %542 = vmatprep.subr.bf16.mxu0 0
        %543 = vmatpush2.bf16.msra.mxu0 0
        %544 = vmatprep.subr.bf16.mxu0 0
        %545 = vmatpush2.bf16.msra.mxu0 0
        %546 = vmatprep.subr.bf16.mxu0 0
        %547 = vmatpush2.bf16.msra.mxu0 0
        %548 = vmatprep.subr.bf16.mxu0 0
        %549 = vmatpush2.bf16.msra.mxu0 0
        %550 = vmatprep.subr.bf16.mxu0 0
        %551 = vmatpush2.bf16.msra.mxu0 0
        %552 = vmatprep.subr.bf16.mxu0 0
        %553 = vmatpush2.bf16.msra.mxu0 0
        %554 = vmatprep.mubr.bf16.mxu0 0
        %555 = vmatmul.mubr.bf16.gmra.mxu0 %v520
        %v556 = vpop.f32.mrf.mxu0
        %v557 = vadd.f32 0.0, %v556
        %v558 = vpop.f32.mrf.mxu0
        %v559 = vpop.f32.mrf.mxu0
        %v560 = vadd.f32 0.0, %v559
        %v561 = vpop.f32.mrf.mxu0
        %562 = vdwg.mxu0
        %v563 = vmax.f32 %v557, 0.0
        %v564 = vmax.f32 %v560, 0.0
        %565 = vst.msk [vmem:[#allocation2 + $0x1] sm:$0xff] %vm305, %v563
        %566 = vst.msk [vmem:[#allocation2 + $0x9] sm:$0xff] %vm305, %v564
        %v567 = vld [vmem:[#allocation2] sm:$0xff]
        %v568 = vld [vmem:[#allocation2 + $0x8] sm:$0xff]
        %569 = vst.msk [vmem:[#allocation3] sm:$0xff] %vm305, %v567
        %570 = vst.msk [vmem:[#allocation3 + $0x8] sm:$0xff] %vm305, %v568
        %573 = vrot.lane.b32.xlu0 %v563, 32
        %v574 = vpop.permute.xlu0 %573
        %575 = vrot.lane.b32.xlu0 %v564, 32
        %v576 = vpop.permute.xlu0 %575
        %579 = vst.msk [vmem:[#allocation3] sm:$0xff] %vm326, %v574
        %580 = vst.msk [vmem:[#allocation3 + $0x8] sm:$0xff] %vm326, %v576
        %v581 = vld [vmem:[#allocation2 + $0x2] sm:$0xff]
        %v582 = vld [vmem:[#allocation2 + $0xa] sm:$0xff]
        %585 = vrot.lane.b32.xlu0 %v581, 64
        %v586 = vpop.permute.xlu0 %585
        %587 = vrot.lane.b32.xlu0 %v582, 64
        %v588 = vpop.permute.xlu0 %587
        %591 = vst.msk [vmem:[#allocation3] sm:$0xff] %vm339, %v586
        %592 = vst.msk [vmem:[#allocation3 + $0x8] sm:$0xff] %vm339, %v588
        %v593 = vld [vmem:[#allocation3] sm:$0xff]
        %v594 = vld [vmem:[#allocation3 + $0x8] sm:$0xff]
        %v595 = vpack.c.bf16 %v594, %v593
        %v596 = vld [vmem:[%s3] sm:$0xf]
        %v597 = vld [vmem:[%s3 + $0x4] sm:$0xf]
        %v598 = vld [vmem:[%s3 + $0x8] sm:$0xf]
        %v599 = vld [vmem:[%s3 + $0xc] sm:$0xf]
        %v600 = vld [vmem:[%s3 + $0x10] sm:$0xf]
        %v601 = vld [vmem:[%s3 + $0x14] sm:$0xf]
        %v602 = vld [vmem:[%s3 + $0x18] sm:$0xf]
        %v603 = vld [vmem:[%s3 + $0x1c] sm:$0xf]
        %v604 = vld [vmem:[%s3 + $0x20] sm:$0xf]
        %v605 = vld [vmem:[%s3 + $0x24] sm:$0xf]
        %v606 = vld [vmem:[%s3 + $0x28] sm:$0xf]
        %v607 = vld [vmem:[%s3 + $0x2c] sm:$0xf]
        %v620 = vunpack.c.l.b16 %v596
        %v621 = vunpack.c.l.b16 %v597
        %v622 = vunpack.c.l.b16 %v598
        %v623 = vunpack.c.l.b16 %v599
        %v624 = vunpack.c.l.b16 %v600
        %v625 = vunpack.c.l.b16 %v601
        %v626 = vunpack.c.l.b16 %v602
        %v627 = vunpack.c.l.b16 %v603
        %v628 = vunpack.c.l.b16 %v604
        %v629 = vunpack.c.l.b16 %v605
        %v630 = vunpack.c.l.b16 %v606
        %v631 = vunpack.c.l.b16 %v607
        %v632 = vpack.c.b16 %v621, %v620
        %v633 = vpack.c.b16 %v623, %v622
        %v634 = vpack.c.b16 %v625, %v624
        %v635 = vpack.c.b16 %v627, %v626
        %v636 = vpack.c.b16 %v629, %v628
        %v637 = vpack.c.b16 %v631, %v630
        %v645 = vsel %vm393, %v595, 0
        %647 = vmatprep.subr.bf16.mxu0 0
        %648 = vmatpush1.bf16.msra.mxu0 0
        %649 = vmatprep.subr.bf16.mxu0 0
        %650 = vmatpush1.bf16.msra.mxu0 0
        %651 = vmatprep.subr.bf16.mxu0 0
        %652 = vmatpush1.bf16.msra.mxu0 %v637
        %653 = vmatprep.subr.bf16.mxu0 0
        %654 = vmatpush1.bf16.msra.mxu0 %v636
        %655 = vmatprep.subr.bf16.mxu0 0
        %656 = vmatpush1.bf16.msra.mxu0 %v635
        %657 = vmatprep.subr.bf16.mxu0 0
        %658 = vmatpush1.bf16.msra.mxu0 %v634
        %659 = vmatprep.subr.bf16.mxu0 0
        %660 = vmatpush1.bf16.msra.mxu0 %v633
        %661 = vmatprep.subr.bf16.mxu0 0
        %662 = vmatpush1.bf16.msra.mxu0 %v632
        %663 = vmatprep.subr.bf16.mxu0 0
        %664 = vmatpush2.bf16.msra.mxu0 0
        %665 = vmatprep.subr.bf16.mxu0 0
        %666 = vmatpush2.bf16.msra.mxu0 0
        %667 = vmatprep.subr.bf16.mxu0 0
        %668 = vmatpush2.bf16.msra.mxu0 0
        %669 = vmatprep.subr.bf16.mxu0 0
        %670 = vmatpush2.bf16.msra.mxu0 0
        %671 = vmatprep.subr.bf16.mxu0 0
        %672 = vmatpush2.bf16.msra.mxu0 0
        %673 = vmatprep.subr.bf16.mxu0 0
        %674 = vmatpush2.bf16.msra.mxu0 0
        %675 = vmatprep.subr.bf16.mxu0 0
        %676 = vmatpush2.bf16.msra.mxu0 0
        %677 = vmatprep.subr.bf16.mxu0 0
        %678 = vmatpush2.bf16.msra.mxu0 0
        %679 = vmatprep.mubr.bf16.mxu0 0
        %680 = vmatmul.mubr.bf16.gmra.mxu0 %v645
        %v681 = vpop.f32.mrf.mxu0
        %v682 = vadd.f32 %v438, %v681
        %v683 = vpop.f32.mrf.mxu0
        %v684 = vpop.f32.mrf.mxu0
        %v685 = vadd.f32 %v439, %v684
        %v686 = vpop.f32.mrf.mxu0
        %687 = vdwg.mxu0
        %v688 = vmax.f32 %v682, 0.0
        %v689 = vmax.f32 %v685, 0.0
        %690 = vst.msk [vmem:[#allocation2 + $0x1] sm:$0xff] %vm305, %v688
        %691 = vst.msk [vmem:[#allocation2 + $0x9] sm:$0xff] %vm305, %v689
        %v692 = vld [vmem:[#allocation2] sm:$0xff]
        %v693 = vld [vmem:[#allocation2 + $0x8] sm:$0xff]
        %694 = vst.msk [vmem:[#allocation3] sm:$0xff] %vm305, %v692
        %695 = vst.msk [vmem:[#allocation3 + $0x8] sm:$0xff] %vm305, %v693
        %698 = vrot.lane.b32.xlu0 %v688, 32
        %v699 = vpop.permute.xlu0 %698
        %700 = vrot.lane.b32.xlu0 %v689, 32
        %v701 = vpop.permute.xlu0 %700
        %704 = vst.msk [vmem:[#allocation3] sm:$0xff] %vm326, %v699
        %705 = vst.msk [vmem:[#allocation3 + $0x8] sm:$0xff] %vm326, %v701
        %v706 = vld [vmem:[#allocation2 + $0x2] sm:$0xff]
        %v707 = vld [vmem:[#allocation2 + $0xa] sm:$0xff]
        %710 = vrot.lane.b32.xlu0 %v706, 64
        %v711 = vpop.permute.xlu0 %710
        %712 = vrot.lane.b32.xlu0 %v707, 64
        %v713 = vpop.permute.xlu0 %712
        %716 = vst.msk [vmem:[#allocation3] sm:$0xff] %vm339, %v711
        %717 = vst.msk [vmem:[#allocation3 + $0x8] sm:$0xff] %vm339, %v713
        %v718 = vld [vmem:[#allocation3] sm:$0xff]
        %v719 = vld [vmem:[#allocation3 + $0x8] sm:$0xff]
        %v720 = vpack.c.bf16 %v719, %v718
        %v721 = vld [vmem:[%s4] sm:$0xf]
        %v722 = vld [vmem:[%s4 + $0x4] sm:$0xf]
        %v723 = vld [vmem:[%s4 + $0x8] sm:$0xf]
        %v724 = vld [vmem:[%s4 + $0xc] sm:$0xf]
        %v725 = vld [vmem:[%s4 + $0x10] sm:$0xf]
        %v726 = vld [vmem:[%s4 + $0x14] sm:$0xf]
        %v727 = vld [vmem:[%s4 + $0x18] sm:$0xf]
        %v728 = vld [vmem:[%s4 + $0x1c] sm:$0xf]
        %v729 = vld [vmem:[%s4 + $0x20] sm:$0xf]
        %v730 = vld [vmem:[%s4 + $0x24] sm:$0xf]
        %v731 = vld [vmem:[%s4 + $0x28] sm:$0xf]
        %v732 = vld [vmem:[%s4 + $0x2c] sm:$0xf]
        %v745 = vunpack.c.l.b16 %v721
        %v746 = vunpack.c.l.b16 %v722
        %v747 = vunpack.c.l.b16 %v723
        %v748 = vunpack.c.l.b16 %v724
        %v749 = vunpack.c.l.b16 %v725
        %v750 = vunpack.c.l.b16 %v726
        %v751 = vunpack.c.l.b16 %v727
        %v752 = vunpack.c.l.b16 %v728
        %v753 = vunpack.c.l.b16 %v729
        %v754 = vunpack.c.l.b16 %v730
        %v755 = vunpack.c.l.b16 %v731
        %v756 = vunpack.c.l.b16 %v732
        %v757 = vpack.c.b16 %v746, %v745
        %v758 = vpack.c.b16 %v748, %v747
        %v759 = vpack.c.b16 %v750, %v749
        %v760 = vpack.c.b16 %v752, %v751
        %v761 = vpack.c.b16 %v754, %v753
        %v762 = vpack.c.b16 %v756, %v755
        %v770 = vsel %vm393, %v720, 0
        %772 = vmatprep.subr.bf16.mxu0 0
        %773 = vmatpush1.bf16.msra.mxu0 0
        %774 = vmatprep.subr.bf16.mxu0 0
        %775 = vmatpush1.bf16.msra.mxu0 0
        %776 = vmatprep.subr.bf16.mxu0 0
        %777 = vmatpush1.bf16.msra.mxu0 %v762
        %778 = vmatprep.subr.bf16.mxu0 0
        %779 = vmatpush1.bf16.msra.mxu0 %v761
        %780 = vmatprep.subr.bf16.mxu0 0
        %781 = vmatpush1.bf16.msra.mxu0 %v760
        %782 = vmatprep.subr.bf16.mxu0 0
        %783 = vmatpush1.bf16.msra.mxu0 %v759
        %784 = vmatprep.subr.bf16.mxu0 0
        %785 = vmatpush1.bf16.msra.mxu0 %v758
        %786 = vmatprep.subr.bf16.mxu0 0
        %787 = vmatpush1.bf16.msra.mxu0 %v757
        %788 = vmatprep.subr.bf16.mxu0 0
        %789 = vmatpush2.bf16.msra.mxu0 0
        %790 = vmatprep.subr.bf16.mxu0 0
        %791 = vmatpush2.bf16.msra.mxu0 0
        %792 = vmatprep.subr.bf16.mxu0 0
        %793 = vmatpush2.bf16.msra.mxu0 0
        %794 = vmatprep.subr.bf16.mxu0 0
        %795 = vmatpush2.bf16.msra.mxu0 0
        %796 = vmatprep.subr.bf16.mxu0 0
        %797 = vmatpush2.bf16.msra.mxu0 0
        %798 = vmatprep.subr.bf16.mxu0 0
        %799 = vmatpush2.bf16.msra.mxu0 0
        %800 = vmatprep.subr.bf16.mxu0 0
        %801 = vmatpush2.bf16.msra.mxu0 0
        %802 = vmatprep.subr.bf16.mxu0 0
        %803 = vmatpush2.bf16.msra.mxu0 0
        %804 = vmatprep.mubr.bf16.mxu0 0
        %805 = vmatmul.mubr.bf16.gmra.mxu0 %v770
        %v806 = vpop.f32.mrf.mxu0
        %v807 = vadd.f32 0.0, %v806
        %v808 = vpop.f32.mrf.mxu0
        %v809 = vpop.f32.mrf.mxu0
        %v810 = vadd.f32 0.0, %v809
        %v811 = vpop.f32.mrf.mxu0
        %812 = vdwg.mxu0
        %v813 = vmax.f32 %v807, 0.0
        %v814 = vmax.f32 %v810, 0.0
        %815 = vst.msk [vmem:[#allocation2 + $0x1] sm:$0xff] %vm305, %v813
        %816 = vst.msk [vmem:[#allocation2 + $0x9] sm:$0xff] %vm305, %v814
        %v817 = vld [vmem:[#allocation2] sm:$0xff]
        %v818 = vld [vmem:[#allocation2 + $0x8] sm:$0xff]
        %819 = vst.msk [vmem:[#allocation3] sm:$0xff] %vm305, %v817
        %820 = vst.msk [vmem:[#allocation3 + $0x8] sm:$0xff] %vm305, %v818
        %823 = vrot.lane.b32.xlu0 %v813, 32
        %v824 = vpop.permute.xlu0 %823
        %825 = vrot.lane.b32.xlu0 %v814, 32
        %v826 = vpop.permute.xlu0 %825
        %829 = vst.msk [vmem:[#allocation3] sm:$0xff] %vm326, %v824
        %830 = vst.msk [vmem:[#allocation3 + $0x8] sm:$0xff] %vm326, %v826
        %v831 = vld [vmem:[#allocation2 + $0x2] sm:$0xff]
        %v832 = vld [vmem:[#allocation2 + $0xa] sm:$0xff]
        %835 = vrot.lane.b32.xlu0 %v831, 64
        %v836 = vpop.permute.xlu0 %835
        %837 = vrot.lane.b32.xlu0 %v832, 64
        %v838 = vpop.permute.xlu0 %837
        %841 = vst.msk [vmem:[#allocation3] sm:$0xff] %vm339, %v836
        %842 = vst.msk [vmem:[#allocation3 + $0x8] sm:$0xff] %vm339, %v838
        %v843 = vld [vmem:[#allocation3] sm:$0xff]
        %v844 = vld [vmem:[#allocation3 + $0x8] sm:$0xff]
        %v845 = vpack.c.bf16 %v844, %v843
        %v846 = vld [vmem:[%s5] sm:$0xf]
        %v847 = vld [vmem:[%s5 + $0x4] sm:$0xf]
        %v848 = vld [vmem:[%s5 + $0x8] sm:$0xf]
        %v849 = vld [vmem:[%s5 + $0xc] sm:$0xf]
        %v850 = vld [vmem:[%s5 + $0x10] sm:$0xf]
        %v851 = vld [vmem:[%s5 + $0x14] sm:$0xf]
        %v852 = vld [vmem:[%s5 + $0x18] sm:$0xf]
        %v853 = vld [vmem:[%s5 + $0x1c] sm:$0xf]
        %v854 = vld [vmem:[%s5 + $0x20] sm:$0xf]
        %v855 = vld [vmem:[%s5 + $0x24] sm:$0xf]
        %v856 = vld [vmem:[%s5 + $0x28] sm:$0xf]
        %v857 = vld [vmem:[%s5 + $0x2c] sm:$0xf]
        %v870 = vunpack.c.l.b16 %v846
        %v871 = vunpack.c.l.b16 %v847
        %v872 = vunpack.c.l.b16 %v848
        %v873 = vunpack.c.l.b16 %v849
        %v874 = vunpack.c.l.b16 %v850
        %v875 = vunpack.c.l.b16 %v851
        %v876 = vunpack.c.l.b16 %v852
        %v877 = vunpack.c.l.b16 %v853
        %v878 = vunpack.c.l.b16 %v854
        %v879 = vunpack.c.l.b16 %v855
        %v880 = vunpack.c.l.b16 %v856
        %v881 = vunpack.c.l.b16 %v857
        %v882 = vpack.c.b16 %v871, %v870
        %v883 = vpack.c.b16 %v873, %v872
        %v884 = vpack.c.b16 %v875, %v874
        %v885 = vpack.c.b16 %v877, %v876
        %v886 = vpack.c.b16 %v879, %v878
        %v887 = vpack.c.b16 %v881, %v880
        %v895 = vsel %vm393, %v845, 0
        %897 = vmatprep.subr.bf16.mxu0 0
        %898 = vmatpush1.bf16.msra.mxu0 0
        %899 = vmatprep.subr.bf16.mxu0 0
        %900 = vmatpush1.bf16.msra.mxu0 0
        %901 = vmatprep.subr.bf16.mxu0 0
        %902 = vmatpush1.bf16.msra.mxu0 %v887
        %903 = vmatprep.subr.bf16.mxu0 0
        %904 = vmatpush1.bf16.msra.mxu0 %v886
        %905 = vmatprep.subr.bf16.mxu0 0
        %906 = vmatpush1.bf16.msra.mxu0 %v885
        %907 = vmatprep.subr.bf16.mxu0 0
        %908 = vmatpush1.bf16.msra.mxu0 %v884
        %909 = vmatprep.subr.bf16.mxu0 0
        %910 = vmatpush1.bf16.msra.mxu0 %v883
        %911 = vmatprep.subr.bf16.mxu0 0
        %912 = vmatpush1.bf16.msra.mxu0 %v882
        %913 = vmatprep.subr.bf16.mxu0 0
        %914 = vmatpush2.bf16.msra.mxu0 0
        %915 = vmatprep.subr.bf16.mxu0 0
        %916 = vmatpush2.bf16.msra.mxu0 0
        %917 = vmatprep.subr.bf16.mxu0 0
        %918 = vmatpush2.bf16.msra.mxu0 0
        %919 = vmatprep.subr.bf16.mxu0 0
        %920 = vmatpush2.bf16.msra.mxu0 0
        %921 = vmatprep.subr.bf16.mxu0 0
        %922 = vmatpush2.bf16.msra.mxu0 0
        %923 = vmatprep.subr.bf16.mxu0 0
        %924 = vmatpush2.bf16.msra.mxu0 0
        %925 = vmatprep.subr.bf16.mxu0 0
        %926 = vmatpush2.bf16.msra.mxu0 0
        %927 = vmatprep.subr.bf16.mxu0 0
        %928 = vmatpush2.bf16.msra.mxu0 0
        %929 = vmatprep.mubr.bf16.mxu0 0
        %930 = vmatmul.mubr.bf16.gmra.mxu0 %v895
        %v931 = vpop.f32.mrf.mxu0
        %v932 = vadd.f32 %v688, %v931
        %v933 = vpop.f32.mrf.mxu0
        %v934 = vpop.f32.mrf.mxu0
        %v935 = vadd.f32 %v689, %v934
        %v936 = vpop.f32.mrf.mxu0
        %937 = vdwg.mxu0
        %v938 = vmax.f32 %v932, 0.0
        %v939 = vmax.f32 %v935, 0.0
        %940 = vst.msk [vmem:[#allocation2 + $0x1] sm:$0xff] %vm305, %v938
        %941 = vst.msk [vmem:[#allocation2 + $0x9] sm:$0xff] %vm305, %v939
        %v942 = vld [vmem:[#allocation2] sm:$0xff]
        %v943 = vld [vmem:[#allocation2 + $0x8] sm:$0xff]
        %944 = vst.msk [vmem:[#allocation3] sm:$0xff] %vm305, %v942
        %945 = vst.msk [vmem:[#allocation3 + $0x8] sm:$0xff] %vm305, %v943
        %948 = vrot.lane.b32.xlu0 %v938, 32
        %v949 = vpop.permute.xlu0 %948
        %950 = vrot.lane.b32.xlu0 %v939, 32
        %v951 = vpop.permute.xlu0 %950
        %954 = vst.msk [vmem:[#allocation3] sm:$0xff] %vm326, %v949
        %955 = vst.msk [vmem:[#allocation3 + $0x8] sm:$0xff] %vm326, %v951
        %v956 = vld [vmem:[#allocation2 + $0x2] sm:$0xff]
        %v957 = vld [vmem:[#allocation2 + $0xa] sm:$0xff]
        %960 = vrot.lane.b32.xlu0 %v956, 64
        %v961 = vpop.permute.xlu0 %960
        %962 = vrot.lane.b32.xlu0 %v957, 64
        %v963 = vpop.permute.xlu0 %962
        %966 = vst.msk [vmem:[#allocation3] sm:$0xff] %vm339, %v961
        %967 = vst.msk [vmem:[#allocation3 + $0x8] sm:$0xff] %vm339, %v963
        %v968 = vld [vmem:[#allocation3] sm:$0xff]
        %v969 = vld [vmem:[#allocation3 + $0x8] sm:$0xff]
        %v970 = vpack.c.bf16 %v969, %v968
        %v971 = vld [vmem:[%s6] sm:$0xf]
        %v972 = vld [vmem:[%s6 + $0x4] sm:$0xf]
        %v973 = vld [vmem:[%s6 + $0x8] sm:$0xf]
        %v974 = vld [vmem:[%s6 + $0xc] sm:$0xf]
        %v975 = vld [vmem:[%s6 + $0x10] sm:$0xf]
        %v976 = vld [vmem:[%s6 + $0x14] sm:$0xf]
        %v977 = vld [vmem:[%s6 + $0x18] sm:$0xf]
        %v978 = vld [vmem:[%s6 + $0x1c] sm:$0xf]
        %v979 = vld [vmem:[%s6 + $0x20] sm:$0xf]
        %v980 = vld [vmem:[%s6 + $0x24] sm:$0xf]
        %v981 = vld [vmem:[%s6 + $0x28] sm:$0xf]
        %v982 = vld [vmem:[%s6 + $0x2c] sm:$0xf]
        %v995 = vunpack.c.l.b16 %v971
        %v996 = vunpack.c.l.b16 %v972
        %v997 = vunpack.c.l.b16 %v973
        %v998 = vunpack.c.l.b16 %v974
        %v999 = vunpack.c.l.b16 %v975
        %v1000 = vunpack.c.l.b16 %v976
        %v1001 = vunpack.c.l.b16 %v977
        %v1002 = vunpack.c.l.b16 %v978
        %v1003 = vunpack.c.l.b16 %v979
        %v1004 = vunpack.c.l.b16 %v980
        %v1005 = vunpack.c.l.b16 %v981
        %v1006 = vunpack.c.l.b16 %v982
        %v1007 = vpack.c.b16 %v996, %v995
        %v1008 = vpack.c.b16 %v998, %v997
        %v1009 = vpack.c.b16 %v1000, %v999
        %v1010 = vpack.c.b16 %v1002, %v1001
        %v1011 = vpack.c.b16 %v1004, %v1003
        %v1012 = vpack.c.b16 %v1006, %v1005
        %v1020 = vsel %vm393, %v970, 0
        %1022 = vmatprep.subr.bf16.mxu0 0
        %1023 = vmatpush1.bf16.msra.mxu0 0
        %1024 = vmatprep.subr.bf16.mxu0 0
        %1025 = vmatpush1.bf16.msra.mxu0 0
        %1026 = vmatprep.subr.bf16.mxu0 0
        %1027 = vmatpush1.bf16.msra.mxu0 %v1012
        %1028 = vmatprep.subr.bf16.mxu0 0
        %1029 = vmatpush1.bf16.msra.mxu0 %v1011
        %1030 = vmatprep.subr.bf16.mxu0 0
        %1031 = vmatpush1.bf16.msra.mxu0 %v1010
        %1032 = vmatprep.subr.bf16.mxu0 0
        %1033 = vmatpush1.bf16.msra.mxu0 %v1009
        %1034 = vmatprep.subr.bf16.mxu0 0
        %1035 = vmatpush1.bf16.msra.mxu0 %v1008
        %1036 = vmatprep.subr.bf16.mxu0 0
        %1037 = vmatpush1.bf16.msra.mxu0 %v1007
        %1038 = vmatprep.subr.bf16.mxu0 0
        %1039 = vmatpush2.bf16.msra.mxu0 0
        %1040 = vmatprep.subr.bf16.mxu0 0
        %1041 = vmatpush2.bf16.msra.mxu0 0
        %1042 = vmatprep.subr.bf16.mxu0 0
        %1043 = vmatpush2.bf16.msra.mxu0 0
        %1044 = vmatprep.subr.bf16.mxu0 0
        %1045 = vmatpush2.bf16.msra.mxu0 0
        %1046 = vmatprep.subr.bf16.mxu0 0
        %1047 = vmatpush2.bf16.msra.mxu0 0
        %1048 = vmatprep.subr.bf16.mxu0 0
        %1049 = vmatpush2.bf16.msra.mxu0 0
        %1050 = vmatprep.subr.bf16.mxu0 0
        %1051 = vmatpush2.bf16.msra.mxu0 0
        %1052 = vmatprep.subr.bf16.mxu0 0
        %1053 = vmatpush2.bf16.msra.mxu0 0
        %1054 = vmatprep.mubr.bf16.mxu0 0
        %1055 = vmatmul.mubr.bf16.gmra.mxu0 %v1020
        %v1056 = vpop.f32.mrf.mxu0
        %v1057 = vadd.f32 0.0, %v1056
        %v1058 = vpop.f32.mrf.mxu0
        %v1059 = vpop.f32.mrf.mxu0
        %v1060 = vadd.f32 0.0, %v1059
        %v1061 = vpop.f32.mrf.mxu0
        %1062 = vdwg.mxu0
        %v1063 = vmax.f32 %v1057, 0.0
        %v1064 = vmax.f32 %v1060, 0.0
        %1065 = vst.msk [vmem:[#allocation2 + $0x1] sm:$0xff] %vm305, %v1063
        %1066 = vst.msk [vmem:[#allocation2 + $0x9] sm:$0xff] %vm305, %v1064
        %v1067 = vld [vmem:[#allocation2] sm:$0xff]
        %v1068 = vld [vmem:[#allocation2 + $0x8] sm:$0xff]
        %1069 = vst.msk [vmem:[#allocation3] sm:$0xff] %vm305, %v1067
        %1070 = vst.msk [vmem:[#allocation3 + $0x8] sm:$0xff] %vm305, %v1068
        %1073 = vrot.lane.b32.xlu0 %v1063, 32
        %v1074 = vpop.permute.xlu0 %1073
        %1075 = vrot.lane.b32.xlu0 %v1064, 32
        %v1076 = vpop.permute.xlu0 %1075
        %1079 = vst.msk [vmem:[#allocation3] sm:$0xff] %vm326, %v1074
        %1080 = vst.msk [vmem:[#allocation3 + $0x8] sm:$0xff] %vm326, %v1076
        %v1081 = vld [vmem:[#allocation2 + $0x2] sm:$0xff]
        %v1082 = vld [vmem:[#allocation2 + $0xa] sm:$0xff]
        %1085 = vrot.lane.b32.xlu0 %v1081, 64
        %v1086 = vpop.permute.xlu0 %1085
        %1087 = vrot.lane.b32.xlu0 %v1082, 64
        %v1088 = vpop.permute.xlu0 %1087
        %1091 = vst.msk [vmem:[#allocation3] sm:$0xff] %vm339, %v1086
        %1092 = vst.msk [vmem:[#allocation3 + $0x8] sm:$0xff] %vm339, %v1088
        %v1093 = vld [vmem:[#allocation3] sm:$0xff]
        %v1094 = vld [vmem:[#allocation3 + $0x8] sm:$0xff]
        %v1095 = vpack.c.bf16 %v1094, %v1093
        %v1096 = vld [vmem:[%s7] sm:$0xf]
        %v1097 = vld [vmem:[%s7 + $0x4] sm:$0xf]
        %v1098 = vld [vmem:[%s7 + $0x8] sm:$0xf]
        %v1099 = vld [vmem:[%s7 + $0xc] sm:$0xf]
        %v1100 = vld [vmem:[%s7 + $0x10] sm:$0xf]
        %v1101 = vld [vmem:[%s7 + $0x14] sm:$0xf]
        %v1102 = vld [vmem:[%s7 + $0x18] sm:$0xf]
        %v1103 = vld [vmem:[%s7 + $0x1c] sm:$0xf]
        %v1104 = vld [vmem:[%s7 + $0x20] sm:$0xf]
        %v1105 = vld [vmem:[%s7 + $0x24] sm:$0xf]
        %v1106 = vld [vmem:[%s7 + $0x28] sm:$0xf]
        %v1107 = vld [vmem:[%s7 + $0x2c] sm:$0xf]
        %v1120 = vunpack.c.l.b16 %v1096
        %v1121 = vunpack.c.l.b16 %v1097
        %v1122 = vunpack.c.l.b16 %v1098
        %v1123 = vunpack.c.l.b16 %v1099
        %v1124 = vunpack.c.l.b16 %v1100
        %v1125 = vunpack.c.l.b16 %v1101
        %v1126 = vunpack.c.l.b16 %v1102
        %v1127 = vunpack.c.l.b16 %v1103
        %v1128 = vunpack.c.l.b16 %v1104
        %v1129 = vunpack.c.l.b16 %v1105
        %v1130 = vunpack.c.l.b16 %v1106
        %v1131 = vunpack.c.l.b16 %v1107
        %v1132 = vpack.c.b16 %v1121, %v1120
        %v1133 = vpack.c.b16 %v1123, %v1122
        %v1134 = vpack.c.b16 %v1125, %v1124
        %v1135 = vpack.c.b16 %v1127, %v1126
        %v1136 = vpack.c.b16 %v1129, %v1128
        %v1137 = vpack.c.b16 %v1131, %v1130
        %v1145 = vsel %vm393, %v1095, 0
        %1147 = vmatprep.subr.bf16.mxu0 0
        %1148 = vmatpush1.bf16.msra.mxu0 0
        %1149 = vmatprep.subr.bf16.mxu0 0
        %1150 = vmatpush1.bf16.msra.mxu0 0
        %1151 = vmatprep.subr.bf16.mxu0 0
        %1152 = vmatpush1.bf16.msra.mxu0 %v1137
        %1153 = vmatprep.subr.bf16.mxu0 0
        %1154 = vmatpush1.bf16.msra.mxu0 %v1136
        %1155 = vmatprep.subr.bf16.mxu0 0
        %1156 = vmatpush1.bf16.msra.mxu0 %v1135
        %1157 = vmatprep.subr.bf16.mxu0 0
        %1158 = vmatpush1.bf16.msra.mxu0 %v1134
        %1159 = vmatprep.subr.bf16.mxu0 0
        %1160 = vmatpush1.bf16.msra.mxu0 %v1133
        %1161 = vmatprep.subr.bf16.mxu0 0
        %1162 = vmatpush1.bf16.msra.mxu0 %v1132
        %1163 = vmatprep.subr.bf16.mxu0 0
        %1164 = vmatpush2.bf16.msra.mxu0 0
        %1165 = vmatprep.subr.bf16.mxu0 0
        %1166 = vmatpush2.bf16.msra.mxu0 0
        %1167 = vmatprep.subr.bf16.mxu0 0
        %1168 = vmatpush2.bf16.msra.mxu0 0
        %1169 = vmatprep.subr.bf16.mxu0 0
        %1170 = vmatpush2.bf16.msra.mxu0 0
        %1171 = vmatprep.subr.bf16.mxu0 0
        %1172 = vmatpush2.bf16.msra.mxu0 0
        %1173 = vmatprep.subr.bf16.mxu0 0
        %1174 = vmatpush2.bf16.msra.mxu0 0
        %1175 = vmatprep.subr.bf16.mxu0 0
        %1176 = vmatpush2.bf16.msra.mxu0 0
        %1177 = vmatprep.subr.bf16.mxu0 0
        %1178 = vmatpush2.bf16.msra.mxu0 0
        %1179 = vmatprep.mubr.bf16.mxu0 0
        %1180 = vmatmul.mubr.bf16.gmra.mxu0 %v1145
        %v1181 = vpop.f32.mrf.mxu0
        %v1182 = vadd.f32 %v938, %v1181
        %v1183 = vpop.f32.mrf.mxu0
        %v1184 = vpop.f32.mrf.mxu0
        %v1185 = vadd.f32 %v939, %v1184
        %v1186 = vpop.f32.mrf.mxu0
        %1187 = vdwg.mxu0
        %v1188 = vmax.f32 %v1182, 0.0
        %v1189 = vmax.f32 %v1185, 0.0
        %1190 = vst.msk [vmem:[%s298] sm:$0xff] %vm305, %v1188
        %1191 = vst.msk [vmem:[%s298 + $0x8] sm:$0xff] %vm305, %v1189
        %s1192 = sand.u32 %s203, 1
        %s1193 = scalar_lea.sflag [#allocation5], %s1192
        %s1194 = sand.u32 %s203, 1
        %s1195 = smul.addr %s1194, 16
        %s1196 = scalar_lea.vmem [#allocation4], %s1195
        // Predicated region
        $region53: #{byte_cnn_decoder_forward.7} parent=51 // pred_check
          %p1197 = pneg %p213
        $region54: #{byte_cnn_decoder_forward.7} parent=51 // pred_check_branch
          %1199 = sbr.rel (%p1197) target = $region56
        $region55: #{byte_cnn_decoder_forward.7} parent=51 // pred_region
          %s1201 = ssub.s32 256, 256
          %1202 = vsyncadd %s1193, %s1201
          %s1203 = smul.addr %s22, 2
          %s1204 = smul.addr %s1203, 128
          %s1205 = scalar_lea.hbm %s8, %s1204
          %s1206 = sshll.u32 %s1196, 4
          %s1207 = int_to_ptr.vmem [resolvable:$true] %s1206
          %1212 = dma.vmem_to_hbm [thread:$0]  %s1207, 256, %s1205, %s1193, 128, 128, 8
        $region56: #{byte_cnn_decoder_forward.7} parent=51 // pred_fallthru
          _
      $region52: #{byte_cnn_decoder_forward.7} parent=5 // pred_fallthru
        _
      %p1213 = scmp.le.s32.totalorder 2, %s17
      // Predicated region
      $region57: #{byte_cnn_decoder_forward.7} parent=5 // pred_check
        %p1214 = pneg %p1213
      $region58: #{byte_cnn_decoder_forward.7} parent=5 // pred_check_branch
        %1216 = sbr.rel (%p1214) target = $region60
      $region59: #{byte_cnn_decoder_forward.7} parent=5 // pred_region
        %s1217 = ssub.s32 %s17, 2
        // Predicated region
        $region61: #{byte_cnn_decoder_forward.7} parent=59 // pred_check
          %p1218 = pneg %p219
        $region62: #{byte_cnn_decoder_forward.7} parent=59 // pred_check_branch
          %1220 = sbr.rel (%p1218) target = $region64
        $region63: #{byte_cnn_decoder_forward.7} parent=59 // pred_region
          %s1221 = sand.u32 %s204, 1
          %s1222 = scalar_lea.sflag [#allocation5], %s1221
          %s1223 = sand.u32 %s204, 1
          %s1224 = smul.addr %s1223, 16
          %s1225 = scalar_lea.vmem [#allocation4], %s1224
          %1226 = dma.done %s1222, 256
        $region64: #{byte_cnn_decoder_forward.7} parent=59 // pred_fallthru
          _
      $region60: #{byte_cnn_decoder_forward.7} parent=5 // pred_fallthru
        _
    $region6: #{byte_cnn_decoder_forward.7} parent=1 // loop_footer
      %s21 = sadd.s32 1, %s17
    $region7: #{byte_cnn_decoder_forward.7} parent=1 // loop_footer_branch
      %16 = sbr.rel target = $region3
    $region8: #{byte_cnn_decoder_forward.7} parent=1 // loop_exit
      _
    %1227 = vsyncpa [#allocation5], 1
    %s1228 = scalar_lea.sflag [#allocation5], 1
    %1229 = vsyncpa %s1228, 1

</llo_original>
